<compile_context>
chip_gen: v5e
topology: v5e:2x2
jax: 0.10.0
libtpu: 0.0.40
codegen_flags: <defaults>
</compile_context>

<pallas_src>
import jax
import jax.numpy as jnp
import numpy as np
from jax import lax
from jax.experimental import pallas as pl
from jax.experimental.pallas import tpu as pltpu  # noqa: F401  (TPU backend)

TOTAL_ZONES = 8   # totalZONES (== ipDim == h1Dim == h2Dim == opDim)
DT_PT = 8         # batch size (dtPt)
EPS = 1e-5        # nn.LayerNorm default eps


def _layer_norm_onepass(h):
    # One-pass LayerNorm: mean and mean-of-squares are INDEPENDENT cross-lane
    # reductions (issue back-to-back into the XLU), unlike mean((h-mu)^2).
    # Numerically safe here: h = tanh(...) is bounded in [-1, 1].
    inv_n = 1.0 / h.shape[-1]
    s1 = jnp.sum(h, axis=-1, keepdims=True) * inv_n          # E[h]
    s2 = jnp.sum(h * h, axis=-1, keepdims=True) * inv_n      # E[h^2]
    var = s2 - s1 * s1
    return (h - s1) * lax.rsqrt(var + EPS)


def _vpu_linear(x, w_rows, bias_bcast):
    """y = x @ W + b as unrolled VPU FMAs (no MXU round trip).

    w_rows[k] is the (1, Z) k-th row of W (already x-independent, possibly
    pre-masked); terms are summed with a pairwise tree so the x-dependent
    add chain is O(log K) deep instead of O(K)."""
    terms = [x[:, k:k + 1] * w_rows[k] for k in range(len(w_rows))]
    terms.append(bias_bcast)
    while len(terms) > 1:
        nxt = [terms[i] + terms[i + 1] for i in range(0, len(terms) - 1, 2)]
        if len(terms) % 2:
            nxt.append(terms[-1])
        terms = nxt
    return terms[0]


def actor_kernel(x_ref, mask_ref, w1_ref, b1_ref, w2_ref, b2_ref,
                 w3_ref, b3_ref, o_ref):
    Z = mask_ref.shape[0]
    B = x_ref.shape[0]

    x = x_ref[...]          # (dtPt, ipDim) activation, carried in vregs
    mask = mask_ref[...]    # (Z, Z)

    outs = []
    # Strictly serial zone chain, fully unrolled at trace time (Z = 8).
    for z in range(Z):
        w1_z = w1_ref[z]    # (Z, Z) static-index loads, zero-cost addressing
        w2_z = w2_ref[z]
        w3_z = w3_ref[z]

        # --- x-independent preparation (hoists off the critical path) ------
        # Mask folded into linear1 rows: (x*m) @ W1 == x @ (diag(m) W1).
        mw1_rows = [mask[z:z + 1, k:k + 1] * w1_z[k:k + 1, :] for k in range(Z)]
        w2_rows = [w2_z[k:k + 1, :] for k in range(Z)]
        w3_rows = [w3_z[k:k + 1, :] for k in range(Z)]
        # Explicit x-independent sublane broadcast of the bias rows.
        b1_b = jnp.broadcast_to(b1_ref[z:z + 1, :], (B, Z))
        b2_b = jnp.broadcast_to(b2_ref[z:z + 1, :], (B, Z))
        b3_b = jnp.broadcast_to(b3_ref[z:z + 1, :], (B, Z))

        # --- serial chain ----------------------------------------------------
        h = _layer_norm_onepass(jnp.tanh(_vpu_linear(x, mw1_rows, b1_b)))   # lin1+tanh+ln1
        h = _layer_norm_onepass(jnp.tanh(_vpu_linear(h, w2_rows, b2_b)))    # lin2+tanh+ln2
        x = jax.nn.sigmoid(_vpu_linear(h, w3_rows, b3_b))                   # op+sigmoid
        outs.append(x)

    # Single full-tile store in torch.cat(dim=1) column order.
    o_ref[...] = jnp.concatenate(outs, axis=1)


@jax.jit
def actor_forward(x, mask, w1, b1, w2, b2, w3, b3):
    dt_pt, _ = x.shape
    Z = mask.shape[0]
    # Single invocation (no grid): the whole working set is a few KiB, so the
    # default full-array specs are used and there is exactly one output DMA.
    out_flat = pl.pallas_call(
        actor_kernel,
        out_shape=jax.ShapeDtypeStruct((dt_pt, Z * Z), jnp.float32),
    )(x, mask, w1, b1, w2, b2, w3, b3)
    # Contiguous reshape only (free) — matches torch.reshape(tmpOp, (dtPt, Z, Z)).
    return out_flat.reshape(dt_pt, Z, Z)


def actor_reference(x, mask, w1, b1, w2, b2, w3, b3):
    """Pure-JAX reference mirroring the PyTorch forward (canonical two-pass LN)."""
    Z = mask.shape[0]

    def ln(h):
        mu = jnp.mean(h, axis=-1, keepdims=True)
        var = jnp.mean(jnp.square(h - mu), axis=-1, keepdims=True)
        return (h - mu) * lax.rsqrt(var + EPS)

    outs = []
    for z in range(Z):
        x = x * mask[z][None, :]
        h = jnp.tanh(x @ w1[z] + b1[z][None, :])
        h = ln(h)
        h = jnp.tanh(h @ w2[z] + b2[z][None, :])
        h = ln(h)
        x = jax.nn.sigmoid(h @ w3[z] + b3[z][None, :])
        outs.append(x)
    return jnp.stack(outs, axis=1)   # (dtPt, Z, Z)


if __name__ == "__main__":
    Z = TOTAL_ZONES
    key = jax.random.PRNGKey(0)
    ks = jax.random.split(key, 9)

    # Deterministic synthetic parameters (xavier-uniform-like weights,
    # nn.Linear-style uniform biases, binary Mask).
    xavier = float(np.sqrt(6.0 / (Z + Z)))
    b_bound = float(1.0 / np.sqrt(Z))

    x = jax.random.normal(ks[0], (DT_PT, Z), jnp.float32)
    mask = jax.random.bernoulli(ks[1], 0.7, (Z, Z)).astype(jnp.float32)
    w1 = jax.random.uniform(ks[2], (Z, Z, Z), jnp.float32, -xavier, xavier)
    b1 = jax.random.uniform(ks[3], (Z, Z), jnp.float32, -b_bound, b_bound)
    w2 = jax.random.uniform(ks[4], (Z, Z, Z), jnp.float32, -xavier, xavier)
    b2 = jax.random.uniform(ks[5], (Z, Z), jnp.float32, -b_bound, b_bound)
    w3 = jax.random.uniform(ks[6], (Z, Z, Z), jnp.float32, -xavier, xavier)
    b3 = jax.random.uniform(ks[7], (Z, Z), jnp.float32, -b_bound, b_bound)

    out = actor_forward(x, mask, w1, b1, w2, b2, w3, b3)
    out = jax.block_until_ready(out)

    ref = actor_reference(x, mask, w1, b1, w2, b2, w3, b3)
    assert out.shape == (DT_PT, Z, Z), out.shape
    np.testing.assert_allclose(np.asarray(out), np.asarray(ref),
                               rtol=2e-3, atol=2e-3)
    print("KERNEL_OK")
</pallas_src>

<mosaic_0001>
module attributes {stable_mosaic.version = 11 : i64} {
  func.func @actor_kernel(%arg0: memref<8x8xf32, #tpu.memory_space<vmem>>, %arg1: memref<8x8xf32, #tpu.memory_space<vmem>>, %arg2: memref<8x8x8xf32, #tpu.memory_space<vmem>>, %arg3: memref<8x8xf32, #tpu.memory_space<vmem>>, %arg4: memref<8x8x8xf32, #tpu.memory_space<vmem>>, %arg5: memref<8x8xf32, #tpu.memory_space<vmem>>, %arg6: memref<8x8x8xf32, #tpu.memory_space<vmem>>, %arg7: memref<8x8xf32, #tpu.memory_space<vmem>>, %arg8: memref<8x64xf32, #tpu.memory_space<vmem>>) attributes {dimension_semantics = [], scalar_prefetch = 0 : i64, scratch_operands = 0 : i64, tpu.core_type = #tpu.core_type<tc>} {
    %c0 = arith.constant 0 : index
    %c0_0 = arith.constant 0 : index
    %0 = vector.load %arg0[%c0, %c0_0] : memref<8x8xf32, #tpu.memory_space<vmem>>, vector<8x8xf32>
    %c0_1 = arith.constant 0 : index
    %c0_2 = arith.constant 0 : index
    %1 = vector.load %arg1[%c0_1, %c0_2] : memref<8x8xf32, #tpu.memory_space<vmem>>, vector<8x8xf32>
    %c0_3 = arith.constant 0 : index
    %c0_4 = arith.constant 0 : index
    %c0_5 = arith.constant 0 : index
    %2 = vector.load %arg2[%c0_3, %c0_4, %c0_5] : memref<8x8x8xf32, #tpu.memory_space<vmem>>, vector<1x8x8xf32>
    %3 = vector.shape_cast %2 : vector<1x8x8xf32> to vector<8x8xf32>
    %c0_6 = arith.constant 0 : index
    %c0_7 = arith.constant 0 : index
    %c0_8 = arith.constant 0 : index
    %4 = vector.load %arg4[%c0_6, %c0_7, %c0_8] : memref<8x8x8xf32, #tpu.memory_space<vmem>>, vector<1x8x8xf32>
    %5 = vector.shape_cast %4 : vector<1x8x8xf32> to vector<8x8xf32>
    %c0_9 = arith.constant 0 : index
    %c0_10 = arith.constant 0 : index
    %c0_11 = arith.constant 0 : index
    %6 = vector.load %arg6[%c0_9, %c0_10, %c0_11] : memref<8x8x8xf32, #tpu.memory_space<vmem>>, vector<1x8x8xf32>
    %7 = vector.shape_cast %6 : vector<1x8x8xf32> to vector<8x8xf32>
    %8 = vector.extract_strided_slice %1 {offsets = [0, 0], sizes = [1, 1], strides = [1, 1]} : vector<8x8xf32> to vector<1x1xf32>
    %9 = vector.extract_strided_slice %3 {offsets = [0, 0], sizes = [1, 8], strides = [1, 1]} : vector<8x8xf32> to vector<1x8xf32>
    %10 = vector.broadcast %8 : vector<1x1xf32> to vector<1x8xf32>
    %11 = arith.mulf %10, %9 : vector<1x8xf32>
    %12 = vector.extract_strided_slice %1 {offsets = [0, 1], sizes = [1, 1], strides = [1, 1]} : vector<8x8xf32> to vector<1x1xf32>
    %13 = vector.extract_strided_slice %3 {offsets = [1, 0], sizes = [1, 8], strides = [1, 1]} : vector<8x8xf32> to vector<1x8xf32>
    %14 = vector.broadcast %12 : vector<1x1xf32> to vector<1x8xf32>
    %15 = arith.mulf %14, %13 : vector<1x8xf32>
    %16 = vector.extract_strided_slice %1 {offsets = [0, 2], sizes = [1, 1], strides = [1, 1]} : vector<8x8xf32> to vector<1x1xf32>
    %17 = vector.extract_strided_slice %3 {offsets = [2, 0], sizes = [1, 8], strides = [1, 1]} : vector<8x8xf32> to vector<1x8xf32>
    %18 = vector.broadcast %16 : vector<1x1xf32> to vector<1x8xf32>
    %19 = arith.mulf %18, %17 : vector<1x8xf32>
    %20 = vector.extract_strided_slice %1 {offsets = [0, 3], sizes = [1, 1], strides = [1, 1]} : vector<8x8xf32> to vector<1x1xf32>
    %21 = vector.extract_strided_slice %3 {offsets = [3, 0], sizes = [1, 8], strides = [1, 1]} : vector<8x8xf32> to vector<1x8xf32>
    %22 = vector.broadcast %20 : vector<1x1xf32> to vector<1x8xf32>
    %23 = arith.mulf %22, %21 : vector<1x8xf32>
    %24 = vector.extract_strided_slice %1 {offsets = [0, 4], sizes = [1, 1], strides = [1, 1]} : vector<8x8xf32> to vector<1x1xf32>
    %25 = vector.extract_strided_slice %3 {offsets = [4, 0], sizes = [1, 8], strides = [1, 1]} : vector<8x8xf32> to vector<1x8xf32>
    %26 = vector.broadcast %24 : vector<1x1xf32> to vector<1x8xf32>
    %27 = arith.mulf %26, %25 : vector<1x8xf32>
    %28 = vector.extract_strided_slice %1 {offsets = [0, 5], sizes = [1, 1], strides = [1, 1]} : vector<8x8xf32> to vector<1x1xf32>
    %29 = vector.extract_strided_slice %3 {offsets = [5, 0], sizes = [1, 8], strides = [1, 1]} : vector<8x8xf32> to vector<1x8xf32>
    %30 = vector.broadcast %28 : vector<1x1xf32> to vector<1x8xf32>
    %31 = arith.mulf %30, %29 : vector<1x8xf32>
    %32 = vector.extract_strided_slice %1 {offsets = [0, 6], sizes = [1, 1], strides = [1, 1]} : vector<8x8xf32> to vector<1x1xf32>
    %33 = vector.extract_strided_slice %3 {offsets = [6, 0], sizes = [1, 8], strides = [1, 1]} : vector<8x8xf32> to vector<1x8xf32>
    %34 = vector.broadcast %32 : vector<1x1xf32> to vector<1x8xf32>
    %35 = arith.mulf %34, %33 : vector<1x8xf32>
    %36 = vector.extract_strided_slice %1 {offsets = [0, 7], sizes = [1, 1], strides = [1, 1]} : vector<8x8xf32> to vector<1x1xf32>
    %37 = vector.extract_strided_slice %3 {offsets = [7, 0], sizes = [1, 8], strides = [1, 1]} : vector<8x8xf32> to vector<1x8xf32>
    %38 = vector.broadcast %36 : vector<1x1xf32> to vector<1x8xf32>
    %39 = arith.mulf %38, %37 : vector<1x8xf32>
    %40 = vector.extract_strided_slice %5 {offsets = [0, 0], sizes = [1, 8], strides = [1, 1]} : vector<8x8xf32> to vector<1x8xf32>
    %41 = vector.extract_strided_slice %5 {offsets = [1, 0], sizes = [1, 8], strides = [1, 1]} : vector<8x8xf32> to vector<1x8xf32>
    %42 = vector.extract_strided_slice %5 {offsets = [2, 0], sizes = [1, 8], strides = [1, 1]} : vector<8x8xf32> to vector<1x8xf32>
    %43 = vector.extract_strided_slice %5 {offsets = [3, 0], sizes = [1, 8], strides = [1, 1]} : vector<8x8xf32> to vector<1x8xf32>
    %44 = vector.extract_strided_slice %5 {offsets = [4, 0], sizes = [1, 8], strides = [1, 1]} : vector<8x8xf32> to vector<1x8xf32>
    %45 = vector.extract_strided_slice %5 {offsets = [5, 0], sizes = [1, 8], strides = [1, 1]} : vector<8x8xf32> to vector<1x8xf32>
    %46 = vector.extract_strided_slice %5 {offsets = [6, 0], sizes = [1, 8], strides = [1, 1]} : vector<8x8xf32> to vector<1x8xf32>
    %47 = vector.extract_strided_slice %5 {offsets = [7, 0], sizes = [1, 8], strides = [1, 1]} : vector<8x8xf32> to vector<1x8xf32>
    %48 = vector.extract_strided_slice %7 {offsets = [0, 0], sizes = [1, 8], strides = [1, 1]} : vector<8x8xf32> to vector<1x8xf32>
    %49 = vector.extract_strided_slice %7 {offsets = [1, 0], sizes = [1, 8], strides = [1, 1]} : vector<8x8xf32> to vector<1x8xf32>
    %50 = vector.extract_strided_slice %7 {offsets = [2, 0], sizes = [1, 8], strides = [1, 1]} : vector<8x8xf32> to vector<1x8xf32>
    %51 = vector.extract_strided_slice %7 {offsets = [3, 0], sizes = [1, 8], strides = [1, 1]} : vector<8x8xf32> to vector<1x8xf32>
    %52 = vector.extract_strided_slice %7 {offsets = [4, 0], sizes = [1, 8], strides = [1, 1]} : vector<8x8xf32> to vector<1x8xf32>
    %53 = vector.extract_strided_slice %7 {offsets = [5, 0], sizes = [1, 8], strides = [1, 1]} : vector<8x8xf32> to vector<1x8xf32>
    %54 = vector.extract_strided_slice %7 {offsets = [6, 0], sizes = [1, 8], strides = [1, 1]} : vector<8x8xf32> to vector<1x8xf32>
    %55 = vector.extract_strided_slice %7 {offsets = [7, 0], sizes = [1, 8], strides = [1, 1]} : vector<8x8xf32> to vector<1x8xf32>
    %c0_12 = arith.constant 0 : index
    %c0_13 = arith.constant 0 : index
    %56 = vector.load %arg3[%c0_12, %c0_13] : memref<8x8xf32, #tpu.memory_space<vmem>>, vector<1x8xf32>
    %57 = vector.shape_cast %56 : vector<1x8xf32> to vector<1x8xf32>
    %58 = vector.broadcast %57 : vector<1x8xf32> to vector<8x8xf32>
    %c0_14 = arith.constant 0 : index
    %c0_15 = arith.constant 0 : index
    %59 = vector.load %arg5[%c0_14, %c0_15] : memref<8x8xf32, #tpu.memory_space<vmem>>, vector<1x8xf32>
    %60 = vector.shape_cast %59 : vector<1x8xf32> to vector<1x8xf32>
    %61 = vector.broadcast %60 : vector<1x8xf32> to vector<8x8xf32>
    %c0_16 = arith.constant 0 : index
    %c0_17 = arith.constant 0 : index
    %62 = vector.load %arg7[%c0_16, %c0_17] : memref<8x8xf32, #tpu.memory_space<vmem>>, vector<1x8xf32>
    %63 = vector.shape_cast %62 : vector<1x8xf32> to vector<1x8xf32>
    %64 = vector.broadcast %63 : vector<1x8xf32> to vector<8x8xf32>
    %65 = vector.extract_strided_slice %0 {offsets = [0, 0], sizes = [8, 1], strides = [1, 1]} : vector<8x8xf32> to vector<8x1xf32>
    %66 = vector.broadcast %65 : vector<8x1xf32> to vector<8x8xf32>
    %67 = vector.broadcast %11 : vector<1x8xf32> to vector<8x8xf32>
    %68 = arith.mulf %66, %67 : vector<8x8xf32>
    %69 = vector.extract_strided_slice %0 {offsets = [0, 1], sizes = [8, 1], strides = [1, 1]} : vector<8x8xf32> to vector<8x1xf32>
    %70 = vector.broadcast %69 : vector<8x1xf32> to vector<8x8xf32>
    %71 = vector.broadcast %15 : vector<1x8xf32> to vector<8x8xf32>
    %72 = arith.mulf %70, %71 : vector<8x8xf32>
    %73 = vector.extract_strided_slice %0 {offsets = [0, 2], sizes = [8, 1], strides = [1, 1]} : vector<8x8xf32> to vector<8x1xf32>
    %74 = vector.broadcast %73 : vector<8x1xf32> to vector<8x8xf32>
    %75 = vector.broadcast %19 : vector<1x8xf32> to vector<8x8xf32>
    %76 = arith.mulf %74, %75 : vector<8x8xf32>
    %77 = vector.extract_strided_slice %0 {offsets = [0, 3], sizes = [8, 1], strides = [1, 1]} : vector<8x8xf32> to vector<8x1xf32>
    %78 = vector.broadcast %77 : vector<8x1xf32> to vector<8x8xf32>
    %79 = vector.broadcast %23 : vector<1x8xf32> to vector<8x8xf32>
    %80 = arith.mulf %78, %79 : vector<8x8xf32>
    %81 = vector.extract_strided_slice %0 {offsets = [0, 4], sizes = [8, 1], strides = [1, 1]} : vector<8x8xf32> to vector<8x1xf32>
    %82 = vector.broadcast %81 : vector<8x1xf32> to vector<8x8xf32>
    %83 = vector.broadcast %27 : vector<1x8xf32> to vector<8x8xf32>
    %84 = arith.mulf %82, %83 : vector<8x8xf32>
    %85 = vector.extract_strided_slice %0 {offsets = [0, 5], sizes = [8, 1], strides = [1, 1]} : vector<8x8xf32> to vector<8x1xf32>
    %86 = vector.broadcast %85 : vector<8x1xf32> to vector<8x8xf32>
    %87 = vector.broadcast %31 : vector<1x8xf32> to vector<8x8xf32>
    %88 = arith.mulf %86, %87 : vector<8x8xf32>
    %89 = vector.extract_strided_slice %0 {offsets = [0, 6], sizes = [8, 1], strides = [1, 1]} : vector<8x8xf32> to vector<8x1xf32>
    %90 = vector.broadcast %89 : vector<8x1xf32> to vector<8x8xf32>
    %91 = vector.broadcast %35 : vector<1x8xf32> to vector<8x8xf32>
    %92 = arith.mulf %90, %91 : vector<8x8xf32>
    %93 = vector.extract_strided_slice %0 {offsets = [0, 7], sizes = [8, 1], strides = [1, 1]} : vector<8x8xf32> to vector<8x1xf32>
    %94 = vector.broadcast %93 : vector<8x1xf32> to vector<8x8xf32>
    %95 = vector.broadcast %39 : vector<1x8xf32> to vector<8x8xf32>
    %96 = arith.mulf %94, %95 : vector<8x8xf32>
    %97 = arith.addf %68, %72 : vector<8x8xf32>
    %98 = arith.addf %76, %80 : vector<8x8xf32>
    %99 = arith.addf %84, %88 : vector<8x8xf32>
    %100 = arith.addf %92, %96 : vector<8x8xf32>
    %101 = arith.addf %97, %98 : vector<8x8xf32>
    %102 = arith.addf %99, %100 : vector<8x8xf32>
    %103 = arith.addf %101, %102 : vector<8x8xf32>
    %104 = arith.addf %103, %58 : vector<8x8xf32>
    %105 = math.tanh %104 : vector<8x8xf32>
    %cst = arith.constant dense<0.000000e+00> : vector<8xf32>
    %106 = vector.multi_reduction <add>, %105, %cst [1] : vector<8x8xf32> to vector<8xf32>
    %107 = vector.shape_cast %106 : vector<8xf32> to vector<8x1xf32>
    %cst_18 = arith.constant 1.250000e-01 : f32
    %108 = vector.broadcast %cst_18 : f32 to vector<8x1xf32>
    %109 = arith.mulf %107, %108 : vector<8x1xf32>
    %110 = arith.mulf %105, %105 : vector<8x8xf32>
    %cst_19 = arith.constant dense<0.000000e+00> : vector<8xf32>
    %111 = vector.multi_reduction <add>, %110, %cst_19 [1] : vector<8x8xf32> to vector<8xf32>
    %112 = vector.shape_cast %111 : vector<8xf32> to vector<8x1xf32>
    %cst_20 = arith.constant 1.250000e-01 : f32
    %113 = vector.broadcast %cst_20 : f32 to vector<8x1xf32>
    %114 = arith.mulf %112, %113 : vector<8x1xf32>
    %115 = arith.mulf %109, %109 : vector<8x1xf32>
    %116 = arith.subf %114, %115 : vector<8x1xf32>
    %117 = vector.broadcast %109 : vector<8x1xf32> to vector<8x8xf32>
    %118 = arith.subf %105, %117 : vector<8x8xf32>
    %cst_21 = arith.constant 9.99999974E-6 : f32
    %119 = vector.broadcast %cst_21 : f32 to vector<8x1xf32>
    %120 = arith.addf %116, %119 : vector<8x1xf32>
    %121 = math.rsqrt %120 : vector<8x1xf32>
    %122 = vector.broadcast %121 : vector<8x1xf32> to vector<8x8xf32>
    %123 = arith.mulf %118, %122 : vector<8x8xf32>
    %124 = vector.extract_strided_slice %123 {offsets = [0, 0], sizes = [8, 1], strides = [1, 1]} : vector<8x8xf32> to vector<8x1xf32>
    %125 = vector.broadcast %124 : vector<8x1xf32> to vector<8x8xf32>
    %126 = vector.broadcast %40 : vector<1x8xf32> to vector<8x8xf32>
    %127 = arith.mulf %125, %126 : vector<8x8xf32>
    %128 = vector.extract_strided_slice %123 {offsets = [0, 1], sizes = [8, 1], strides = [1, 1]} : vector<8x8xf32> to vector<8x1xf32>
    %129 = vector.broadcast %128 : vector<8x1xf32> to vector<8x8xf32>
    %130 = vector.broadcast %41 : vector<1x8xf32> to vector<8x8xf32>
    %131 = arith.mulf %129, %130 : vector<8x8xf32>
    %132 = vector.extract_strided_slice %123 {offsets = [0, 2], sizes = [8, 1], strides = [1, 1]} : vector<8x8xf32> to vector<8x1xf32>
    %133 = vector.broadcast %132 : vector<8x1xf32> to vector<8x8xf32>
    %134 = vector.broadcast %42 : vector<1x8xf32> to vector<8x8xf32>
    %135 = arith.mulf %133, %134 : vector<8x8xf32>
    %136 = vector.extract_strided_slice %123 {offsets = [0, 3], sizes = [8, 1], strides = [1, 1]} : vector<8x8xf32> to vector<8x1xf32>
    %137 = vector.broadcast %136 : vector<8x1xf32> to vector<8x8xf32>
    %138 = vector.broadcast %43 : vector<1x8xf32> to vector<8x8xf32>
    %139 = arith.mulf %137, %138 : vector<8x8xf32>
    %140 = vector.extract_strided_slice %123 {offsets = [0, 4], sizes = [8, 1], strides = [1, 1]} : vector<8x8xf32> to vector<8x1xf32>
    %141 = vector.broadcast %140 : vector<8x1xf32> to vector<8x8xf32>
    %142 = vector.broadcast %44 : vector<1x8xf32> to vector<8x8xf32>
    %143 = arith.mulf %141, %142 : vector<8x8xf32>
    %144 = vector.extract_strided_slice %123 {offsets = [0, 5], sizes = [8, 1], strides = [1, 1]} : vector<8x8xf32> to vector<8x1xf32>
    %145 = vector.broadcast %144 : vector<8x1xf32> to vector<8x8xf32>
    %146 = vector.broadcast %45 : vector<1x8xf32> to vector<8x8xf32>
    %147 = arith.mulf %145, %146 : vector<8x8xf32>
    %148 = vector.extract_strided_slice %123 {offsets = [0, 6], sizes = [8, 1], strides = [1, 1]} : vector<8x8xf32> to vector<8x1xf32>
    %149 = vector.broadcast %148 : vector<8x1xf32> to vector<8x8xf32>
    %150 = vector.broadcast %46 : vector<1x8xf32> to vector<8x8xf32>
    %151 = arith.mulf %149, %150 : vector<8x8xf32>
    %152 = vector.extract_strided_slice %123 {offsets = [0, 7], sizes = [8, 1], strides = [1, 1]} : vector<8x8xf32> to vector<8x1xf32>
    %153 = vector.broadcast %152 : vector<8x1xf32> to vector<8x8xf32>
    %154 = vector.broadcast %47 : vector<1x8xf32> to vector<8x8xf32>
    %155 = arith.mulf %153, %154 : vector<8x8xf32>
    %156 = arith.addf %127, %131 : vector<8x8xf32>
    %157 = arith.addf %135, %139 : vector<8x8xf32>
    %158 = arith.addf %143, %147 : vector<8x8xf32>
    %159 = arith.addf %151, %155 : vector<8x8xf32>
    %160 = arith.addf %156, %157 : vector<8x8xf32>
    %161 = arith.addf %158, %159 : vector<8x8xf32>
    %162 = arith.addf %160, %161 : vector<8x8xf32>
    %163 = arith.addf %162, %61 : vector<8x8xf32>
    %164 = math.tanh %163 : vector<8x8xf32>
    %cst_22 = arith.constant dense<0.000000e+00> : vector<8xf32>
    %165 = vector.multi_reduction <add>, %164, %cst_22 [1] : vector<8x8xf32> to vector<8xf32>
    %166 = vector.shape_cast %165 : vector<8xf32> to vector<8x1xf32>
    %cst_23 = arith.constant 1.250000e-01 : f32
    %167 = vector.broadcast %cst_23 : f32 to vector<8x1xf32>
    %168 = arith.mulf %166, %167 : vector<8x1xf32>
    %169 = arith.mulf %164, %164 : vector<8x8xf32>
    %cst_24 = arith.constant dense<0.000000e+00> : vector<8xf32>
    %170 = vector.multi_reduction <add>, %169, %cst_24 [1] : vector<8x8xf32> to vector<8xf32>
    %171 = vector.shape_cast %170 : vector<8xf32> to vector<8x1xf32>
    %cst_25 = arith.constant 1.250000e-01 : f32
    %172 = vector.broadcast %cst_25 : f32 to vector<8x1xf32>
    %173 = arith.mulf %171, %172 : vector<8x1xf32>
    %174 = arith.mulf %168, %168 : vector<8x1xf32>
    %175 = arith.subf %173, %174 : vector<8x1xf32>
    %176 = vector.broadcast %168 : vector<8x1xf32> to vector<8x8xf32>
    %177 = arith.subf %164, %176 : vector<8x8xf32>
    %cst_26 = arith.constant 9.99999974E-6 : f32
    %178 = vector.broadcast %cst_26 : f32 to vector<8x1xf32>
    %179 = arith.addf %175, %178 : vector<8x1xf32>
    %180 = math.rsqrt %179 : vector<8x1xf32>
    %181 = vector.broadcast %180 : vector<8x1xf32> to vector<8x8xf32>
    %182 = arith.mulf %177, %181 : vector<8x8xf32>
    %183 = vector.extract_strided_slice %182 {offsets = [0, 0], sizes = [8, 1], strides = [1, 1]} : vector<8x8xf32> to vector<8x1xf32>
    %184 = vector.broadcast %183 : vector<8x1xf32> to vector<8x8xf32>
    %185 = vector.broadcast %48 : vector<1x8xf32> to vector<8x8xf32>
    %186 = arith.mulf %184, %185 : vector<8x8xf32>
    %187 = vector.extract_strided_slice %182 {offsets = [0, 1], sizes = [8, 1], strides = [1, 1]} : vector<8x8xf32> to vector<8x1xf32>
    %188 = vector.broadcast %187 : vector<8x1xf32> to vector<8x8xf32>
    %189 = vector.broadcast %49 : vector<1x8xf32> to vector<8x8xf32>
    %190 = arith.mulf %188, %189 : vector<8x8xf32>
    %191 = vector.extract_strided_slice %182 {offsets = [0, 2], sizes = [8, 1], strides = [1, 1]} : vector<8x8xf32> to vector<8x1xf32>
    %192 = vector.broadcast %191 : vector<8x1xf32> to vector<8x8xf32>
    %193 = vector.broadcast %50 : vector<1x8xf32> to vector<8x8xf32>
    %194 = arith.mulf %192, %193 : vector<8x8xf32>
    %195 = vector.extract_strided_slice %182 {offsets = [0, 3], sizes = [8, 1], strides = [1, 1]} : vector<8x8xf32> to vector<8x1xf32>
    %196 = vector.broadcast %195 : vector<8x1xf32> to vector<8x8xf32>
    %197 = vector.broadcast %51 : vector<1x8xf32> to vector<8x8xf32>
    %198 = arith.mulf %196, %197 : vector<8x8xf32>
    %199 = vector.extract_strided_slice %182 {offsets = [0, 4], sizes = [8, 1], strides = [1, 1]} : vector<8x8xf32> to vector<8x1xf32>
    %200 = vector.broadcast %199 : vector<8x1xf32> to vector<8x8xf32>
    %201 = vector.broadcast %52 : vector<1x8xf32> to vector<8x8xf32>
    %202 = arith.mulf %200, %201 : vector<8x8xf32>
    %203 = vector.extract_strided_slice %182 {offsets = [0, 5], sizes = [8, 1], strides = [1, 1]} : vector<8x8xf32> to vector<8x1xf32>
    %204 = vector.broadcast %203 : vector<8x1xf32> to vector<8x8xf32>
    %205 = vector.broadcast %53 : vector<1x8xf32> to vector<8x8xf32>
    %206 = arith.mulf %204, %205 : vector<8x8xf32>
    %207 = vector.extract_strided_slice %182 {offsets = [0, 6], sizes = [8, 1], strides = [1, 1]} : vector<8x8xf32> to vector<8x1xf32>
    %208 = vector.broadcast %207 : vector<8x1xf32> to vector<8x8xf32>
    %209 = vector.broadcast %54 : vector<1x8xf32> to vector<8x8xf32>
    %210 = arith.mulf %208, %209 : vector<8x8xf32>
    %211 = vector.extract_strided_slice %182 {offsets = [0, 7], sizes = [8, 1], strides = [1, 1]} : vector<8x8xf32> to vector<8x1xf32>
    %212 = vector.broadcast %211 : vector<8x1xf32> to vector<8x8xf32>
    %213 = vector.broadcast %55 : vector<1x8xf32> to vector<8x8xf32>
    %214 = arith.mulf %212, %213 : vector<8x8xf32>
    %215 = arith.addf %186, %190 : vector<8x8xf32>
    %216 = arith.addf %194, %198 : vector<8x8xf32>
    %217 = arith.addf %202, %206 : vector<8x8xf32>
    %218 = arith.addf %210, %214 : vector<8x8xf32>
    %219 = arith.addf %215, %216 : vector<8x8xf32>
    %220 = arith.addf %217, %218 : vector<8x8xf32>
    %221 = arith.addf %219, %220 : vector<8x8xf32>
    %222 = arith.addf %221, %64 : vector<8x8xf32>
    %223 = arith.negf %222 : vector<8x8xf32>
    %224 = math.exp %223 : vector<8x8xf32>
    %cst_27 = arith.constant 1.000000e+00 : f32
    %225 = vector.broadcast %cst_27 : f32 to vector<8x8xf32>
    %226 = arith.addf %225, %224 : vector<8x8xf32>
    %227 = arith.divf %225, %226 : vector<8x8xf32>
    %c1 = arith.constant 1 : index
    %c0_28 = arith.constant 0 : index
    %c0_29 = arith.constant 0 : index
    %228 = vector.load %arg2[%c1, %c0_28, %c0_29] : memref<8x8x8xf32, #tpu.memory_space<vmem>>, vector<1x8x8xf32>
    %229 = vector.shape_cast %228 : vector<1x8x8xf32> to vector<8x8xf32>
    %c1_30 = arith.constant 1 : index
    %c0_31 = arith.constant 0 : index
    %c0_32 = arith.constant 0 : index
    %230 = vector.load %arg4[%c1_30, %c0_31, %c0_32] : memref<8x8x8xf32, #tpu.memory_space<vmem>>, vector<1x8x8xf32>
    %231 = vector.shape_cast %230 : vector<1x8x8xf32> to vector<8x8xf32>
    %c1_33 = arith.constant 1 : index
    %c0_34 = arith.constant 0 : index
    %c0_35 = arith.constant 0 : index
    %232 = vector.load %arg6[%c1_33, %c0_34, %c0_35] : memref<8x8x8xf32, #tpu.memory_space<vmem>>, vector<1x8x8xf32>
    %233 = vector.shape_cast %232 : vector<1x8x8xf32> to vector<8x8xf32>
    %234 = vector.extract_strided_slice %1 {offsets = [1, 0], sizes = [1, 1], strides = [1, 1]} : vector<8x8xf32> to vector<1x1xf32>
    %235 = vector.extract_strided_slice %229 {offsets = [0, 0], sizes = [1, 8], strides = [1, 1]} : vector<8x8xf32> to vector<1x8xf32>
    %236 = vector.broadcast %234 : vector<1x1xf32> to vector<1x8xf32>
    %237 = arith.mulf %236, %235 : vector<1x8xf32>
    %238 = vector.extract_strided_slice %1 {offsets = [1, 1], sizes = [1, 1], strides = [1, 1]} : vector<8x8xf32> to vector<1x1xf32>
    %239 = vector.extract_strided_slice %229 {offsets = [1, 0], sizes = [1, 8], strides = [1, 1]} : vector<8x8xf32> to vector<1x8xf32>
    %240 = vector.broadcast %238 : vector<1x1xf32> to vector<1x8xf32>
    %241 = arith.mulf %240, %239 : vector<1x8xf32>
    %242 = vector.extract_strided_slice %1 {offsets = [1, 2], sizes = [1, 1], strides = [1, 1]} : vector<8x8xf32> to vector<1x1xf32>
    %243 = vector.extract_strided_slice %229 {offsets = [2, 0], sizes = [1, 8], strides = [1, 1]} : vector<8x8xf32> to vector<1x8xf32>
    %244 = vector.broadcast %242 : vector<1x1xf32> to vector<1x8xf32>
    %245 = arith.mulf %244, %243 : vector<1x8xf32>
    %246 = vector.extract_strided_slice %1 {offsets = [1, 3], sizes = [1, 1], strides = [1, 1]} : vector<8x8xf32> to vector<1x1xf32>
    %247 = vector.extract_strided_slice %229 {offsets = [3, 0], sizes = [1, 8], strides = [1, 1]} : vector<8x8xf32> to vector<1x8xf32>
    %248 = vector.broadcast %246 : vector<1x1xf32> to vector<1x8xf32>
    %249 = arith.mulf %248, %247 : vector<1x8xf32>
    %250 = vector.extract_strided_slice %1 {offsets = [1, 4], sizes = [1, 1], strides = [1, 1]} : vector<8x8xf32> to vector<1x1xf32>
    %251 = vector.extract_strided_slice %229 {offsets = [4, 0], sizes = [1, 8], strides = [1, 1]} : vector<8x8xf32> to vector<1x8xf32>
    %252 = vector.broadcast %250 : vector<1x1xf32> to vector<1x8xf32>
    %253 = arith.mulf %252, %251 : vector<1x8xf32>
    %254 = vector.extract_strided_slice %1 {offsets = [1, 5], sizes = [1, 1], strides = [1, 1]} : vector<8x8xf32> to vector<1x1xf32>
    %255 = vector.extract_strided_slice %229 {offsets = [5, 0], sizes = [1, 8], strides = [1, 1]} : vector<8x8xf32> to vector<1x8xf32>
    %256 = vector.broadcast %254 : vector<1x1xf32> to vector<1x8xf32>
    %257 = arith.mulf %256, %255 : vector<1x8xf32>
    %258 = vector.extract_strided_slice %1 {offsets = [1, 6], sizes = [1, 1], strides = [1, 1]} : vector<8x8xf32> to vector<1x1xf32>
    %259 = vector.extract_strided_slice %229 {offsets = [6, 0], sizes = [1, 8], strides = [1, 1]} : vector<8x8xf32> to vector<1x8xf32>
    %260 = vector.broadcast %258 : vector<1x1xf32> to vector<1x8xf32>
    %261 = arith.mulf %260, %259 : vector<1x8xf32>
    %262 = vector.extract_strided_slice %1 {offsets = [1, 7], sizes = [1, 1], strides = [1, 1]} : vector<8x8xf32> to vector<1x1xf32>
    %263 = vector.extract_strided_slice %229 {offsets = [7, 0], sizes = [1, 8], strides = [1, 1]} : vector<8x8xf32> to vector<1x8xf32>
    %264 = vector.broadcast %262 : vector<1x1xf32> to vector<1x8xf32>
    %265 = arith.mulf %264, %263 : vector<1x8xf32>
    %266 = vector.extract_strided_slice %231 {offsets = [0, 0], sizes = [1, 8], strides = [1, 1]} : vector<8x8xf32> to vector<1x8xf32>
    %267 = vector.extract_strided_slice %231 {offsets = [1, 0], sizes = [1, 8], strides = [1, 1]} : vector<8x8xf32> to vector<1x8xf32>
    %268 = vector.extract_strided_slice %231 {offsets = [2, 0], sizes = [1, 8], strides = [1, 1]} : vector<8x8xf32> to vector<1x8xf32>
    %269 = vector.extract_strided_slice %231 {offsets = [3, 0], sizes = [1, 8], strides = [1, 1]} : vector<8x8xf32> to vector<1x8xf32>
    %270 = vector.extract_strided_slice %231 {offsets = [4, 0], sizes = [1, 8], strides = [1, 1]} : vector<8x8xf32> to vector<1x8xf32>
    %271 = vector.extract_strided_slice %231 {offsets = [5, 0], sizes = [1, 8], strides = [1, 1]} : vector<8x8xf32> to vector<1x8xf32>
    %272 = vector.extract_strided_slice %231 {offsets = [6, 0], sizes = [1, 8], strides = [1, 1]} : vector<8x8xf32> to vector<1x8xf32>
    %273 = vector.extract_strided_slice %231 {offsets = [7, 0], sizes = [1, 8], strides = [1, 1]} : vector<8x8xf32> to vector<1x8xf32>
    %274 = vector.extract_strided_slice %233 {offsets = [0, 0], sizes = [1, 8], strides = [1, 1]} : vector<8x8xf32> to vector<1x8xf32>
    %275 = vector.extract_strided_slice %233 {offsets = [1, 0], sizes = [1, 8], strides = [1, 1]} : vector<8x8xf32> to vector<1x8xf32>
    %276 = vector.extract_strided_slice %233 {offsets = [2, 0], sizes = [1, 8], strides = [1, 1]} : vector<8x8xf32> to vector<1x8xf32>
    %277 = vector.extract_strided_slice %233 {offsets = [3, 0], sizes = [1, 8], strides = [1, 1]} : vector<8x8xf32> to vector<1x8xf32>
    %278 = vector.extract_strided_slice %233 {offsets = [4, 0], sizes = [1, 8], strides = [1, 1]} : vector<8x8xf32> to vector<1x8xf32>
    %279 = vector.extract_strided_slice %233 {offsets = [5, 0], sizes = [1, 8], strides = [1, 1]} : vector<8x8xf32> to vector<1x8xf32>
    %280 = vector.extract_strided_slice %233 {offsets = [6, 0], sizes = [1, 8], strides = [1, 1]} : vector<8x8xf32> to vector<1x8xf32>
    %281 = vector.extract_strided_slice %233 {offsets = [7, 0], sizes = [1, 8], strides = [1, 1]} : vector<8x8xf32> to vector<1x8xf32>
    %c1_36 = arith.constant 1 : index
    %c0_37 = arith.constant 0 : index
    %282 = vector.load %arg3[%c1_36, %c0_37] : memref<8x8xf32, #tpu.memory_space<vmem>>, vector<1x8xf32>
    %283 = vector.shape_cast %282 : vector<1x8xf32> to vector<1x8xf32>
    %284 = vector.broadcast %283 : vector<1x8xf32> to vector<8x8xf32>
    %c1_38 = arith.constant 1 : index
    %c0_39 = arith.constant 0 : index
    %285 = vector.load %arg5[%c1_38, %c0_39] : memref<8x8xf32, #tpu.memory_space<vmem>>, vector<1x8xf32>
    %286 = vector.shape_cast %285 : vector<1x8xf32> to vector<1x8xf32>
    %287 = vector.broadcast %286 : vector<1x8xf32> to vector<8x8xf32>
    %c1_40 = arith.constant 1 : index
    %c0_41 = arith.constant 0 : index
    %288 = vector.load %arg7[%c1_40, %c0_41] : memref<8x8xf32, #tpu.memory_space<vmem>>, vector<1x8xf32>
    %289 = vector.shape_cast %288 : vector<1x8xf32> to vector<1x8xf32>
    %290 = vector.broadcast %289 : vector<1x8xf32> to vector<8x8xf32>
    %291 = vector.extract_strided_slice %227 {offsets = [0, 0], sizes = [8, 1], strides = [1, 1]} : vector<8x8xf32> to vector<8x1xf32>
    %292 = vector.broadcast %291 : vector<8x1xf32> to vector<8x8xf32>
    %293 = vector.broadcast %237 : vector<1x8xf32> to vector<8x8xf32>
    %294 = arith.mulf %292, %293 : vector<8x8xf32>
    %295 = vector.extract_strided_slice %227 {offsets = [0, 1], sizes = [8, 1], strides = [1, 1]} : vector<8x8xf32> to vector<8x1xf32>
    %296 = vector.broadcast %295 : vector<8x1xf32> to vector<8x8xf32>
    %297 = vector.broadcast %241 : vector<1x8xf32> to vector<8x8xf32>
    %298 = arith.mulf %296, %297 : vector<8x8xf32>
    %299 = vector.extract_strided_slice %227 {offsets = [0, 2], sizes = [8, 1], strides = [1, 1]} : vector<8x8xf32> to vector<8x1xf32>
    %300 = vector.broadcast %299 : vector<8x1xf32> to vector<8x8xf32>
    %301 = vector.broadcast %245 : vector<1x8xf32> to vector<8x8xf32>
    %302 = arith.mulf %300, %301 : vector<8x8xf32>
    %303 = vector.extract_strided_slice %227 {offsets = [0, 3], sizes = [8, 1], strides = [1, 1]} : vector<8x8xf32> to vector<8x1xf32>
    %304 = vector.broadcast %303 : vector<8x1xf32> to vector<8x8xf32>
    %305 = vector.broadcast %249 : vector<1x8xf32> to vector<8x8xf32>
    %306 = arith.mulf %304, %305 : vector<8x8xf32>
    %307 = vector.extract_strided_slice %227 {offsets = [0, 4], sizes = [8, 1], strides = [1, 1]} : vector<8x8xf32> to vector<8x1xf32>
    %308 = vector.broadcast %307 : vector<8x1xf32> to vector<8x8xf32>
    %309 = vector.broadcast %253 : vector<1x8xf32> to vector<8x8xf32>
    %310 = arith.mulf %308, %309 : vector<8x8xf32>
    %311 = vector.extract_strided_slice %227 {offsets = [0, 5], sizes = [8, 1], strides = [1, 1]} : vector<8x8xf32> to vector<8x1xf32>
    %312 = vector.broadcast %311 : vector<8x1xf32> to vector<8x8xf32>
    %313 = vector.broadcast %257 : vector<1x8xf32> to vector<8x8xf32>
    %314 = arith.mulf %312, %313 : vector<8x8xf32>
    %315 = vector.extract_strided_slice %227 {offsets = [0, 6], sizes = [8, 1], strides = [1, 1]} : vector<8x8xf32> to vector<8x1xf32>
    %316 = vector.broadcast %315 : vector<8x1xf32> to vector<8x8xf32>
    %317 = vector.broadcast %261 : vector<1x8xf32> to vector<8x8xf32>
    %318 = arith.mulf %316, %317 : vector<8x8xf32>
    %319 = vector.extract_strided_slice %227 {offsets = [0, 7], sizes = [8, 1], strides = [1, 1]} : vector<8x8xf32> to vector<8x1xf32>
    %320 = vector.broadcast %319 : vector<8x1xf32> to vector<8x8xf32>
    %321 = vector.broadcast %265 : vector<1x8xf32> to vector<8x8xf32>
    %322 = arith.mulf %320, %321 : vector<8x8xf32>
    %323 = arith.addf %294, %298 : vector<8x8xf32>
    %324 = arith.addf %302, %306 : vector<8x8xf32>
    %325 = arith.addf %310, %314 : vector<8x8xf32>
    %326 = arith.addf %318, %322 : vector<8x8xf32>
    %327 = arith.addf %323, %324 : vector<8x8xf32>
    %328 = arith.addf %325, %326 : vector<8x8xf32>
    %329 = arith.addf %327, %328 : vector<8x8xf32>
    %330 = arith.addf %329, %284 : vector<8x8xf32>
    %331 = math.tanh %330 : vector<8x8xf32>
    %cst_42 = arith.constant dense<0.000000e+00> : vector<8xf32>
    %332 = vector.multi_reduction <add>, %331, %cst_42 [1] : vector<8x8xf32> to vector<8xf32>
    %333 = vector.shape_cast %332 : vector<8xf32> to vector<8x1xf32>
    %cst_43 = arith.constant 1.250000e-01 : f32
    %334 = vector.broadcast %cst_43 : f32 to vector<8x1xf32>
    %335 = arith.mulf %333, %334 : vector<8x1xf32>
    %336 = arith.mulf %331, %331 : vector<8x8xf32>
    %cst_44 = arith.constant dense<0.000000e+00> : vector<8xf32>
    %337 = vector.multi_reduction <add>, %336, %cst_44 [1] : vector<8x8xf32> to vector<8xf32>
    %338 = vector.shape_cast %337 : vector<8xf32> to vector<8x1xf32>
    %cst_45 = arith.constant 1.250000e-01 : f32
    %339 = vector.broadcast %cst_45 : f32 to vector<8x1xf32>
    %340 = arith.mulf %338, %339 : vector<8x1xf32>
    %341 = arith.mulf %335, %335 : vector<8x1xf32>
    %342 = arith.subf %340, %341 : vector<8x1xf32>
    %343 = vector.broadcast %335 : vector<8x1xf32> to vector<8x8xf32>
    %344 = arith.subf %331, %343 : vector<8x8xf32>
    %cst_46 = arith.constant 9.99999974E-6 : f32
    %345 = vector.broadcast %cst_46 : f32 to vector<8x1xf32>
    %346 = arith.addf %342, %345 : vector<8x1xf32>
    %347 = math.rsqrt %346 : vector<8x1xf32>
    %348 = vector.broadcast %347 : vector<8x1xf32> to vector<8x8xf32>
    %349 = arith.mulf %344, %348 : vector<8x8xf32>
    %350 = vector.extract_strided_slice %349 {offsets = [0, 0], sizes = [8, 1], strides = [1, 1]} : vector<8x8xf32> to vector<8x1xf32>
    %351 = vector.broadcast %350 : vector<8x1xf32> to vector<8x8xf32>
    %352 = vector.broadcast %266 : vector<1x8xf32> to vector<8x8xf32>
    %353 = arith.mulf %351, %352 : vector<8x8xf32>
    %354 = vector.extract_strided_slice %349 {offsets = [0, 1], sizes = [8, 1], strides = [1, 1]} : vector<8x8xf32> to vector<8x1xf32>
    %355 = vector.broadcast %354 : vector<8x1xf32> to vector<8x8xf32>
    %356 = vector.broadcast %267 : vector<1x8xf32> to vector<8x8xf32>
    %357 = arith.mulf %355, %356 : vector<8x8xf32>
    %358 = vector.extract_strided_slice %349 {offsets = [0, 2], sizes = [8, 1], strides = [1, 1]} : vector<8x8xf32> to vector<8x1xf32>
    %359 = vector.broadcast %358 : vector<8x1xf32> to vector<8x8xf32>
    %360 = vector.broadcast %268 : vector<1x8xf32> to vector<8x8xf32>
    %361 = arith.mulf %359, %360 : vector<8x8xf32>
    %362 = vector.extract_strided_slice %349 {offsets = [0, 3], sizes = [8, 1], strides = [1, 1]} : vector<8x8xf32> to vector<8x1xf32>
    %363 = vector.broadcast %362 : vector<8x1xf32> to vector<8x8xf32>
    %364 = vector.broadcast %269 : vector<1x8xf32> to vector<8x8xf32>
    %365 = arith.mulf %363, %364 : vector<8x8xf32>
    %366 = vector.extract_strided_slice %349 {offsets = [0, 4], sizes = [8, 1], strides = [1, 1]} : vector<8x8xf32> to vector<8x1xf32>
    %367 = vector.broadcast %366 : vector<8x1xf32> to vector<8x8xf32>
    %368 = vector.broadcast %270 : vector<1x8xf32> to vector<8x8xf32>
    %369 = arith.mulf %367, %368 : vector<8x8xf32>
    %370 = vector.extract_strided_slice %349 {offsets = [0, 5], sizes = [8, 1], strides = [1, 1]} : vector<8x8xf32> to vector<8x1xf32>
    %371 = vector.broadcast %370 : vector<8x1xf32> to vector<8x8xf32>
    %372 = vector.broadcast %271 : vector<1x8xf32> to vector<8x8xf32>
    %373 = arith.mulf %371, %372 : vector<8x8xf32>
    %374 = vector.extract_strided_slice %349 {offsets = [0, 6], sizes = [8, 1], strides = [1, 1]} : vector<8x8xf32> to vector<8x1xf32>
    %375 = vector.broadcast %374 : vector<8x1xf32> to vector<8x8xf32>
    %376 = vector.broadcast %272 : vector<1x8xf32> to vector<8x8xf32>
    %377 = arith.mulf %375, %376 : vector<8x8xf32>
    %378 = vector.extract_strided_slice %349 {offsets = [0, 7], sizes = [8, 1], strides = [1, 1]} : vector<8x8xf32> to vector<8x1xf32>
    %379 = vector.broadcast %378 : vector<8x1xf32> to vector<8x8xf32>
    %380 = vector.broadcast %273 : vector<1x8xf32> to vector<8x8xf32>
    %381 = arith.mulf %379, %380 : vector<8x8xf32>
    %382 = arith.addf %353, %357 : vector<8x8xf32>
    %383 = arith.addf %361, %365 : vector<8x8xf32>
    %384 = arith.addf %369, %373 : vector<8x8xf32>
    %385 = arith.addf %377, %381 : vector<8x8xf32>
    %386 = arith.addf %382, %383 : vector<8x8xf32>
    %387 = arith.addf %384, %385 : vector<8x8xf32>
    %388 = arith.addf %386, %387 : vector<8x8xf32>
    %389 = arith.addf %388, %287 : vector<8x8xf32>
    %390 = math.tanh %389 : vector<8x8xf32>
    %cst_47 = arith.constant dense<0.000000e+00> : vector<8xf32>
    %391 = vector.multi_reduction <add>, %390, %cst_47 [1] : vector<8x8xf32> to vector<8xf32>
    %392 = vector.shape_cast %391 : vector<8xf32> to vector<8x1xf32>
    %cst_48 = arith.constant 1.250000e-01 : f32
    %393 = vector.broadcast %cst_48 : f32 to vector<8x1xf32>
    %394 = arith.mulf %392, %393 : vector<8x1xf32>
    %395 = arith.mulf %390, %390 : vector<8x8xf32>
    %cst_49 = arith.constant dense<0.000000e+00> : vector<8xf32>
    %396 = vector.multi_reduction <add>, %395, %cst_49 [1] : vector<8x8xf32> to vector<8xf32>
    %397 = vector.shape_cast %396 : vector<8xf32> to vector<8x1xf32>
    %cst_50 = arith.constant 1.250000e-01 : f32
    %398 = vector.broadcast %cst_50 : f32 to vector<8x1xf32>
    %399 = arith.mulf %397, %398 : vector<8x1xf32>
    %400 = arith.mulf %394, %394 : vector<8x1xf32>
    %401 = arith.subf %399, %400 : vector<8x1xf32>
    %402 = vector.broadcast %394 : vector<8x1xf32> to vector<8x8xf32>
    %403 = arith.subf %390, %402 : vector<8x8xf32>
    %cst_51 = arith.constant 9.99999974E-6 : f32
    %404 = vector.broadcast %cst_51 : f32 to vector<8x1xf32>
    %405 = arith.addf %401, %404 : vector<8x1xf32>
    %406 = math.rsqrt %405 : vector<8x1xf32>
    %407 = vector.broadcast %406 : vector<8x1xf32> to vector<8x8xf32>
    %408 = arith.mulf %403, %407 : vector<8x8xf32>
    %409 = vector.extract_strided_slice %408 {offsets = [0, 0], sizes = [8, 1], strides = [1, 1]} : vector<8x8xf32> to vector<8x1xf32>
    %410 = vector.broadcast %409 : vector<8x1xf32> to vector<8x8xf32>
    %411 = vector.broadcast %274 : vector<1x8xf32> to vector<8x8xf32>
    %412 = arith.mulf %410, %411 : vector<8x8xf32>
    %413 = vector.extract_strided_slice %408 {offsets = [0, 1], sizes = [8, 1], strides = [1, 1]} : vector<8x8xf32> to vector<8x1xf32>
    %414 = vector.broadcast %413 : vector<8x1xf32> to vector<8x8xf32>
    %415 = vector.broadcast %275 : vector<1x8xf32> to vector<8x8xf32>
    %416 = arith.mulf %414, %415 : vector<8x8xf32>
    %417 = vector.extract_strided_slice %408 {offsets = [0, 2], sizes = [8, 1], strides = [1, 1]} : vector<8x8xf32> to vector<8x1xf32>
    %418 = vector.broadcast %417 : vector<8x1xf32> to vector<8x8xf32>
    %419 = vector.broadcast %276 : vector<1x8xf32> to vector<8x8xf32>
    %420 = arith.mulf %418, %419 : vector<8x8xf32>
    %421 = vector.extract_strided_slice %408 {offsets = [0, 3], sizes = [8, 1], strides = [1, 1]} : vector<8x8xf32> to vector<8x1xf32>
    %422 = vector.broadcast %421 : vector<8x1xf32> to vector<8x8xf32>
    %423 = vector.broadcast %277 : vector<1x8xf32> to vector<8x8xf32>
    %424 = arith.mulf %422, %423 : vector<8x8xf32>
    %425 = vector.extract_strided_slice %408 {offsets = [0, 4], sizes = [8, 1], strides = [1, 1]} : vector<8x8xf32> to vector<8x1xf32>
    %426 = vector.broadcast %425 : vector<8x1xf32> to vector<8x8xf32>
    %427 = vector.broadcast %278 : vector<1x8xf32> to vector<8x8xf32>
    %428 = arith.mulf %426, %427 : vector<8x8xf32>
    %429 = vector.extract_strided_slice %408 {offsets = [0, 5], sizes = [8, 1], strides = [1, 1]} : vector<8x8xf32> to vector<8x1xf32>
    %430 = vector.broadcast %429 : vector<8x1xf32> to vector<8x8xf32>
    %431 = vector.broadcast %279 : vector<1x8xf32> to vector<8x8xf32>
    %432 = arith.mulf %430, %431 : vector<8x8xf32>
    %433 = vector.extract_strided_slice %408 {offsets = [0, 6], sizes = [8, 1], strides = [1, 1]} : vector<8x8xf32> to vector<8x1xf32>
    %434 = vector.broadcast %433 : vector<8x1xf32> to vector<8x8xf32>
    %435 = vector.broadcast %280 : vector<1x8xf32> to vector<8x8xf32>
    %436 = arith.mulf %434, %435 : vector<8x8xf32>
    %437 = vector.extract_strided_slice %408 {offsets = [0, 7], sizes = [8, 1], strides = [1, 1]} : vector<8x8xf32> to vector<8x1xf32>
    %438 = vector.broadcast %437 : vector<8x1xf32> to vector<8x8xf32>
    %439 = vector.broadcast %281 : vector<1x8xf32> to vector<8x8xf32>
    %440 = arith.mulf %438, %439 : vector<8x8xf32>
    %441 = arith.addf %412, %416 : vector<8x8xf32>
    %442 = arith.addf %420, %424 : vector<8x8xf32>
    %443 = arith.addf %428, %432 : vector<8x8xf32>
    %444 = arith.addf %436, %440 : vector<8x8xf32>
    %445 = arith.addf %441, %442 : vector<8x8xf32>
    %446 = arith.addf %443, %444 : vector<8x8xf32>
    %447 = arith.addf %445, %446 : vector<8x8xf32>
    %448 = arith.addf %447, %290 : vector<8x8xf32>
    %449 = arith.negf %448 : vector<8x8xf32>
    %450 = math.exp %449 : vector<8x8xf32>
    %cst_52 = arith.constant 1.000000e+00 : f32
    %451 = vector.broadcast %cst_52 : f32 to vector<8x8xf32>
    %452 = arith.addf %451, %450 : vector<8x8xf32>
    %453 = arith.divf %451, %452 : vector<8x8xf32>
    %c2 = arith.constant 2 : index
    %c0_53 = arith.constant 0 : index
    %c0_54 = arith.constant 0 : index
    %454 = vector.load %arg2[%c2, %c0_53, %c0_54] : memref<8x8x8xf32, #tpu.memory_space<vmem>>, vector<1x8x8xf32>
    %455 = vector.shape_cast %454 : vector<1x8x8xf32> to vector<8x8xf32>
    %c2_55 = arith.constant 2 : index
    %c0_56 = arith.constant 0 : index
    %c0_57 = arith.constant 0 : index
    %456 = vector.load %arg4[%c2_55, %c0_56, %c0_57] : memref<8x8x8xf32, #tpu.memory_space<vmem>>, vector<1x8x8xf32>
    %457 = vector.shape_cast %456 : vector<1x8x8xf32> to vector<8x8xf32>
    %c2_58 = arith.constant 2 : index
    %c0_59 = arith.constant 0 : index
    %c0_60 = arith.constant 0 : index
    %458 = vector.load %arg6[%c2_58, %c0_59, %c0_60] : memref<8x8x8xf32, #tpu.memory_space<vmem>>, vector<1x8x8xf32>
    %459 = vector.shape_cast %458 : vector<1x8x8xf32> to vector<8x8xf32>
    %460 = vector.extract_strided_slice %1 {offsets = [2, 0], sizes = [1, 1], strides = [1, 1]} : vector<8x8xf32> to vector<1x1xf32>
    %461 = vector.extract_strided_slice %455 {offsets = [0, 0], sizes = [1, 8], strides = [1, 1]} : vector<8x8xf32> to vector<1x8xf32>
    %462 = vector.broadcast %460 : vector<1x1xf32> to vector<1x8xf32>
    %463 = arith.mulf %462, %461 : vector<1x8xf32>
    %464 = vector.extract_strided_slice %1 {offsets = [2, 1], sizes = [1, 1], strides = [1, 1]} : vector<8x8xf32> to vector<1x1xf32>
    %465 = vector.extract_strided_slice %455 {offsets = [1, 0], sizes = [1, 8], strides = [1, 1]} : vector<8x8xf32> to vector<1x8xf32>
    %466 = vector.broadcast %464 : vector<1x1xf32> to vector<1x8xf32>
    %467 = arith.mulf %466, %465 : vector<1x8xf32>
    %468 = vector.extract_strided_slice %1 {offsets = [2, 2], sizes = [1, 1], strides = [1, 1]} : vector<8x8xf32> to vector<1x1xf32>
    %469 = vector.extract_strided_slice %455 {offsets = [2, 0], sizes = [1, 8], strides = [1, 1]} : vector<8x8xf32> to vector<1x8xf32>
    %470 = vector.broadcast %468 : vector<1x1xf32> to vector<1x8xf32>
    %471 = arith.mulf %470, %469 : vector<1x8xf32>
    %472 = vector.extract_strided_slice %1 {offsets = [2, 3], sizes = [1, 1], strides = [1, 1]} : vector<8x8xf32> to vector<1x1xf32>
    %473 = vector.extract_strided_slice %455 {offsets = [3, 0], sizes = [1, 8], strides = [1, 1]} : vector<8x8xf32> to vector<1x8xf32>
    %474 = vector.broadcast %472 : vector<1x1xf32> to vector<1x8xf32>
    %475 = arith.mulf %474, %473 : vector<1x8xf32>
    %476 = vector.extract_strided_slice %1 {offsets = [2, 4], sizes = [1, 1], strides = [1, 1]} : vector<8x8xf32> to vector<1x1xf32>
    %477 = vector.extract_strided_slice %455 {offsets = [4, 0], sizes = [1, 8], strides = [1, 1]} : vector<8x8xf32> to vector<1x8xf32>
    %478 = vector.broadcast %476 : vector<1x1xf32> to vector<1x8xf32>
    %479 = arith.mulf %478, %477 : vector<1x8xf32>
    %480 = vector.extract_strided_slice %1 {offsets = [2, 5], sizes = [1, 1], strides = [1, 1]} : vector<8x8xf32> to vector<1x1xf32>
    %481 = vector.extract_strided_slice %455 {offsets = [5, 0], sizes = [1, 8], strides = [1, 1]} : vector<8x8xf32> to vector<1x8xf32>
    %482 = vector.broadcast %480 : vector<1x1xf32> to vector<1x8xf32>
    %483 = arith.mulf %482, %481 : vector<1x8xf32>
    %484 = vector.extract_strided_slice %1 {offsets = [2, 6], sizes = [1, 1], strides = [1, 1]} : vector<8x8xf32> to vector<1x1xf32>
    %485 = vector.extract_strided_slice %455 {offsets = [6, 0], sizes = [1, 8], strides = [1, 1]} : vector<8x8xf32> to vector<1x8xf32>
    %486 = vector.broadcast %484 : vector<1x1xf32> to vector<1x8xf32>
    %487 = arith.mulf %486, %485 : vector<1x8xf32>
    %488 = vector.extract_strided_slice %1 {offsets = [2, 7], sizes = [1, 1], strides = [1, 1]} : vector<8x8xf32> to vector<1x1xf32>
    %489 = vector.extract_strided_slice %455 {offsets = [7, 0], sizes = [1, 8], strides = [1, 1]} : vector<8x8xf32> to vector<1x8xf32>
    %490 = vector.broadcast %488 : vector<1x1xf32> to vector<1x8xf32>
    %491 = arith.mulf %490, %489 : vector<1x8xf32>
    %492 = vector.extract_strided_slice %457 {offsets = [0, 0], sizes = [1, 8], strides = [1, 1]} : vector<8x8xf32> to vector<1x8xf32>
    %493 = vector.extract_strided_slice %457 {offsets = [1, 0], sizes = [1, 8], strides = [1, 1]} : vector<8x8xf32> to vector<1x8xf32>
    %494 = vector.extract_strided_slice %457 {offsets = [2, 0], sizes = [1, 8], strides = [1, 1]} : vector<8x8xf32> to vector<1x8xf32>
    %495 = vector.extract_strided_slice %457 {offsets = [3, 0], sizes = [1, 8], strides = [1, 1]} : vector<8x8xf32> to vector<1x8xf32>
    %496 = vector.extract_strided_slice %457 {offsets = [4, 0], sizes = [1, 8], strides = [1, 1]} : vector<8x8xf32> to vector<1x8xf32>
    %497 = vector.extract_strided_slice %457 {offsets = [5, 0], sizes = [1, 8], strides = [1, 1]} : vector<8x8xf32> to vector<1x8xf32>
    %498 = vector.extract_strided_slice %457 {offsets = [6, 0], sizes = [1, 8], strides = [1, 1]} : vector<8x8xf32> to vector<1x8xf32>
    %499 = vector.extract_strided_slice %457 {offsets = [7, 0], sizes = [1, 8], strides = [1, 1]} : vector<8x8xf32> to vector<1x8xf32>
    %500 = vector.extract_strided_slice %459 {offsets = [0, 0], sizes = [1, 8], strides = [1, 1]} : vector<8x8xf32> to vector<1x8xf32>
    %501 = vector.extract_strided_slice %459 {offsets = [1, 0], sizes = [1, 8], strides = [1, 1]} : vector<8x8xf32> to vector<1x8xf32>
    %502 = vector.extract_strided_slice %459 {offsets = [2, 0], sizes = [1, 8], strides = [1, 1]} : vector<8x8xf32> to vector<1x8xf32>
    %503 = vector.extract_strided_slice %459 {offsets = [3, 0], sizes = [1, 8], strides = [1, 1]} : vector<8x8xf32> to vector<1x8xf32>
    %504 = vector.extract_strided_slice %459 {offsets = [4, 0], sizes = [1, 8], strides = [1, 1]} : vector<8x8xf32> to vector<1x8xf32>
    %505 = vector.extract_strided_slice %459 {offsets = [5, 0], sizes = [1, 8], strides = [1, 1]} : vector<8x8xf32> to vector<1x8xf32>
    %506 = vector.extract_strided_slice %459 {offsets = [6, 0], sizes = [1, 8], strides = [1, 1]} : vector<8x8xf32> to vector<1x8xf32>
    %507 = vector.extract_strided_slice %459 {offsets = [7, 0], sizes = [1, 8], strides = [1, 1]} : vector<8x8xf32> to vector<1x8xf32>
    %c2_61 = arith.constant 2 : index
    %c0_62 = arith.constant 0 : index
    %508 = vector.load %arg3[%c2_61, %c0_62] : memref<8x8xf32, #tpu.memory_space<vmem>>, vector<1x8xf32>
    %509 = vector.shape_cast %508 : vector<1x8xf32> to vector<1x8xf32>
    %510 = vector.broadcast %509 : vector<1x8xf32> to vector<8x8xf32>
    %c2_63 = arith.constant 2 : index
    %c0_64 = arith.constant 0 : index
    %511 = vector.load %arg5[%c2_63, %c0_64] : memref<8x8xf32, #tpu.memory_space<vmem>>, vector<1x8xf32>
    %512 = vector.shape_cast %511 : vector<1x8xf32> to vector<1x8xf32>
    %513 = vector.broadcast %512 : vector<1x8xf32> to vector<8x8xf32>
    %c2_65 = arith.constant 2 : index
    %c0_66 = arith.constant 0 : index
    %514 = vector.load %arg7[%c2_65, %c0_66] : memref<8x8xf32, #tpu.memory_space<vmem>>, vector<1x8xf32>
    %515 = vector.shape_cast %514 : vector<1x8xf32> to vector<1x8xf32>
    %516 = vector.broadcast %515 : vector<1x8xf32> to vector<8x8xf32>
    %517 = vector.extract_strided_slice %453 {offsets = [0, 0], sizes = [8, 1], strides = [1, 1]} : vector<8x8xf32> to vector<8x1xf32>
    %518 = vector.broadcast %517 : vector<8x1xf32> to vector<8x8xf32>
    %519 = vector.broadcast %463 : vector<1x8xf32> to vector<8x8xf32>
    %520 = arith.mulf %518, %519 : vector<8x8xf32>
    %521 = vector.extract_strided_slice %453 {offsets = [0, 1], sizes = [8, 1], strides = [1, 1]} : vector<8x8xf32> to vector<8x1xf32>
    %522 = vector.broadcast %521 : vector<8x1xf32> to vector<8x8xf32>
    %523 = vector.broadcast %467 : vector<1x8xf32> to vector<8x8xf32>
    %524 = arith.mulf %522, %523 : vector<8x8xf32>
    %525 = vector.extract_strided_slice %453 {offsets = [0, 2], sizes = [8, 1], strides = [1, 1]} : vector<8x8xf32> to vector<8x1xf32>
    %526 = vector.broadcast %525 : vector<8x1xf32> to vector<8x8xf32>
    %527 = vector.broadcast %471 : vector<1x8xf32> to vector<8x8xf32>
    %528 = arith.mulf %526, %527 : vector<8x8xf32>
    %529 = vector.extract_strided_slice %453 {offsets = [0, 3], sizes = [8, 1], strides = [1, 1]} : vector<8x8xf32> to vector<8x1xf32>
    %530 = vector.broadcast %529 : vector<8x1xf32> to vector<8x8xf32>
    %531 = vector.broadcast %475 : vector<1x8xf32> to vector<8x8xf32>
    %532 = arith.mulf %530, %531 : vector<8x8xf32>
    %533 = vector.extract_strided_slice %453 {offsets = [0, 4], sizes = [8, 1], strides = [1, 1]} : vector<8x8xf32> to vector<8x1xf32>
    %534 = vector.broadcast %533 : vector<8x1xf32> to vector<8x8xf32>
    %535 = vector.broadcast %479 : vector<1x8xf32> to vector<8x8xf32>
    %536 = arith.mulf %534, %535 : vector<8x8xf32>
    %537 = vector.extract_strided_slice %453 {offsets = [0, 5], sizes = [8, 1], strides = [1, 1]} : vector<8x8xf32> to vector<8x1xf32>
    %538 = vector.broadcast %537 : vector<8x1xf32> to vector<8x8xf32>
    %539 = vector.broadcast %483 : vector<1x8xf32> to vector<8x8xf32>
    %540 = arith.mulf %538, %539 : vector<8x8xf32>
    %541 = vector.extract_strided_slice %453 {offsets = [0, 6], sizes = [8, 1], strides = [1, 1]} : vector<8x8xf32> to vector<8x1xf32>
    %542 = vector.broadcast %541 : vector<8x1xf32> to vector<8x8xf32>
    %543 = vector.broadcast %487 : vector<1x8xf32> to vector<8x8xf32>
    %544 = arith.mulf %542, %543 : vector<8x8xf32>
    %545 = vector.extract_strided_slice %453 {offsets = [0, 7], sizes = [8, 1], strides = [1, 1]} : vector<8x8xf32> to vector<8x1xf32>
    %546 = vector.broadcast %545 : vector<8x1xf32> to vector<8x8xf32>
    %547 = vector.broadcast %491 : vector<1x8xf32> to vector<8x8xf32>
    %548 = arith.mulf %546, %547 : vector<8x8xf32>
    %549 = arith.addf %520, %524 : vector<8x8xf32>
    %550 = arith.addf %528, %532 : vector<8x8xf32>
    %551 = arith.addf %536, %540 : vector<8x8xf32>
    %552 = arith.addf %544, %548 : vector<8x8xf32>
    %553 = arith.addf %549, %550 : vector<8x8xf32>
    %554 = arith.addf %551, %552 : vector<8x8xf32>
    %555 = arith.addf %553, %554 : vector<8x8xf32>
    %556 = arith.addf %555, %510 : vector<8x8xf32>
    %557 = math.tanh %556 : vector<8x8xf32>
    %cst_67 = arith.constant dense<0.000000e+00> : vector<8xf32>
    %558 = vector.multi_reduction <add>, %557, %cst_67 [1] : vector<8x8xf32> to vector<8xf32>
    %559 = vector.shape_cast %558 : vector<8xf32> to vector<8x1xf32>
    %cst_68 = arith.constant 1.250000e-01 : f32
    %560 = vector.broadcast %cst_68 : f32 to vector<8x1xf32>
    %561 = arith.mulf %559, %560 : vector<8x1xf32>
    %562 = arith.mulf %557, %557 : vector<8x8xf32>
    %cst_69 = arith.constant dense<0.000000e+00> : vector<8xf32>
    %563 = vector.multi_reduction <add>, %562, %cst_69 [1] : vector<8x8xf32> to vector<8xf32>
    %564 = vector.shape_cast %563 : vector<8xf32> to vector<8x1xf32>
    %cst_70 = arith.constant 1.250000e-01 : f32
    %565 = vector.broadcast %cst_70 : f32 to vector<8x1xf32>
    %566 = arith.mulf %564, %565 : vector<8x1xf32>
    %567 = arith.mulf %561, %561 : vector<8x1xf32>
    %568 = arith.subf %566, %567 : vector<8x1xf32>
    %569 = vector.broadcast %561 : vector<8x1xf32> to vector<8x8xf32>
    %570 = arith.subf %557, %569 : vector<8x8xf32>
    %cst_71 = arith.constant 9.99999974E-6 : f32
    %571 = vector.broadcast %cst_71 : f32 to vector<8x1xf32>
    %572 = arith.addf %568, %571 : vector<8x1xf32>
    %573 = math.rsqrt %572 : vector<8x1xf32>
    %574 = vector.broadcast %573 : vector<8x1xf32> to vector<8x8xf32>
    %575 = arith.mulf %570, %574 : vector<8x8xf32>
    %576 = vector.extract_strided_slice %575 {offsets = [0, 0], sizes = [8, 1], strides = [1, 1]} : vector<8x8xf32> to vector<8x1xf32>
    %577 = vector.broadcast %576 : vector<8x1xf32> to vector<8x8xf32>
    %578 = vector.broadcast %492 : vector<1x8xf32> to vector<8x8xf32>
    %579 = arith.mulf %577, %578 : vector<8x8xf32>
    %580 = vector.extract_strided_slice %575 {offsets = [0, 1], sizes = [8, 1], strides = [1, 1]} : vector<8x8xf32> to vector<8x1xf32>
    %581 = vector.broadcast %580 : vector<8x1xf32> to vector<8x8xf32>
    %582 = vector.broadcast %493 : vector<1x8xf32> to vector<8x8xf32>
    %583 = arith.mulf %581, %582 : vector<8x8xf32>
    %584 = vector.extract_strided_slice %575 {offsets = [0, 2], sizes = [8, 1], strides = [1, 1]} : vector<8x8xf32> to vector<8x1xf32>
    %585 = vector.broadcast %584 : vector<8x1xf32> to vector<8x8xf32>
    %586 = vector.broadcast %494 : vector<1x8xf32> to vector<8x8xf32>
    %587 = arith.mulf %585, %586 : vector<8x8xf32>
    %588 = vector.extract_strided_slice %575 {offsets = [0, 3], sizes = [8, 1], strides = [1, 1]} : vector<8x8xf32> to vector<8x1xf32>
    %589 = vector.broadcast %588 : vector<8x1xf32> to vector<8x8xf32>
    %590 = vector.broadcast %495 : vector<1x8xf32> to vector<8x8xf32>
    %591 = arith.mulf %589, %590 : vector<8x8xf32>
    %592 = vector.extract_strided_slice %575 {offsets = [0, 4], sizes = [8, 1], strides = [1, 1]} : vector<8x8xf32> to vector<8x1xf32>
    %593 = vector.broadcast %592 : vector<8x1xf32> to vector<8x8xf32>
    %594 = vector.broadcast %496 : vector<1x8xf32> to vector<8x8xf32>
    %595 = arith.mulf %593, %594 : vector<8x8xf32>
    %596 = vector.extract_strided_slice %575 {offsets = [0, 5], sizes = [8, 1], strides = [1, 1]} : vector<8x8xf32> to vector<8x1xf32>
    %597 = vector.broadcast %596 : vector<8x1xf32> to vector<8x8xf32>
    %598 = vector.broadcast %497 : vector<1x8xf32> to vector<8x8xf32>
    %599 = arith.mulf %597, %598 : vector<8x8xf32>
    %600 = vector.extract_strided_slice %575 {offsets = [0, 6], sizes = [8, 1], strides = [1, 1]} : vector<8x8xf32> to vector<8x1xf32>
    %601 = vector.broadcast %600 : vector<8x1xf32> to vector<8x8xf32>
    %602 = vector.broadcast %498 : vector<1x8xf32> to vector<8x8xf32>
    %603 = arith.mulf %601, %602 : vector<8x8xf32>
    %604 = vector.extract_strided_slice %575 {offsets = [0, 7], sizes = [8, 1], strides = [1, 1]} : vector<8x8xf32> to vector<8x1xf32>
    %605 = vector.broadcast %604 : vector<8x1xf32> to vector<8x8xf32>
    %606 = vector.broadcast %499 : vector<1x8xf32> to vector<8x8xf32>
    %607 = arith.mulf %605, %606 : vector<8x8xf32>
    %608 = arith.addf %579, %583 : vector<8x8xf32>
    %609 = arith.addf %587, %591 : vector<8x8xf32>
    %610 = arith.addf %595, %599 : vector<8x8xf32>
    %611 = arith.addf %603, %607 : vector<8x8xf32>
    %612 = arith.addf %608, %609 : vector<8x8xf32>
    %613 = arith.addf %610, %611 : vector<8x8xf32>
    %614 = arith.addf %612, %613 : vector<8x8xf32>
    %615 = arith.addf %614, %513 : vector<8x8xf32>
    %616 = math.tanh %615 : vector<8x8xf32>
    %cst_72 = arith.constant dense<0.000000e+00> : vector<8xf32>
    %617 = vector.multi_reduction <add>, %616, %cst_72 [1] : vector<8x8xf32> to vector<8xf32>
    %618 = vector.shape_cast %617 : vector<8xf32> to vector<8x1xf32>
    %cst_73 = arith.constant 1.250000e-01 : f32
    %619 = vector.broadcast %cst_73 : f32 to vector<8x1xf32>
    %620 = arith.mulf %618, %619 : vector<8x1xf32>
    %621 = arith.mulf %616, %616 : vector<8x8xf32>
    %cst_74 = arith.constant dense<0.000000e+00> : vector<8xf32>
    %622 = vector.multi_reduction <add>, %621, %cst_74 [1] : vector<8x8xf32> to vector<8xf32>
    %623 = vector.shape_cast %622 : vector<8xf32> to vector<8x1xf32>
    %cst_75 = arith.constant 1.250000e-01 : f32
    %624 = vector.broadcast %cst_75 : f32 to vector<8x1xf32>
    %625 = arith.mulf %623, %624 : vector<8x1xf32>
    %626 = arith.mulf %620, %620 : vector<8x1xf32>
    %627 = arith.subf %625, %626 : vector<8x1xf32>
    %628 = vector.broadcast %620 : vector<8x1xf32> to vector<8x8xf32>
    %629 = arith.subf %616, %628 : vector<8x8xf32>
    %cst_76 = arith.constant 9.99999974E-6 : f32
    %630 = vector.broadcast %cst_76 : f32 to vector<8x1xf32>
    %631 = arith.addf %627, %630 : vector<8x1xf32>
    %632 = math.rsqrt %631 : vector<8x1xf32>
    %633 = vector.broadcast %632 : vector<8x1xf32> to vector<8x8xf32>
    %634 = arith.mulf %629, %633 : vector<8x8xf32>
    %635 = vector.extract_strided_slice %634 {offsets = [0, 0], sizes = [8, 1], strides = [1, 1]} : vector<8x8xf32> to vector<8x1xf32>
    %636 = vector.broadcast %635 : vector<8x1xf32> to vector<8x8xf32>
    %637 = vector.broadcast %500 : vector<1x8xf32> to vector<8x8xf32>
    %638 = arith.mulf %636, %637 : vector<8x8xf32>
    %639 = vector.extract_strided_slice %634 {offsets = [0, 1], sizes = [8, 1], strides = [1, 1]} : vector<8x8xf32> to vector<8x1xf32>
    %640 = vector.broadcast %639 : vector<8x1xf32> to vector<8x8xf32>
    %641 = vector.broadcast %501 : vector<1x8xf32> to vector<8x8xf32>
    %642 = arith.mulf %640, %641 : vector<8x8xf32>
    %643 = vector.extract_strided_slice %634 {offsets = [0, 2], sizes = [8, 1], strides = [1, 1]} : vector<8x8xf32> to vector<8x1xf32>
    %644 = vector.broadcast %643 : vector<8x1xf32> to vector<8x8xf32>
    %645 = vector.broadcast %502 : vector<1x8xf32> to vector<8x8xf32>
    %646 = arith.mulf %644, %645 : vector<8x8xf32>
    %647 = vector.extract_strided_slice %634 {offsets = [0, 3], sizes = [8, 1], strides = [1, 1]} : vector<8x8xf32> to vector<8x1xf32>
    %648 = vector.broadcast %647 : vector<8x1xf32> to vector<8x8xf32>
    %649 = vector.broadcast %503 : vector<1x8xf32> to vector<8x8xf32>
    %650 = arith.mulf %648, %649 : vector<8x8xf32>
    %651 = vector.extract_strided_slice %634 {offsets = [0, 4], sizes = [8, 1], strides = [1, 1]} : vector<8x8xf32> to vector<8x1xf32>
    %652 = vector.broadcast %651 : vector<8x1xf32> to vector<8x8xf32>
    %653 = vector.broadcast %504 : vector<1x8xf32> to vector<8x8xf32>
    %654 = arith.mulf %652, %653 : vector<8x8xf32>
    %655 = vector.extract_strided_slice %634 {offsets = [0, 5], sizes = [8, 1], strides = [1, 1]} : vector<8x8xf32> to vector<8x1xf32>
    %656 = vector.broadcast %655 : vector<8x1xf32> to vector<8x8xf32>
    %657 = vector.broadcast %505 : vector<1x8xf32> to vector<8x8xf32>
    %658 = arith.mulf %656, %657 : vector<8x8xf32>
    %659 = vector.extract_strided_slice %634 {offsets = [0, 6], sizes = [8, 1], strides = [1, 1]} : vector<8x8xf32> to vector<8x1xf32>
    %660 = vector.broadcast %659 : vector<8x1xf32> to vector<8x8xf32>
    %661 = vector.broadcast %506 : vector<1x8xf32> to vector<8x8xf32>
    %662 = arith.mulf %660, %661 : vector<8x8xf32>
    %663 = vector.extract_strided_slice %634 {offsets = [0, 7], sizes = [8, 1], strides = [1, 1]} : vector<8x8xf32> to vector<8x1xf32>
    %664 = vector.broadcast %663 : vector<8x1xf32> to vector<8x8xf32>
    %665 = vector.broadcast %507 : vector<1x8xf32> to vector<8x8xf32>
    %666 = arith.mulf %664, %665 : vector<8x8xf32>
    %667 = arith.addf %638, %642 : vector<8x8xf32>
    %668 = arith.addf %646, %650 : vector<8x8xf32>
    %669 = arith.addf %654, %658 : vector<8x8xf32>
    %670 = arith.addf %662, %666 : vector<8x8xf32>
    %671 = arith.addf %667, %668 : vector<8x8xf32>
    %672 = arith.addf %669, %670 : vector<8x8xf32>
    %673 = arith.addf %671, %672 : vector<8x8xf32>
    %674 = arith.addf %673, %516 : vector<8x8xf32>
    %675 = arith.negf %674 : vector<8x8xf32>
    %676 = math.exp %675 : vector<8x8xf32>
    %cst_77 = arith.constant 1.000000e+00 : f32
    %677 = vector.broadcast %cst_77 : f32 to vector<8x8xf32>
    %678 = arith.addf %677, %676 : vector<8x8xf32>
    %679 = arith.divf %677, %678 : vector<8x8xf32>
    %c3 = arith.constant 3 : index
    %c0_78 = arith.constant 0 : index
    %c0_79 = arith.constant 0 : index
    %680 = vector.load %arg2[%c3, %c0_78, %c0_79] : memref<8x8x8xf32, #tpu.memory_space<vmem>>, vector<1x8x8xf32>
    %681 = vector.shape_cast %680 : vector<1x8x8xf32> to vector<8x8xf32>
    %c3_80 = arith.constant 3 : index
    %c0_81 = arith.constant 0 : index
    %c0_82 = arith.constant 0 : index
    %682 = vector.load %arg4[%c3_80, %c0_81, %c0_82] : memref<8x8x8xf32, #tpu.memory_space<vmem>>, vector<1x8x8xf32>
    %683 = vector.shape_cast %682 : vector<1x8x8xf32> to vector<8x8xf32>
    %c3_83 = arith.constant 3 : index
    %c0_84 = arith.constant 0 : index
    %c0_85 = arith.constant 0 : index
    %684 = vector.load %arg6[%c3_83, %c0_84, %c0_85] : memref<8x8x8xf32, #tpu.memory_space<vmem>>, vector<1x8x8xf32>
    %685 = vector.shape_cast %684 : vector<1x8x8xf32> to vector<8x8xf32>
    %686 = vector.extract_strided_slice %1 {offsets = [3, 0], sizes = [1, 1], strides = [1, 1]} : vector<8x8xf32> to vector<1x1xf32>
    %687 = vector.extract_strided_slice %681 {offsets = [0, 0], sizes = [1, 8], strides = [1, 1]} : vector<8x8xf32> to vector<1x8xf32>
    %688 = vector.broadcast %686 : vector<1x1xf32> to vector<1x8xf32>
    %689 = arith.mulf %688, %687 : vector<1x8xf32>
    %690 = vector.extract_strided_slice %1 {offsets = [3, 1], sizes = [1, 1], strides = [1, 1]} : vector<8x8xf32> to vector<1x1xf32>
    %691 = vector.extract_strided_slice %681 {offsets = [1, 0], sizes = [1, 8], strides = [1, 1]} : vector<8x8xf32> to vector<1x8xf32>
    %692 = vector.broadcast %690 : vector<1x1xf32> to vector<1x8xf32>
    %693 = arith.mulf %692, %691 : vector<1x8xf32>
    %694 = vector.extract_strided_slice %1 {offsets = [3, 2], sizes = [1, 1], strides = [1, 1]} : vector<8x8xf32> to vector<1x1xf32>
    %695 = vector.extract_strided_slice %681 {offsets = [2, 0], sizes = [1, 8], strides = [1, 1]} : vector<8x8xf32> to vector<1x8xf32>
    %696 = vector.broadcast %694 : vector<1x1xf32> to vector<1x8xf32>
    %697 = arith.mulf %696, %695 : vector<1x8xf32>
    %698 = vector.extract_strided_slice %1 {offsets = [3, 3], sizes = [1, 1], strides = [1, 1]} : vector<8x8xf32> to vector<1x1xf32>
    %699 = vector.extract_strided_slice %681 {offsets = [3, 0], sizes = [1, 8], strides = [1, 1]} : vector<8x8xf32> to vector<1x8xf32>
    %700 = vector.broadcast %698 : vector<1x1xf32> to vector<1x8xf32>
    %701 = arith.mulf %700, %699 : vector<1x8xf32>
    %702 = vector.extract_strided_slice %1 {offsets = [3, 4], sizes = [1, 1], strides = [1, 1]} : vector<8x8xf32> to vector<1x1xf32>
    %703 = vector.extract_strided_slice %681 {offsets = [4, 0], sizes = [1, 8], strides = [1, 1]} : vector<8x8xf32> to vector<1x8xf32>
    %704 = vector.broadcast %702 : vector<1x1xf32> to vector<1x8xf32>
    %705 = arith.mulf %704, %703 : vector<1x8xf32>
    %706 = vector.extract_strided_slice %1 {offsets = [3, 5], sizes = [1, 1], strides = [1, 1]} : vector<8x8xf32> to vector<1x1xf32>
    %707 = vector.extract_strided_slice %681 {offsets = [5, 0], sizes = [1, 8], strides = [1, 1]} : vector<8x8xf32> to vector<1x8xf32>
    %708 = vector.broadcast %706 : vector<1x1xf32> to vector<1x8xf32>
    %709 = arith.mulf %708, %707 : vector<1x8xf32>
    %710 = vector.extract_strided_slice %1 {offsets = [3, 6], sizes = [1, 1], strides = [1, 1]} : vector<8x8xf32> to vector<1x1xf32>
    %711 = vector.extract_strided_slice %681 {offsets = [6, 0], sizes = [1, 8], strides = [1, 1]} : vector<8x8xf32> to vector<1x8xf32>
    %712 = vector.broadcast %710 : vector<1x1xf32> to vector<1x8xf32>
    %713 = arith.mulf %712, %711 : vector<1x8xf32>
    %714 = vector.extract_strided_slice %1 {offsets = [3, 7], sizes = [1, 1], strides = [1, 1]} : vector<8x8xf32> to vector<1x1xf32>
    %715 = vector.extract_strided_slice %681 {offsets = [7, 0], sizes = [1, 8], strides = [1, 1]} : vector<8x8xf32> to vector<1x8xf32>
    %716 = vector.broadcast %714 : vector<1x1xf32> to vector<1x8xf32>
    %717 = arith.mulf %716, %715 : vector<1x8xf32>
    %718 = vector.extract_strided_slice %683 {offsets = [0, 0], sizes = [1, 8], strides = [1, 1]} : vector<8x8xf32> to vector<1x8xf32>
    %719 = vector.extract_strided_slice %683 {offsets = [1, 0], sizes = [1, 8], strides = [1, 1]} : vector<8x8xf32> to vector<1x8xf32>
    %720 = vector.extract_strided_slice %683 {offsets = [2, 0], sizes = [1, 8], strides = [1, 1]} : vector<8x8xf32> to vector<1x8xf32>
    %721 = vector.extract_strided_slice %683 {offsets = [3, 0], sizes = [1, 8], strides = [1, 1]} : vector<8x8xf32> to vector<1x8xf32>
    %722 = vector.extract_strided_slice %683 {offsets = [4, 0], sizes = [1, 8], strides = [1, 1]} : vector<8x8xf32> to vector<1x8xf32>
    %723 = vector.extract_strided_slice %683 {offsets = [5, 0], sizes = [1, 8], strides = [1, 1]} : vector<8x8xf32> to vector<1x8xf32>
    %724 = vector.extract_strided_slice %683 {offsets = [6, 0], sizes = [1, 8], strides = [1, 1]} : vector<8x8xf32> to vector<1x8xf32>
    %725 = vector.extract_strided_slice %683 {offsets = [7, 0], sizes = [1, 8], strides = [1, 1]} : vector<8x8xf32> to vector<1x8xf32>
    %726 = vector.extract_strided_slice %685 {offsets = [0, 0], sizes = [1, 8], strides = [1, 1]} : vector<8x8xf32> to vector<1x8xf32>
    %727 = vector.extract_strided_slice %685 {offsets = [1, 0], sizes = [1, 8], strides = [1, 1]} : vector<8x8xf32> to vector<1x8xf32>
    %728 = vector.extract_strided_slice %685 {offsets = [2, 0], sizes = [1, 8], strides = [1, 1]} : vector<8x8xf32> to vector<1x8xf32>
    %729 = vector.extract_strided_slice %685 {offsets = [3, 0], sizes = [1, 8], strides = [1, 1]} : vector<8x8xf32> to vector<1x8xf32>
    %730 = vector.extract_strided_slice %685 {offsets = [4, 0], sizes = [1, 8], strides = [1, 1]} : vector<8x8xf32> to vector<1x8xf32>
    %731 = vector.extract_strided_slice %685 {offsets = [5, 0], sizes = [1, 8], strides = [1, 1]} : vector<8x8xf32> to vector<1x8xf32>
    %732 = vector.extract_strided_slice %685 {offsets = [6, 0], sizes = [1, 8], strides = [1, 1]} : vector<8x8xf32> to vector<1x8xf32>
    %733 = vector.extract_strided_slice %685 {offsets = [7, 0], sizes = [1, 8], strides = [1, 1]} : vector<8x8xf32> to vector<1x8xf32>
    %c3_86 = arith.constant 3 : index
    %c0_87 = arith.constant 0 : index
    %734 = vector.load %arg3[%c3_86, %c0_87] : memref<8x8xf32, #tpu.memory_space<vmem>>, vector<1x8xf32>
    %735 = vector.shape_cast %734 : vector<1x8xf32> to vector<1x8xf32>
    %736 = vector.broadcast %735 : vector<1x8xf32> to vector<8x8xf32>
    %c3_88 = arith.constant 3 : index
    %c0_89 = arith.constant 0 : index
    %737 = vector.load %arg5[%c3_88, %c0_89] : memref<8x8xf32, #tpu.memory_space<vmem>>, vector<1x8xf32>
    %738 = vector.shape_cast %737 : vector<1x8xf32> to vector<1x8xf32>
    %739 = vector.broadcast %738 : vector<1x8xf32> to vector<8x8xf32>
    %c3_90 = arith.constant 3 : index
    %c0_91 = arith.constant 0 : index
    %740 = vector.load %arg7[%c3_90, %c0_91] : memref<8x8xf32, #tpu.memory_space<vmem>>, vector<1x8xf32>
    %741 = vector.shape_cast %740 : vector<1x8xf32> to vector<1x8xf32>
    %742 = vector.broadcast %741 : vector<1x8xf32> to vector<8x8xf32>
    %743 = vector.extract_strided_slice %679 {offsets = [0, 0], sizes = [8, 1], strides = [1, 1]} : vector<8x8xf32> to vector<8x1xf32>
    %744 = vector.broadcast %743 : vector<8x1xf32> to vector<8x8xf32>
    %745 = vector.broadcast %689 : vector<1x8xf32> to vector<8x8xf32>
    %746 = arith.mulf %744, %745 : vector<8x8xf32>
    %747 = vector.extract_strided_slice %679 {offsets = [0, 1], sizes = [8, 1], strides = [1, 1]} : vector<8x8xf32> to vector<8x1xf32>
    %748 = vector.broadcast %747 : vector<8x1xf32> to vector<8x8xf32>
    %749 = vector.broadcast %693 : vector<1x8xf32> to vector<8x8xf32>
    %750 = arith.mulf %748, %749 : vector<8x8xf32>
    %751 = vector.extract_strided_slice %679 {offsets = [0, 2], sizes = [8, 1], strides = [1, 1]} : vector<8x8xf32> to vector<8x1xf32>
    %752 = vector.broadcast %751 : vector<8x1xf32> to vector<8x8xf32>
    %753 = vector.broadcast %697 : vector<1x8xf32> to vector<8x8xf32>
    %754 = arith.mulf %752, %753 : vector<8x8xf32>
    %755 = vector.extract_strided_slice %679 {offsets = [0, 3], sizes = [8, 1], strides = [1, 1]} : vector<8x8xf32> to vector<8x1xf32>
    %756 = vector.broadcast %755 : vector<8x1xf32> to vector<8x8xf32>
    %757 = vector.broadcast %701 : vector<1x8xf32> to vector<8x8xf32>
    %758 = arith.mulf %756, %757 : vector<8x8xf32>
    %759 = vector.extract_strided_slice %679 {offsets = [0, 4], sizes = [8, 1], strides = [1, 1]} : vector<8x8xf32> to vector<8x1xf32>
    %760 = vector.broadcast %759 : vector<8x1xf32> to vector<8x8xf32>
    %761 = vector.broadcast %705 : vector<1x8xf32> to vector<8x8xf32>
    %762 = arith.mulf %760, %761 : vector<8x8xf32>
    %763 = vector.extract_strided_slice %679 {offsets = [0, 5], sizes = [8, 1], strides = [1, 1]} : vector<8x8xf32> to vector<8x1xf32>
    %764 = vector.broadcast %763 : vector<8x1xf32> to vector<8x8xf32>
    %765 = vector.broadcast %709 : vector<1x8xf32> to vector<8x8xf32>
    %766 = arith.mulf %764, %765 : vector<8x8xf32>
    %767 = vector.extract_strided_slice %679 {offsets = [0, 6], sizes = [8, 1], strides = [1, 1]} : vector<8x8xf32> to vector<8x1xf32>
    %768 = vector.broadcast %767 : vector<8x1xf32> to vector<8x8xf32>
    %769 = vector.broadcast %713 : vector<1x8xf32> to vector<8x8xf32>
    %770 = arith.mulf %768, %769 : vector<8x8xf32>
    %771 = vector.extract_strided_slice %679 {offsets = [0, 7], sizes = [8, 1], strides = [1, 1]} : vector<8x8xf32> to vector<8x1xf32>
    %772 = vector.broadcast %771 : vector<8x1xf32> to vector<8x8xf32>
    %773 = vector.broadcast %717 : vector<1x8xf32> to vector<8x8xf32>
    %774 = arith.mulf %772, %773 : vector<8x8xf32>
    %775 = arith.addf %746, %750 : vector<8x8xf32>
    %776 = arith.addf %754, %758 : vector<8x8xf32>
    %777 = arith.addf %762, %766 : vector<8x8xf32>
    %778 = arith.addf %770, %774 : vector<8x8xf32>
    %779 = arith.addf %775, %776 : vector<8x8xf32>
    %780 = arith.addf %777, %778 : vector<8x8xf32>
    %781 = arith.addf %779, %780 : vector<8x8xf32>
    %782 = arith.addf %781, %736 : vector<8x8xf32>
    %783 = math.tanh %782 : vector<8x8xf32>
    %cst_92 = arith.constant dense<0.000000e+00> : vector<8xf32>
    %784 = vector.multi_reduction <add>, %783, %cst_92 [1] : vector<8x8xf32> to vector<8xf32>
    %785 = vector.shape_cast %784 : vector<8xf32> to vector<8x1xf32>
    %cst_93 = arith.constant 1.250000e-01 : f32
    %786 = vector.broadcast %cst_93 : f32 to vector<8x1xf32>
    %787 = arith.mulf %785, %786 : vector<8x1xf32>
    %788 = arith.mulf %783, %783 : vector<8x8xf32>
    %cst_94 = arith.constant dense<0.000000e+00> : vector<8xf32>
    %789 = vector.multi_reduction <add>, %788, %cst_94 [1] : vector<8x8xf32> to vector<8xf32>
    %790 = vector.shape_cast %789 : vector<8xf32> to vector<8x1xf32>
    %cst_95 = arith.constant 1.250000e-01 : f32
    %791 = vector.broadcast %cst_95 : f32 to vector<8x1xf32>
    %792 = arith.mulf %790, %791 : vector<8x1xf32>
    %793 = arith.mulf %787, %787 : vector<8x1xf32>
    %794 = arith.subf %792, %793 : vector<8x1xf32>
    %795 = vector.broadcast %787 : vector<8x1xf32> to vector<8x8xf32>
    %796 = arith.subf %783, %795 : vector<8x8xf32>
    %cst_96 = arith.constant 9.99999974E-6 : f32
    %797 = vector.broadcast %cst_96 : f32 to vector<8x1xf32>
    %798 = arith.addf %794, %797 : vector<8x1xf32>
    %799 = math.rsqrt %798 : vector<8x1xf32>
    %800 = vector.broadcast %799 : vector<8x1xf32> to vector<8x8xf32>
    %801 = arith.mulf %796, %800 : vector<8x8xf32>
    %802 = vector.extract_strided_slice %801 {offsets = [0, 0], sizes = [8, 1], strides = [1, 1]} : vector<8x8xf32> to vector<8x1xf32>
    %803 = vector.broadcast %802 : vector<8x1xf32> to vector<8x8xf32>
    %804 = vector.broadcast %718 : vector<1x8xf32> to vector<8x8xf32>
    %805 = arith.mulf %803, %804 : vector<8x8xf32>
    %806 = vector.extract_strided_slice %801 {offsets = [0, 1], sizes = [8, 1], strides = [1, 1]} : vector<8x8xf32> to vector<8x1xf32>
    %807 = vector.broadcast %806 : vector<8x1xf32> to vector<8x8xf32>
    %808 = vector.broadcast %719 : vector<1x8xf32> to vector<8x8xf32>
    %809 = arith.mulf %807, %808 : vector<8x8xf32>
    %810 = vector.extract_strided_slice %801 {offsets = [0, 2], sizes = [8, 1], strides = [1, 1]} : vector<8x8xf32> to vector<8x1xf32>
    %811 = vector.broadcast %810 : vector<8x1xf32> to vector<8x8xf32>
    %812 = vector.broadcast %720 : vector<1x8xf32> to vector<8x8xf32>
    %813 = arith.mulf %811, %812 : vector<8x8xf32>
    %814 = vector.extract_strided_slice %801 {offsets = [0, 3], sizes = [8, 1], strides = [1, 1]} : vector<8x8xf32> to vector<8x1xf32>
    %815 = vector.broadcast %814 : vector<8x1xf32> to vector<8x8xf32>
    %816 = vector.broadcast %721 : vector<1x8xf32> to vector<8x8xf32>
    %817 = arith.mulf %815, %816 : vector<8x8xf32>
    %818 = vector.extract_strided_slice %801 {offsets = [0, 4], sizes = [8, 1], strides = [1, 1]} : vector<8x8xf32> to vector<8x1xf32>
    %819 = vector.broadcast %818 : vector<8x1xf32> to vector<8x8xf32>
    %820 = vector.broadcast %722 : vector<1x8xf32> to vector<8x8xf32>
    %821 = arith.mulf %819, %820 : vector<8x8xf32>
    %822 = vector.extract_strided_slice %801 {offsets = [0, 5], sizes = [8, 1], strides = [1, 1]} : vector<8x8xf32> to vector<8x1xf32>
    %823 = vector.broadcast %822 : vector<8x1xf32> to vector<8x8xf32>
    %824 = vector.broadcast %723 : vector<1x8xf32> to vector<8x8xf32>
    %825 = arith.mulf %823, %824 : vector<8x8xf32>
    %826 = vector.extract_strided_slice %801 {offsets = [0, 6], sizes = [8, 1], strides = [1, 1]} : vector<8x8xf32> to vector<8x1xf32>
    %827 = vector.broadcast %826 : vector<8x1xf32> to vector<8x8xf32>
    %828 = vector.broadcast %724 : vector<1x8xf32> to vector<8x8xf32>
    %829 = arith.mulf %827, %828 : vector<8x8xf32>
    %830 = vector.extract_strided_slice %801 {offsets = [0, 7], sizes = [8, 1], strides = [1, 1]} : vector<8x8xf32> to vector<8x1xf32>
    %831 = vector.broadcast %830 : vector<8x1xf32> to vector<8x8xf32>
    %832 = vector.broadcast %725 : vector<1x8xf32> to vector<8x8xf32>
    %833 = arith.mulf %831, %832 : vector<8x8xf32>
    %834 = arith.addf %805, %809 : vector<8x8xf32>
    %835 = arith.addf %813, %817 : vector<8x8xf32>
    %836 = arith.addf %821, %825 : vector<8x8xf32>
    %837 = arith.addf %829, %833 : vector<8x8xf32>
    %838 = arith.addf %834, %835 : vector<8x8xf32>
    %839 = arith.addf %836, %837 : vector<8x8xf32>
    %840 = arith.addf %838, %839 : vector<8x8xf32>
    %841 = arith.addf %840, %739 : vector<8x8xf32>
    %842 = math.tanh %841 : vector<8x8xf32>
    %cst_97 = arith.constant dense<0.000000e+00> : vector<8xf32>
    %843 = vector.multi_reduction <add>, %842, %cst_97 [1] : vector<8x8xf32> to vector<8xf32>
    %844 = vector.shape_cast %843 : vector<8xf32> to vector<8x1xf32>
    %cst_98 = arith.constant 1.250000e-01 : f32
    %845 = vector.broadcast %cst_98 : f32 to vector<8x1xf32>
    %846 = arith.mulf %844, %845 : vector<8x1xf32>
    %847 = arith.mulf %842, %842 : vector<8x8xf32>
    %cst_99 = arith.constant dense<0.000000e+00> : vector<8xf32>
    %848 = vector.multi_reduction <add>, %847, %cst_99 [1] : vector<8x8xf32> to vector<8xf32>
    %849 = vector.shape_cast %848 : vector<8xf32> to vector<8x1xf32>
    %cst_100 = arith.constant 1.250000e-01 : f32
    %850 = vector.broadcast %cst_100 : f32 to vector<8x1xf32>
    %851 = arith.mulf %849, %850 : vector<8x1xf32>
    %852 = arith.mulf %846, %846 : vector<8x1xf32>
    %853 = arith.subf %851, %852 : vector<8x1xf32>
    %854 = vector.broadcast %846 : vector<8x1xf32> to vector<8x8xf32>
    %855 = arith.subf %842, %854 : vector<8x8xf32>
    %cst_101 = arith.constant 9.99999974E-6 : f32
    %856 = vector.broadcast %cst_101 : f32 to vector<8x1xf32>
    %857 = arith.addf %853, %856 : vector<8x1xf32>
    %858 = math.rsqrt %857 : vector<8x1xf32>
    %859 = vector.broadcast %858 : vector<8x1xf32> to vector<8x8xf32>
    %860 = arith.mulf %855, %859 : vector<8x8xf32>
    %861 = vector.extract_strided_slice %860 {offsets = [0, 0], sizes = [8, 1], strides = [1, 1]} : vector<8x8xf32> to vector<8x1xf32>
    %862 = vector.broadcast %861 : vector<8x1xf32> to vector<8x8xf32>
    %863 = vector.broadcast %726 : vector<1x8xf32> to vector<8x8xf32>
    %864 = arith.mulf %862, %863 : vector<8x8xf32>
    %865 = vector.extract_strided_slice %860 {offsets = [0, 1], sizes = [8, 1], strides = [1, 1]} : vector<8x8xf32> to vector<8x1xf32>
    %866 = vector.broadcast %865 : vector<8x1xf32> to vector<8x8xf32>
    %867 = vector.broadcast %727 : vector<1x8xf32> to vector<8x8xf32>
    %868 = arith.mulf %866, %867 : vector<8x8xf32>
    %869 = vector.extract_strided_slice %860 {offsets = [0, 2], sizes = [8, 1], strides = [1, 1]} : vector<8x8xf32> to vector<8x1xf32>
    %870 = vector.broadcast %869 : vector<8x1xf32> to vector<8x8xf32>
    %871 = vector.broadcast %728 : vector<1x8xf32> to vector<8x8xf32>
    %872 = arith.mulf %870, %871 : vector<8x8xf32>
    %873 = vector.extract_strided_slice %860 {offsets = [0, 3], sizes = [8, 1], strides = [1, 1]} : vector<8x8xf32> to vector<8x1xf32>
    %874 = vector.broadcast %873 : vector<8x1xf32> to vector<8x8xf32>
    %875 = vector.broadcast %729 : vector<1x8xf32> to vector<8x8xf32>
    %876 = arith.mulf %874, %875 : vector<8x8xf32>
    %877 = vector.extract_strided_slice %860 {offsets = [0, 4], sizes = [8, 1], strides = [1, 1]} : vector<8x8xf32> to vector<8x1xf32>
    %878 = vector.broadcast %877 : vector<8x1xf32> to vector<8x8xf32>
    %879 = vector.broadcast %730 : vector<1x8xf32> to vector<8x8xf32>
    %880 = arith.mulf %878, %879 : vector<8x8xf32>
    %881 = vector.extract_strided_slice %860 {offsets = [0, 5], sizes = [8, 1], strides = [1, 1]} : vector<8x8xf32> to vector<8x1xf32>
    %882 = vector.broadcast %881 : vector<8x1xf32> to vector<8x8xf32>
    %883 = vector.broadcast %731 : vector<1x8xf32> to vector<8x8xf32>
    %884 = arith.mulf %882, %883 : vector<8x8xf32>
    %885 = vector.extract_strided_slice %860 {offsets = [0, 6], sizes = [8, 1], strides = [1, 1]} : vector<8x8xf32> to vector<8x1xf32>
    %886 = vector.broadcast %885 : vector<8x1xf32> to vector<8x8xf32>
    %887 = vector.broadcast %732 : vector<1x8xf32> to vector<8x8xf32>
    %888 = arith.mulf %886, %887 : vector<8x8xf32>
    %889 = vector.extract_strided_slice %860 {offsets = [0, 7], sizes = [8, 1], strides = [1, 1]} : vector<8x8xf32> to vector<8x1xf32>
    %890 = vector.broadcast %889 : vector<8x1xf32> to vector<8x8xf32>
    %891 = vector.broadcast %733 : vector<1x8xf32> to vector<8x8xf32>
    %892 = arith.mulf %890, %891 : vector<8x8xf32>
    %893 = arith.addf %864, %868 : vector<8x8xf32>
    %894 = arith.addf %872, %876 : vector<8x8xf32>
    %895 = arith.addf %880, %884 : vector<8x8xf32>
    %896 = arith.addf %888, %892 : vector<8x8xf32>
    %897 = arith.addf %893, %894 : vector<8x8xf32>
    %898 = arith.addf %895, %896 : vector<8x8xf32>
    %899 = arith.addf %897, %898 : vector<8x8xf32>
    %900 = arith.addf %899, %742 : vector<8x8xf32>
    %901 = arith.negf %900 : vector<8x8xf32>
    %902 = math.exp %901 : vector<8x8xf32>
    %cst_102 = arith.constant 1.000000e+00 : f32
    %903 = vector.broadcast %cst_102 : f32 to vector<8x8xf32>
    %904 = arith.addf %903, %902 : vector<8x8xf32>
    %905 = arith.divf %903, %904 : vector<8x8xf32>
    %c4 = arith.constant 4 : index
    %c0_103 = arith.constant 0 : index
    %c0_104 = arith.constant 0 : index
    %906 = vector.load %arg2[%c4, %c0_103, %c0_104] : memref<8x8x8xf32, #tpu.memory_space<vmem>>, vector<1x8x8xf32>
    %907 = vector.shape_cast %906 : vector<1x8x8xf32> to vector<8x8xf32>
    %c4_105 = arith.constant 4 : index
    %c0_106 = arith.constant 0 : index
    %c0_107 = arith.constant 0 : index
    %908 = vector.load %arg4[%c4_105, %c0_106, %c0_107] : memref<8x8x8xf32, #tpu.memory_space<vmem>>, vector<1x8x8xf32>
    %909 = vector.shape_cast %908 : vector<1x8x8xf32> to vector<8x8xf32>
    %c4_108 = arith.constant 4 : index
    %c0_109 = arith.constant 0 : index
    %c0_110 = arith.constant 0 : index
    %910 = vector.load %arg6[%c4_108, %c0_109, %c0_110] : memref<8x8x8xf32, #tpu.memory_space<vmem>>, vector<1x8x8xf32>
    %911 = vector.shape_cast %910 : vector<1x8x8xf32> to vector<8x8xf32>
    %912 = vector.extract_strided_slice %1 {offsets = [4, 0], sizes = [1, 1], strides = [1, 1]} : vector<8x8xf32> to vector<1x1xf32>
    %913 = vector.extract_strided_slice %907 {offsets = [0, 0], sizes = [1, 8], strides = [1, 1]} : vector<8x8xf32> to vector<1x8xf32>
    %914 = vector.broadcast %912 : vector<1x1xf32> to vector<1x8xf32>
    %915 = arith.mulf %914, %913 : vector<1x8xf32>
    %916 = vector.extract_strided_slice %1 {offsets = [4, 1], sizes = [1, 1], strides = [1, 1]} : vector<8x8xf32> to vector<1x1xf32>
    %917 = vector.extract_strided_slice %907 {offsets = [1, 0], sizes = [1, 8], strides = [1, 1]} : vector<8x8xf32> to vector<1x8xf32>
    %918 = vector.broadcast %916 : vector<1x1xf32> to vector<1x8xf32>
    %919 = arith.mulf %918, %917 : vector<1x8xf32>
    %920 = vector.extract_strided_slice %1 {offsets = [4, 2], sizes = [1, 1], strides = [1, 1]} : vector<8x8xf32> to vector<1x1xf32>
    %921 = vector.extract_strided_slice %907 {offsets = [2, 0], sizes = [1, 8], strides = [1, 1]} : vector<8x8xf32> to vector<1x8xf32>
    %922 = vector.broadcast %920 : vector<1x1xf32> to vector<1x8xf32>
    %923 = arith.mulf %922, %921 : vector<1x8xf32>
    %924 = vector.extract_strided_slice %1 {offsets = [4, 3], sizes = [1, 1], strides = [1, 1]} : vector<8x8xf32> to vector<1x1xf32>
    %925 = vector.extract_strided_slice %907 {offsets = [3, 0], sizes = [1, 8], strides = [1, 1]} : vector<8x8xf32> to vector<1x8xf32>
    %926 = vector.broadcast %924 : vector<1x1xf32> to vector<1x8xf32>
    %927 = arith.mulf %926, %925 : vector<1x8xf32>
    %928 = vector.extract_strided_slice %1 {offsets = [4, 4], sizes = [1, 1], strides = [1, 1]} : vector<8x8xf32> to vector<1x1xf32>
    %929 = vector.extract_strided_slice %907 {offsets = [4, 0], sizes = [1, 8], strides = [1, 1]} : vector<8x8xf32> to vector<1x8xf32>
    %930 = vector.broadcast %928 : vector<1x1xf32> to vector<1x8xf32>
    %931 = arith.mulf %930, %929 : vector<1x8xf32>
    %932 = vector.extract_strided_slice %1 {offsets = [4, 5], sizes = [1, 1], strides = [1, 1]} : vector<8x8xf32> to vector<1x1xf32>
    %933 = vector.extract_strided_slice %907 {offsets = [5, 0], sizes = [1, 8], strides = [1, 1]} : vector<8x8xf32> to vector<1x8xf32>
    %934 = vector.broadcast %932 : vector<1x1xf32> to vector<1x8xf32>
    %935 = arith.mulf %934, %933 : vector<1x8xf32>
    %936 = vector.extract_strided_slice %1 {offsets = [4, 6], sizes = [1, 1], strides = [1, 1]} : vector<8x8xf32> to vector<1x1xf32>
    %937 = vector.extract_strided_slice %907 {offsets = [6, 0], sizes = [1, 8], strides = [1, 1]} : vector<8x8xf32> to vector<1x8xf32>
    %938 = vector.broadcast %936 : vector<1x1xf32> to vector<1x8xf32>
    %939 = arith.mulf %938, %937 : vector<1x8xf32>
    %940 = vector.extract_strided_slice %1 {offsets = [4, 7], sizes = [1, 1], strides = [1, 1]} : vector<8x8xf32> to vector<1x1xf32>
    %941 = vector.extract_strided_slice %907 {offsets = [7, 0], sizes = [1, 8], strides = [1, 1]} : vector<8x8xf32> to vector<1x8xf32>
    %942 = vector.broadcast %940 : vector<1x1xf32> to vector<1x8xf32>
    %943 = arith.mulf %942, %941 : vector<1x8xf32>
    %944 = vector.extract_strided_slice %909 {offsets = [0, 0], sizes = [1, 8], strides = [1, 1]} : vector<8x8xf32> to vector<1x8xf32>
    %945 = vector.extract_strided_slice %909 {offsets = [1, 0], sizes = [1, 8], strides = [1, 1]} : vector<8x8xf32> to vector<1x8xf32>
    %946 = vector.extract_strided_slice %909 {offsets = [2, 0], sizes = [1, 8], strides = [1, 1]} : vector<8x8xf32> to vector<1x8xf32>
    %947 = vector.extract_strided_slice %909 {offsets = [3, 0], sizes = [1, 8], strides = [1, 1]} : vector<8x8xf32> to vector<1x8xf32>
    %948 = vector.extract_strided_slice %909 {offsets = [4, 0], sizes = [1, 8], strides = [1, 1]} : vector<8x8xf32> to vector<1x8xf32>
    %949 = vector.extract_strided_slice %909 {offsets = [5, 0], sizes = [1, 8], strides = [1, 1]} : vector<8x8xf32> to vector<1x8xf32>
    %950 = vector.extract_strided_slice %909 {offsets = [6, 0], sizes = [1, 8], strides = [1, 1]} : vector<8x8xf32> to vector<1x8xf32>
    %951 = vector.extract_strided_slice %909 {offsets = [7, 0], sizes = [1, 8], strides = [1, 1]} : vector<8x8xf32> to vector<1x8xf32>
    %952 = vector.extract_strided_slice %911 {offsets = [0, 0], sizes = [1, 8], strides = [1, 1]} : vector<8x8xf32> to vector<1x8xf32>
    %953 = vector.extract_strided_slice %911 {offsets = [1, 0], sizes = [1, 8], strides = [1, 1]} : vector<8x8xf32> to vector<1x8xf32>
    %954 = vector.extract_strided_slice %911 {offsets = [2, 0], sizes = [1, 8], strides = [1, 1]} : vector<8x8xf32> to vector<1x8xf32>
    %955 = vector.extract_strided_slice %911 {offsets = [3, 0], sizes = [1, 8], strides = [1, 1]} : vector<8x8xf32> to vector<1x8xf32>
    %956 = vector.extract_strided_slice %911 {offsets = [4, 0], sizes = [1, 8], strides = [1, 1]} : vector<8x8xf32> to vector<1x8xf32>
    %957 = vector.extract_strided_slice %911 {offsets = [5, 0], sizes = [1, 8], strides = [1, 1]} : vector<8x8xf32> to vector<1x8xf32>
    %958 = vector.extract_strided_slice %911 {offsets = [6, 0], sizes = [1, 8], strides = [1, 1]} : vector<8x8xf32> to vector<1x8xf32>
    %959 = vector.extract_strided_slice %911 {offsets = [7, 0], sizes = [1, 8], strides = [1, 1]} : vector<8x8xf32> to vector<1x8xf32>
    %c4_111 = arith.constant 4 : index
    %c0_112 = arith.constant 0 : index
    %960 = vector.load %arg3[%c4_111, %c0_112] : memref<8x8xf32, #tpu.memory_space<vmem>>, vector<1x8xf32>
    %961 = vector.shape_cast %960 : vector<1x8xf32> to vector<1x8xf32>
    %962 = vector.broadcast %961 : vector<1x8xf32> to vector<8x8xf32>
    %c4_113 = arith.constant 4 : index
    %c0_114 = arith.constant 0 : index
    %963 = vector.load %arg5[%c4_113, %c0_114] : memref<8x8xf32, #tpu.memory_space<vmem>>, vector<1x8xf32>
    %964 = vector.shape_cast %963 : vector<1x8xf32> to vector<1x8xf32>
    %965 = vector.broadcast %964 : vector<1x8xf32> to vector<8x8xf32>
    %c4_115 = arith.constant 4 : index
    %c0_116 = arith.constant 0 : index
    %966 = vector.load %arg7[%c4_115, %c0_116] : memref<8x8xf32, #tpu.memory_space<vmem>>, vector<1x8xf32>
    %967 = vector.shape_cast %966 : vector<1x8xf32> to vector<1x8xf32>
    %968 = vector.broadcast %967 : vector<1x8xf32> to vector<8x8xf32>
    %969 = vector.extract_strided_slice %905 {offsets = [0, 0], sizes = [8, 1], strides = [1, 1]} : vector<8x8xf32> to vector<8x1xf32>
    %970 = vector.broadcast %969 : vector<8x1xf32> to vector<8x8xf32>
    %971 = vector.broadcast %915 : vector<1x8xf32> to vector<8x8xf32>
    %972 = arith.mulf %970, %971 : vector<8x8xf32>
    %973 = vector.extract_strided_slice %905 {offsets = [0, 1], sizes = [8, 1], strides = [1, 1]} : vector<8x8xf32> to vector<8x1xf32>
    %974 = vector.broadcast %973 : vector<8x1xf32> to vector<8x8xf32>
    %975 = vector.broadcast %919 : vector<1x8xf32> to vector<8x8xf32>
    %976 = arith.mulf %974, %975 : vector<8x8xf32>
    %977 = vector.extract_strided_slice %905 {offsets = [0, 2], sizes = [8, 1], strides = [1, 1]} : vector<8x8xf32> to vector<8x1xf32>
    %978 = vector.broadcast %977 : vector<8x1xf32> to vector<8x8xf32>
    %979 = vector.broadcast %923 : vector<1x8xf32> to vector<8x8xf32>
    %980 = arith.mulf %978, %979 : vector<8x8xf32>
    %981 = vector.extract_strided_slice %905 {offsets = [0, 3], sizes = [8, 1], strides = [1, 1]} : vector<8x8xf32> to vector<8x1xf32>
    %982 = vector.broadcast %981 : vector<8x1xf32> to vector<8x8xf32>
    %983 = vector.broadcast %927 : vector<1x8xf32> to vector<8x8xf32>
    %984 = arith.mulf %982, %983 : vector<8x8xf32>
    %985 = vector.extract_strided_slice %905 {offsets = [0, 4], sizes = [8, 1], strides = [1, 1]} : vector<8x8xf32> to vector<8x1xf32>
    %986 = vector.broadcast %985 : vector<8x1xf32> to vector<8x8xf32>
    %987 = vector.broadcast %931 : vector<1x8xf32> to vector<8x8xf32>
    %988 = arith.mulf %986, %987 : vector<8x8xf32>
    %989 = vector.extract_strided_slice %905 {offsets = [0, 5], sizes = [8, 1], strides = [1, 1]} : vector<8x8xf32> to vector<8x1xf32>
    %990 = vector.broadcast %989 : vector<8x1xf32> to vector<8x8xf32>
    %991 = vector.broadcast %935 : vector<1x8xf32> to vector<8x8xf32>
    %992 = arith.mulf %990, %991 : vector<8x8xf32>
    %993 = vector.extract_strided_slice %905 {offsets = [0, 6], sizes = [8, 1], strides = [1, 1]} : vector<8x8xf32> to vector<8x1xf32>
    %994 = vector.broadcast %993 : vector<8x1xf32> to vector<8x8xf32>
    %995 = vector.broadcast %939 : vector<1x8xf32> to vector<8x8xf32>
    %996 = arith.mulf %994, %995 : vector<8x8xf32>
    %997 = vector.extract_strided_slice %905 {offsets = [0, 7], sizes = [8, 1], strides = [1, 1]} : vector<8x8xf32> to vector<8x1xf32>
    %998 = vector.broadcast %997 : vector<8x1xf32> to vector<8x8xf32>
    %999 = vector.broadcast %943 : vector<1x8xf32> to vector<8x8xf32>
    %1000 = arith.mulf %998, %999 : vector<8x8xf32>
    %1001 = arith.addf %972, %976 : vector<8x8xf32>
    %1002 = arith.addf %980, %984 : vector<8x8xf32>
    %1003 = arith.addf %988, %992 : vector<8x8xf32>
    %1004 = arith.addf %996, %1000 : vector<8x8xf32>
    %1005 = arith.addf %1001, %1002 : vector<8x8xf32>
    %1006 = arith.addf %1003, %1004 : vector<8x8xf32>
    %1007 = arith.addf %1005, %1006 : vector<8x8xf32>
    %1008 = arith.addf %1007, %962 : vector<8x8xf32>
    %1009 = math.tanh %1008 : vector<8x8xf32>
    %cst_117 = arith.constant dense<0.000000e+00> : vector<8xf32>
    %1010 = vector.multi_reduction <add>, %1009, %cst_117 [1] : vector<8x8xf32> to vector<8xf32>
    %1011 = vector.shape_cast %1010 : vector<8xf32> to vector<8x1xf32>
    %cst_118 = arith.constant 1.250000e-01 : f32
    %1012 = vector.broadcast %cst_118 : f32 to vector<8x1xf32>
    %1013 = arith.mulf %1011, %1012 : vector<8x1xf32>
    %1014 = arith.mulf %1009, %1009 : vector<8x8xf32>
    %cst_119 = arith.constant dense<0.000000e+00> : vector<8xf32>
    %1015 = vector.multi_reduction <add>, %1014, %cst_119 [1] : vector<8x8xf32> to vector<8xf32>
    %1016 = vector.shape_cast %1015 : vector<8xf32> to vector<8x1xf32>
    %cst_120 = arith.constant 1.250000e-01 : f32
    %1017 = vector.broadcast %cst_120 : f32 to vector<8x1xf32>
    %1018 = arith.mulf %1016, %1017 : vector<8x1xf32>
    %1019 = arith.mulf %1013, %1013 : vector<8x1xf32>
    %1020 = arith.subf %1018, %1019 : vector<8x1xf32>
    %1021 = vector.broadcast %1013 : vector<8x1xf32> to vector<8x8xf32>
    %1022 = arith.subf %1009, %1021 : vector<8x8xf32>
    %cst_121 = arith.constant 9.99999974E-6 : f32
    %1023 = vector.broadcast %cst_121 : f32 to vector<8x1xf32>
    %1024 = arith.addf %1020, %1023 : vector<8x1xf32>
    %1025 = math.rsqrt %1024 : vector<8x1xf32>
    %1026 = vector.broadcast %1025 : vector<8x1xf32> to vector<8x8xf32>
    %1027 = arith.mulf %1022, %1026 : vector<8x8xf32>
    %1028 = vector.extract_strided_slice %1027 {offsets = [0, 0], sizes = [8, 1], strides = [1, 1]} : vector<8x8xf32> to vector<8x1xf32>
    %1029 = vector.broadcast %1028 : vector<8x1xf32> to vector<8x8xf32>
    %1030 = vector.broadcast %944 : vector<1x8xf32> to vector<8x8xf32>
    %1031 = arith.mulf %1029, %1030 : vector<8x8xf32>
    %1032 = vector.extract_strided_slice %1027 {offsets = [0, 1], sizes = [8, 1], strides = [1, 1]} : vector<8x8xf32> to vector<8x1xf32>
    %1033 = vector.broadcast %1032 : vector<8x1xf32> to vector<8x8xf32>
    %1034 = vector.broadcast %945 : vector<1x8xf32> to vector<8x8xf32>
    %1035 = arith.mulf %1033, %1034 : vector<8x8xf32>
    %1036 = vector.extract_strided_slice %1027 {offsets = [0, 2], sizes = [8, 1], strides = [1, 1]} : vector<8x8xf32> to vector<8x1xf32>
    %1037 = vector.broadcast %1036 : vector<8x1xf32> to vector<8x8xf32>
    %1038 = vector.broadcast %946 : vector<1x8xf32> to vector<8x8xf32>
    %1039 = arith.mulf %1037, %1038 : vector<8x8xf32>
    %1040 = vector.extract_strided_slice %1027 {offsets = [0, 3], sizes = [8, 1], strides = [1, 1]} : vector<8x8xf32> to vector<8x1xf32>
    %1041 = vector.broadcast %1040 : vector<8x1xf32> to vector<8x8xf32>
    %1042 = vector.broadcast %947 : vector<1x8xf32> to vector<8x8xf32>
    %1043 = arith.mulf %1041, %1042 : vector<8x8xf32>
    %1044 = vector.extract_strided_slice %1027 {offsets = [0, 4], sizes = [8, 1], strides = [1, 1]} : vector<8x8xf32> to vector<8x1xf32>
    %1045 = vector.broadcast %1044 : vector<8x1xf32> to vector<8x8xf32>
    %1046 = vector.broadcast %948 : vector<1x8xf32> to vector<8x8xf32>
    %1047 = arith.mulf %1045, %1046 : vector<8x8xf32>
    %1048 = vector.extract_strided_slice %1027 {offsets = [0, 5], sizes = [8, 1], strides = [1, 1]} : vector<8x8xf32> to vector<8x1xf32>
    %1049 = vector.broadcast %1048 : vector<8x1xf32> to vector<8x8xf32>
    %1050 = vector.broadcast %949 : vector<1x8xf32> to vector<8x8xf32>
    %1051 = arith.mulf %1049, %1050 : vector<8x8xf32>
    %1052 = vector.extract_strided_slice %1027 {offsets = [0, 6], sizes = [8, 1], strides = [1, 1]} : vector<8x8xf32> to vector<8x1xf32>
    %1053 = vector.broadcast %1052 : vector<8x1xf32> to vector<8x8xf32>
    %1054 = vector.broadcast %950 : vector<1x8xf32> to vector<8x8xf32>
    %1055 = arith.mulf %1053, %1054 : vector<8x8xf32>
    %1056 = vector.extract_strided_slice %1027 {offsets = [0, 7], sizes = [8, 1], strides = [1, 1]} : vector<8x8xf32> to vector<8x1xf32>
    %1057 = vector.broadcast %1056 : vector<8x1xf32> to vector<8x8xf32>
    %1058 = vector.broadcast %951 : vector<1x8xf32> to vector<8x8xf32>
    %1059 = arith.mulf %1057, %1058 : vector<8x8xf32>
    %1060 = arith.addf %1031, %1035 : vector<8x8xf32>
    %1061 = arith.addf %1039, %1043 : vector<8x8xf32>
    %1062 = arith.addf %1047, %1051 : vector<8x8xf32>
    %1063 = arith.addf %1055, %1059 : vector<8x8xf32>
    %1064 = arith.addf %1060, %1061 : vector<8x8xf32>
    %1065 = arith.addf %1062, %1063 : vector<8x8xf32>
    %1066 = arith.addf %1064, %1065 : vector<8x8xf32>
    %1067 = arith.addf %1066, %965 : vector<8x8xf32>
    %1068 = math.tanh %1067 : vector<8x8xf32>
    %cst_122 = arith.constant dense<0.000000e+00> : vector<8xf32>
    %1069 = vector.multi_reduction <add>, %1068, %cst_122 [1] : vector<8x8xf32> to vector<8xf32>
    %1070 = vector.shape_cast %1069 : vector<8xf32> to vector<8x1xf32>
    %cst_123 = arith.constant 1.250000e-01 : f32
    %1071 = vector.broadcast %cst_123 : f32 to vector<8x1xf32>
    %1072 = arith.mulf %1070, %1071 : vector<8x1xf32>
    %1073 = arith.mulf %1068, %1068 : vector<8x8xf32>
    %cst_124 = arith.constant dense<0.000000e+00> : vector<8xf32>
    %1074 = vector.multi_reduction <add>, %1073, %cst_124 [1] : vector<8x8xf32> to vector<8xf32>
    %1075 = vector.shape_cast %1074 : vector<8xf32> to vector<8x1xf32>
    %cst_125 = arith.constant 1.250000e-01 : f32
    %1076 = vector.broadcast %cst_125 : f32 to vector<8x1xf32>
    %1077 = arith.mulf %1075, %1076 : vector<8x1xf32>
    %1078 = arith.mulf %1072, %1072 : vector<8x1xf32>
    %1079 = arith.subf %1077, %1078 : vector<8x1xf32>
    %1080 = vector.broadcast %1072 : vector<8x1xf32> to vector<8x8xf32>
    %1081 = arith.subf %1068, %1080 : vector<8x8xf32>
    %cst_126 = arith.constant 9.99999974E-6 : f32
    %1082 = vector.broadcast %cst_126 : f32 to vector<8x1xf32>
    %1083 = arith.addf %1079, %1082 : vector<8x1xf32>
    %1084 = math.rsqrt %1083 : vector<8x1xf32>
    %1085 = vector.broadcast %1084 : vector<8x1xf32> to vector<8x8xf32>
    %1086 = arith.mulf %1081, %1085 : vector<8x8xf32>
    %1087 = vector.extract_strided_slice %1086 {offsets = [0, 0], sizes = [8, 1], strides = [1, 1]} : vector<8x8xf32> to vector<8x1xf32>
    %1088 = vector.broadcast %1087 : vector<8x1xf32> to vector<8x8xf32>
    %1089 = vector.broadcast %952 : vector<1x8xf32> to vector<8x8xf32>
    %1090 = arith.mulf %1088, %1089 : vector<8x8xf32>
    %1091 = vector.extract_strided_slice %1086 {offsets = [0, 1], sizes = [8, 1], strides = [1, 1]} : vector<8x8xf32> to vector<8x1xf32>
    %1092 = vector.broadcast %1091 : vector<8x1xf32> to vector<8x8xf32>
    %1093 = vector.broadcast %953 : vector<1x8xf32> to vector<8x8xf32>
    %1094 = arith.mulf %1092, %1093 : vector<8x8xf32>
    %1095 = vector.extract_strided_slice %1086 {offsets = [0, 2], sizes = [8, 1], strides = [1, 1]} : vector<8x8xf32> to vector<8x1xf32>
    %1096 = vector.broadcast %1095 : vector<8x1xf32> to vector<8x8xf32>
    %1097 = vector.broadcast %954 : vector<1x8xf32> to vector<8x8xf32>
    %1098 = arith.mulf %1096, %1097 : vector<8x8xf32>
    %1099 = vector.extract_strided_slice %1086 {offsets = [0, 3], sizes = [8, 1], strides = [1, 1]} : vector<8x8xf32> to vector<8x1xf32>
    %1100 = vector.broadcast %1099 : vector<8x1xf32> to vector<8x8xf32>
    %1101 = vector.broadcast %955 : vector<1x8xf32> to vector<8x8xf32>
    %1102 = arith.mulf %1100, %1101 : vector<8x8xf32>
    %1103 = vector.extract_strided_slice %1086 {offsets = [0, 4], sizes = [8, 1], strides = [1, 1]} : vector<8x8xf32> to vector<8x1xf32>
    %1104 = vector.broadcast %1103 : vector<8x1xf32> to vector<8x8xf32>
    %1105 = vector.broadcast %956 : vector<1x8xf32> to vector<8x8xf32>
    %1106 = arith.mulf %1104, %1105 : vector<8x8xf32>
    %1107 = vector.extract_strided_slice %1086 {offsets = [0, 5], sizes = [8, 1], strides = [1, 1]} : vector<8x8xf32> to vector<8x1xf32>
    %1108 = vector.broadcast %1107 : vector<8x1xf32> to vector<8x8xf32>
    %1109 = vector.broadcast %957 : vector<1x8xf32> to vector<8x8xf32>
    %1110 = arith.mulf %1108, %1109 : vector<8x8xf32>
    %1111 = vector.extract_strided_slice %1086 {offsets = [0, 6], sizes = [8, 1], strides = [1, 1]} : vector<8x8xf32> to vector<8x1xf32>
    %1112 = vector.broadcast %1111 : vector<8x1xf32> to vector<8x8xf32>
    %1113 = vector.broadcast %958 : vector<1x8xf32> to vector<8x8xf32>
    %1114 = arith.mulf %1112, %1113 : vector<8x8xf32>
    %1115 = vector.extract_strided_slice %1086 {offsets = [0, 7], sizes = [8, 1], strides = [1, 1]} : vector<8x8xf32> to vector<8x1xf32>
    %1116 = vector.broadcast %1115 : vector<8x1xf32> to vector<8x8xf32>
    %1117 = vector.broadcast %959 : vector<1x8xf32> to vector<8x8xf32>
    %1118 = arith.mulf %1116, %1117 : vector<8x8xf32>
    %1119 = arith.addf %1090, %1094 : vector<8x8xf32>
    %1120 = arith.addf %1098, %1102 : vector<8x8xf32>
    %1121 = arith.addf %1106, %1110 : vector<8x8xf32>
    %1122 = arith.addf %1114, %1118 : vector<8x8xf32>
    %1123 = arith.addf %1119, %1120 : vector<8x8xf32>
    %1124 = arith.addf %1121, %1122 : vector<8x8xf32>
    %1125 = arith.addf %1123, %1124 : vector<8x8xf32>
    %1126 = arith.addf %1125, %968 : vector<8x8xf32>
    %1127 = arith.negf %1126 : vector<8x8xf32>
    %1128 = math.exp %1127 : vector<8x8xf32>
    %cst_127 = arith.constant 1.000000e+00 : f32
    %1129 = vector.broadcast %cst_127 : f32 to vector<8x8xf32>
    %1130 = arith.addf %1129, %1128 : vector<8x8xf32>
    %1131 = arith.divf %1129, %1130 : vector<8x8xf32>
    %c5 = arith.constant 5 : index
    %c0_128 = arith.constant 0 : index
    %c0_129 = arith.constant 0 : index
    %1132 = vector.load %arg2[%c5, %c0_128, %c0_129] : memref<8x8x8xf32, #tpu.memory_space<vmem>>, vector<1x8x8xf32>
    %1133 = vector.shape_cast %1132 : vector<1x8x8xf32> to vector<8x8xf32>
    %c5_130 = arith.constant 5 : index
    %c0_131 = arith.constant 0 : index
    %c0_132 = arith.constant 0 : index
    %1134 = vector.load %arg4[%c5_130, %c0_131, %c0_132] : memref<8x8x8xf32, #tpu.memory_space<vmem>>, vector<1x8x8xf32>
    %1135 = vector.shape_cast %1134 : vector<1x8x8xf32> to vector<8x8xf32>
    %c5_133 = arith.constant 5 : index
    %c0_134 = arith.constant 0 : index
    %c0_135 = arith.constant 0 : index
    %1136 = vector.load %arg6[%c5_133, %c0_134, %c0_135] : memref<8x8x8xf32, #tpu.memory_space<vmem>>, vector<1x8x8xf32>
    %1137 = vector.shape_cast %1136 : vector<1x8x8xf32> to vector<8x8xf32>
    %1138 = vector.extract_strided_slice %1 {offsets = [5, 0], sizes = [1, 1], strides = [1, 1]} : vector<8x8xf32> to vector<1x1xf32>
    %1139 = vector.extract_strided_slice %1133 {offsets = [0, 0], sizes = [1, 8], strides = [1, 1]} : vector<8x8xf32> to vector<1x8xf32>
    %1140 = vector.broadcast %1138 : vector<1x1xf32> to vector<1x8xf32>
    %1141 = arith.mulf %1140, %1139 : vector<1x8xf32>
    %1142 = vector.extract_strided_slice %1 {offsets = [5, 1], sizes = [1, 1], strides = [1, 1]} : vector<8x8xf32> to vector<1x1xf32>
    %1143 = vector.extract_strided_slice %1133 {offsets = [1, 0], sizes = [1, 8], strides = [1, 1]} : vector<8x8xf32> to vector<1x8xf32>
    %1144 = vector.broadcast %1142 : vector<1x1xf32> to vector<1x8xf32>
    %1145 = arith.mulf %1144, %1143 : vector<1x8xf32>
    %1146 = vector.extract_strided_slice %1 {offsets = [5, 2], sizes = [1, 1], strides = [1, 1]} : vector<8x8xf32> to vector<1x1xf32>
    %1147 = vector.extract_strided_slice %1133 {offsets = [2, 0], sizes = [1, 8], strides = [1, 1]} : vector<8x8xf32> to vector<1x8xf32>
    %1148 = vector.broadcast %1146 : vector<1x1xf32> to vector<1x8xf32>
    %1149 = arith.mulf %1148, %1147 : vector<1x8xf32>
    %1150 = vector.extract_strided_slice %1 {offsets = [5, 3], sizes = [1, 1], strides = [1, 1]} : vector<8x8xf32> to vector<1x1xf32>
    %1151 = vector.extract_strided_slice %1133 {offsets = [3, 0], sizes = [1, 8], strides = [1, 1]} : vector<8x8xf32> to vector<1x8xf32>
    %1152 = vector.broadcast %1150 : vector<1x1xf32> to vector<1x8xf32>
    %1153 = arith.mulf %1152, %1151 : vector<1x8xf32>
    %1154 = vector.extract_strided_slice %1 {offsets = [5, 4], sizes = [1, 1], strides = [1, 1]} : vector<8x8xf32> to vector<1x1xf32>
    %1155 = vector.extract_strided_slice %1133 {offsets = [4, 0], sizes = [1, 8], strides = [1, 1]} : vector<8x8xf32> to vector<1x8xf32>
    %1156 = vector.broadcast %1154 : vector<1x1xf32> to vector<1x8xf32>
    %1157 = arith.mulf %1156, %1155 : vector<1x8xf32>
    %1158 = vector.extract_strided_slice %1 {offsets = [5, 5], sizes = [1, 1], strides = [1, 1]} : vector<8x8xf32> to vector<1x1xf32>
    %1159 = vector.extract_strided_slice %1133 {offsets = [5, 0], sizes = [1, 8], strides = [1, 1]} : vector<8x8xf32> to vector<1x8xf32>
    %1160 = vector.broadcast %1158 : vector<1x1xf32> to vector<1x8xf32>
    %1161 = arith.mulf %1160, %1159 : vector<1x8xf32>
    %1162 = vector.extract_strided_slice %1 {offsets = [5, 6], sizes = [1, 1], strides = [1, 1]} : vector<8x8xf32> to vector<1x1xf32>
    %1163 = vector.extract_strided_slice %1133 {offsets = [6, 0], sizes = [1, 8], strides = [1, 1]} : vector<8x8xf32> to vector<1x8xf32>
    %1164 = vector.broadcast %1162 : vector<1x1xf32> to vector<1x8xf32>
    %1165 = arith.mulf %1164, %1163 : vector<1x8xf32>
    %1166 = vector.extract_strided_slice %1 {offsets = [5, 7], sizes = [1, 1], strides = [1, 1]} : vector<8x8xf32> to vector<1x1xf32>
    %1167 = vector.extract_strided_slice %1133 {offsets = [7, 0], sizes = [1, 8], strides = [1, 1]} : vector<8x8xf32> to vector<1x8xf32>
    %1168 = vector.broadcast %1166 : vector<1x1xf32> to vector<1x8xf32>
    %1169 = arith.mulf %1168, %1167 : vector<1x8xf32>
    %1170 = vector.extract_strided_slice %1135 {offsets = [0, 0], sizes = [1, 8], strides = [1, 1]} : vector<8x8xf32> to vector<1x8xf32>
    %1171 = vector.extract_strided_slice %1135 {offsets = [1, 0], sizes = [1, 8], strides = [1, 1]} : vector<8x8xf32> to vector<1x8xf32>
    %1172 = vector.extract_strided_slice %1135 {offsets = [2, 0], sizes = [1, 8], strides = [1, 1]} : vector<8x8xf32> to vector<1x8xf32>
    %1173 = vector.extract_strided_slice %1135 {offsets = [3, 0], sizes = [1, 8], strides = [1, 1]} : vector<8x8xf32> to vector<1x8xf32>
    %1174 = vector.extract_strided_slice %1135 {offsets = [4, 0], sizes = [1, 8], strides = [1, 1]} : vector<8x8xf32> to vector<1x8xf32>
    %1175 = vector.extract_strided_slice %1135 {offsets = [5, 0], sizes = [1, 8], strides = [1, 1]} : vector<8x8xf32> to vector<1x8xf32>
    %1176 = vector.extract_strided_slice %1135 {offsets = [6, 0], sizes = [1, 8], strides = [1, 1]} : vector<8x8xf32> to vector<1x8xf32>
    %1177 = vector.extract_strided_slice %1135 {offsets = [7, 0], sizes = [1, 8], strides = [1, 1]} : vector<8x8xf32> to vector<1x8xf32>
    %1178 = vector.extract_strided_slice %1137 {offsets = [0, 0], sizes = [1, 8], strides = [1, 1]} : vector<8x8xf32> to vector<1x8xf32>
    %1179 = vector.extract_strided_slice %1137 {offsets = [1, 0], sizes = [1, 8], strides = [1, 1]} : vector<8x8xf32> to vector<1x8xf32>
    %1180 = vector.extract_strided_slice %1137 {offsets = [2, 0], sizes = [1, 8], strides = [1, 1]} : vector<8x8xf32> to vector<1x8xf32>
    %1181 = vector.extract_strided_slice %1137 {offsets = [3, 0], sizes = [1, 8], strides = [1, 1]} : vector<8x8xf32> to vector<1x8xf32>
    %1182 = vector.extract_strided_slice %1137 {offsets = [4, 0], sizes = [1, 8], strides = [1, 1]} : vector<8x8xf32> to vector<1x8xf32>
    %1183 = vector.extract_strided_slice %1137 {offsets = [5, 0], sizes = [1, 8], strides = [1, 1]} : vector<8x8xf32> to vector<1x8xf32>
    %1184 = vector.extract_strided_slice %1137 {offsets = [6, 0], sizes = [1, 8], strides = [1, 1]} : vector<8x8xf32> to vector<1x8xf32>
    %1185 = vector.extract_strided_slice %1137 {offsets = [7, 0], sizes = [1, 8], strides = [1, 1]} : vector<8x8xf32> to vector<1x8xf32>
    %c5_136 = arith.constant 5 : index
    %c0_137 = arith.constant 0 : index
    %1186 = vector.load %arg3[%c5_136, %c0_137] : memref<8x8xf32, #tpu.memory_space<vmem>>, vector<1x8xf32>
    %1187 = vector.shape_cast %1186 : vector<1x8xf32> to vector<1x8xf32>
    %1188 = vector.broadcast %1187 : vector<1x8xf32> to vector<8x8xf32>
    %c5_138 = arith.constant 5 : index
    %c0_139 = arith.constant 0 : index
    %1189 = vector.load %arg5[%c5_138, %c0_139] : memref<8x8xf32, #tpu.memory_space<vmem>>, vector<1x8xf32>
    %1190 = vector.shape_cast %1189 : vector<1x8xf32> to vector<1x8xf32>
    %1191 = vector.broadcast %1190 : vector<1x8xf32> to vector<8x8xf32>
    %c5_140 = arith.constant 5 : index
    %c0_141 = arith.constant 0 : index
    %1192 = vector.load %arg7[%c5_140, %c0_141] : memref<8x8xf32, #tpu.memory_space<vmem>>, vector<1x8xf32>
    %1193 = vector.shape_cast %1192 : vector<1x8xf32> to vector<1x8xf32>
    %1194 = vector.broadcast %1193 : vector<1x8xf32> to vector<8x8xf32>
    %1195 = vector.extract_strided_slice %1131 {offsets = [0, 0], sizes = [8, 1], strides = [1, 1]} : vector<8x8xf32> to vector<8x1xf32>
    %1196 = vector.broadcast %1195 : vector<8x1xf32> to vector<8x8xf32>
    %1197 = vector.broadcast %1141 : vector<1x8xf32> to vector<8x8xf32>
    %1198 = arith.mulf %1196, %1197 : vector<8x8xf32>
    %1199 = vector.extract_strided_slice %1131 {offsets = [0, 1], sizes = [8, 1], strides = [1, 1]} : vector<8x8xf32> to vector<8x1xf32>
    %1200 = vector.broadcast %1199 : vector<8x1xf32> to vector<8x8xf32>
    %1201 = vector.broadcast %1145 : vector<1x8xf32> to vector<8x8xf32>
    %1202 = arith.mulf %1200, %1201 : vector<8x8xf32>
    %1203 = vector.extract_strided_slice %1131 {offsets = [0, 2], sizes = [8, 1], strides = [1, 1]} : vector<8x8xf32> to vector<8x1xf32>
    %1204 = vector.broadcast %1203 : vector<8x1xf32> to vector<8x8xf32>
    %1205 = vector.broadcast %1149 : vector<1x8xf32> to vector<8x8xf32>
    %1206 = arith.mulf %1204, %1205 : vector<8x8xf32>
    %1207 = vector.extract_strided_slice %1131 {offsets = [0, 3], sizes = [8, 1], strides = [1, 1]} : vector<8x8xf32> to vector<8x1xf32>
    %1208 = vector.broadcast %1207 : vector<8x1xf32> to vector<8x8xf32>
    %1209 = vector.broadcast %1153 : vector<1x8xf32> to vector<8x8xf32>
    %1210 = arith.mulf %1208, %1209 : vector<8x8xf32>
    %1211 = vector.extract_strided_slice %1131 {offsets = [0, 4], sizes = [8, 1], strides = [1, 1]} : vector<8x8xf32> to vector<8x1xf32>
    %1212 = vector.broadcast %1211 : vector<8x1xf32> to vector<8x8xf32>
    %1213 = vector.broadcast %1157 : vector<1x8xf32> to vector<8x8xf32>
    %1214 = arith.mulf %1212, %1213 : vector<8x8xf32>
    %1215 = vector.extract_strided_slice %1131 {offsets = [0, 5], sizes = [8, 1], strides = [1, 1]} : vector<8x8xf32> to vector<8x1xf32>
    %1216 = vector.broadcast %1215 : vector<8x1xf32> to vector<8x8xf32>
    %1217 = vector.broadcast %1161 : vector<1x8xf32> to vector<8x8xf32>
    %1218 = arith.mulf %1216, %1217 : vector<8x8xf32>
    %1219 = vector.extract_strided_slice %1131 {offsets = [0, 6], sizes = [8, 1], strides = [1, 1]} : vector<8x8xf32> to vector<8x1xf32>
    %1220 = vector.broadcast %1219 : vector<8x1xf32> to vector<8x8xf32>
    %1221 = vector.broadcast %1165 : vector<1x8xf32> to vector<8x8xf32>
    %1222 = arith.mulf %1220, %1221 : vector<8x8xf32>
    %1223 = vector.extract_strided_slice %1131 {offsets = [0, 7], sizes = [8, 1], strides = [1, 1]} : vector<8x8xf32> to vector<8x1xf32>
    %1224 = vector.broadcast %1223 : vector<8x1xf32> to vector<8x8xf32>
    %1225 = vector.broadcast %1169 : vector<1x8xf32> to vector<8x8xf32>
    %1226 = arith.mulf %1224, %1225 : vector<8x8xf32>
    %1227 = arith.addf %1198, %1202 : vector<8x8xf32>
    %1228 = arith.addf %1206, %1210 : vector<8x8xf32>
    %1229 = arith.addf %1214, %1218 : vector<8x8xf32>
    %1230 = arith.addf %1222, %1226 : vector<8x8xf32>
    %1231 = arith.addf %1227, %1228 : vector<8x8xf32>
    %1232 = arith.addf %1229, %1230 : vector<8x8xf32>
    %1233 = arith.addf %1231, %1232 : vector<8x8xf32>
    %1234 = arith.addf %1233, %1188 : vector<8x8xf32>
    %1235 = math.tanh %1234 : vector<8x8xf32>
    %cst_142 = arith.constant dense<0.000000e+00> : vector<8xf32>
    %1236 = vector.multi_reduction <add>, %1235, %cst_142 [1] : vector<8x8xf32> to vector<8xf32>
    %1237 = vector.shape_cast %1236 : vector<8xf32> to vector<8x1xf32>
    %cst_143 = arith.constant 1.250000e-01 : f32
    %1238 = vector.broadcast %cst_143 : f32 to vector<8x1xf32>
    %1239 = arith.mulf %1237, %1238 : vector<8x1xf32>
    %1240 = arith.mulf %1235, %1235 : vector<8x8xf32>
    %cst_144 = arith.constant dense<0.000000e+00> : vector<8xf32>
    %1241 = vector.multi_reduction <add>, %1240, %cst_144 [1] : vector<8x8xf32> to vector<8xf32>
    %1242 = vector.shape_cast %1241 : vector<8xf32> to vector<8x1xf32>
    %cst_145 = arith.constant 1.250000e-01 : f32
    %1243 = vector.broadcast %cst_145 : f32 to vector<8x1xf32>
    %1244 = arith.mulf %1242, %1243 : vector<8x1xf32>
    %1245 = arith.mulf %1239, %1239 : vector<8x1xf32>
    %1246 = arith.subf %1244, %1245 : vector<8x1xf32>
    %1247 = vector.broadcast %1239 : vector<8x1xf32> to vector<8x8xf32>
    %1248 = arith.subf %1235, %1247 : vector<8x8xf32>
    %cst_146 = arith.constant 9.99999974E-6 : f32
    %1249 = vector.broadcast %cst_146 : f32 to vector<8x1xf32>
    %1250 = arith.addf %1246, %1249 : vector<8x1xf32>
    %1251 = math.rsqrt %1250 : vector<8x1xf32>
    %1252 = vector.broadcast %1251 : vector<8x1xf32> to vector<8x8xf32>
    %1253 = arith.mulf %1248, %1252 : vector<8x8xf32>
    %1254 = vector.extract_strided_slice %1253 {offsets = [0, 0], sizes = [8, 1], strides = [1, 1]} : vector<8x8xf32> to vector<8x1xf32>
    %1255 = vector.broadcast %1254 : vector<8x1xf32> to vector<8x8xf32>
    %1256 = vector.broadcast %1170 : vector<1x8xf32> to vector<8x8xf32>
    %1257 = arith.mulf %1255, %1256 : vector<8x8xf32>
    %1258 = vector.extract_strided_slice %1253 {offsets = [0, 1], sizes = [8, 1], strides = [1, 1]} : vector<8x8xf32> to vector<8x1xf32>
    %1259 = vector.broadcast %1258 : vector<8x1xf32> to vector<8x8xf32>
    %1260 = vector.broadcast %1171 : vector<1x8xf32> to vector<8x8xf32>
    %1261 = arith.mulf %1259, %1260 : vector<8x8xf32>
    %1262 = vector.extract_strided_slice %1253 {offsets = [0, 2], sizes = [8, 1], strides = [1, 1]} : vector<8x8xf32> to vector<8x1xf32>
    %1263 = vector.broadcast %1262 : vector<8x1xf32> to vector<8x8xf32>
    %1264 = vector.broadcast %1172 : vector<1x8xf32> to vector<8x8xf32>
    %1265 = arith.mulf %1263, %1264 : vector<8x8xf32>
    %1266 = vector.extract_strided_slice %1253 {offsets = [0, 3], sizes = [8, 1], strides = [1, 1]} : vector<8x8xf32> to vector<8x1xf32>
    %1267 = vector.broadcast %1266 : vector<8x1xf32> to vector<8x8xf32>
    %1268 = vector.broadcast %1173 : vector<1x8xf32> to vector<8x8xf32>
    %1269 = arith.mulf %1267, %1268 : vector<8x8xf32>
    %1270 = vector.extract_strided_slice %1253 {offsets = [0, 4], sizes = [8, 1], strides = [1, 1]} : vector<8x8xf32> to vector<8x1xf32>
    %1271 = vector.broadcast %1270 : vector<8x1xf32> to vector<8x8xf32>
    %1272 = vector.broadcast %1174 : vector<1x8xf32> to vector<8x8xf32>
    %1273 = arith.mulf %1271, %1272 : vector<8x8xf32>
    %1274 = vector.extract_strided_slice %1253 {offsets = [0, 5], sizes = [8, 1], strides = [1, 1]} : vector<8x8xf32> to vector<8x1xf32>
    %1275 = vector.broadcast %1274 : vector<8x1xf32> to vector<8x8xf32>
    %1276 = vector.broadcast %1175 : vector<1x8xf32> to vector<8x8xf32>
    %1277 = arith.mulf %1275, %1276 : vector<8x8xf32>
    %1278 = vector.extract_strided_slice %1253 {offsets = [0, 6], sizes = [8, 1], strides = [1, 1]} : vector<8x8xf32> to vector<8x1xf32>
    %1279 = vector.broadcast %1278 : vector<8x1xf32> to vector<8x8xf32>
    %1280 = vector.broadcast %1176 : vector<1x8xf32> to vector<8x8xf32>
    %1281 = arith.mulf %1279, %1280 : vector<8x8xf32>
    %1282 = vector.extract_strided_slice %1253 {offsets = [0, 7], sizes = [8, 1], strides = [1, 1]} : vector<8x8xf32> to vector<8x1xf32>
    %1283 = vector.broadcast %1282 : vector<8x1xf32> to vector<8x8xf32>
    %1284 = vector.broadcast %1177 : vector<1x8xf32> to vector<8x8xf32>
    %1285 = arith.mulf %1283, %1284 : vector<8x8xf32>
    %1286 = arith.addf %1257, %1261 : vector<8x8xf32>
    %1287 = arith.addf %1265, %1269 : vector<8x8xf32>
    %1288 = arith.addf %1273, %1277 : vector<8x8xf32>
    %1289 = arith.addf %1281, %1285 : vector<8x8xf32>
    %1290 = arith.addf %1286, %1287 : vector<8x8xf32>
    %1291 = arith.addf %1288, %1289 : vector<8x8xf32>
    %1292 = arith.addf %1290, %1291 : vector<8x8xf32>
    %1293 = arith.addf %1292, %1191 : vector<8x8xf32>
    %1294 = math.tanh %1293 : vector<8x8xf32>
    %cst_147 = arith.constant dense<0.000000e+00> : vector<8xf32>
    %1295 = vector.multi_reduction <add>, %1294, %cst_147 [1] : vector<8x8xf32> to vector<8xf32>
    %1296 = vector.shape_cast %1295 : vector<8xf32> to vector<8x1xf32>
    %cst_148 = arith.constant 1.250000e-01 : f32
    %1297 = vector.broadcast %cst_148 : f32 to vector<8x1xf32>
    %1298 = arith.mulf %1296, %1297 : vector<8x1xf32>
    %1299 = arith.mulf %1294, %1294 : vector<8x8xf32>
    %cst_149 = arith.constant dense<0.000000e+00> : vector<8xf32>
    %1300 = vector.multi_reduction <add>, %1299, %cst_149 [1] : vector<8x8xf32> to vector<8xf32>
    %1301 = vector.shape_cast %1300 : vector<8xf32> to vector<8x1xf32>
    %cst_150 = arith.constant 1.250000e-01 : f32
    %1302 = vector.broadcast %cst_150 : f32 to vector<8x1xf32>
    %1303 = arith.mulf %1301, %1302 : vector<8x1xf32>
    %1304 = arith.mulf %1298, %1298 : vector<8x1xf32>
    %1305 = arith.subf %1303, %1304 : vector<8x1xf32>
    %1306 = vector.broadcast %1298 : vector<8x1xf32> to vector<8x8xf32>
    %1307 = arith.subf %1294, %1306 : vector<8x8xf32>
    %cst_151 = arith.constant 9.99999974E-6 : f32
    %1308 = vector.broadcast %cst_151 : f32 to vector<8x1xf32>
    %1309 = arith.addf %1305, %1308 : vector<8x1xf32>
    %1310 = math.rsqrt %1309 : vector<8x1xf32>
    %1311 = vector.broadcast %1310 : vector<8x1xf32> to vector<8x8xf32>
    %1312 = arith.mulf %1307, %1311 : vector<8x8xf32>
    %1313 = vector.extract_strided_slice %1312 {offsets = [0, 0], sizes = [8, 1], strides = [1, 1]} : vector<8x8xf32> to vector<8x1xf32>
    %1314 = vector.broadcast %1313 : vector<8x1xf32> to vector<8x8xf32>
    %1315 = vector.broadcast %1178 : vector<1x8xf32> to vector<8x8xf32>
    %1316 = arith.mulf %1314, %1315 : vector<8x8xf32>
    %1317 = vector.extract_strided_slice %1312 {offsets = [0, 1], sizes = [8, 1], strides = [1, 1]} : vector<8x8xf32> to vector<8x1xf32>
    %1318 = vector.broadcast %1317 : vector<8x1xf32> to vector<8x8xf32>
    %1319 = vector.broadcast %1179 : vector<1x8xf32> to vector<8x8xf32>
    %1320 = arith.mulf %1318, %1319 : vector<8x8xf32>
    %1321 = vector.extract_strided_slice %1312 {offsets = [0, 2], sizes = [8, 1], strides = [1, 1]} : vector<8x8xf32> to vector<8x1xf32>
    %1322 = vector.broadcast %1321 : vector<8x1xf32> to vector<8x8xf32>
    %1323 = vector.broadcast %1180 : vector<1x8xf32> to vector<8x8xf32>
    %1324 = arith.mulf %1322, %1323 : vector<8x8xf32>
    %1325 = vector.extract_strided_slice %1312 {offsets = [0, 3], sizes = [8, 1], strides = [1, 1]} : vector<8x8xf32> to vector<8x1xf32>
    %1326 = vector.broadcast %1325 : vector<8x1xf32> to vector<8x8xf32>
    %1327 = vector.broadcast %1181 : vector<1x8xf32> to vector<8x8xf32>
    %1328 = arith.mulf %1326, %1327 : vector<8x8xf32>
    %1329 = vector.extract_strided_slice %1312 {offsets = [0, 4], sizes = [8, 1], strides = [1, 1]} : vector<8x8xf32> to vector<8x1xf32>
    %1330 = vector.broadcast %1329 : vector<8x1xf32> to vector<8x8xf32>
    %1331 = vector.broadcast %1182 : vector<1x8xf32> to vector<8x8xf32>
    %1332 = arith.mulf %1330, %1331 : vector<8x8xf32>
    %1333 = vector.extract_strided_slice %1312 {offsets = [0, 5], sizes = [8, 1], strides = [1, 1]} : vector<8x8xf32> to vector<8x1xf32>
    %1334 = vector.broadcast %1333 : vector<8x1xf32> to vector<8x8xf32>
    %1335 = vector.broadcast %1183 : vector<1x8xf32> to vector<8x8xf32>
    %1336 = arith.mulf %1334, %1335 : vector<8x8xf32>
    %1337 = vector.extract_strided_slice %1312 {offsets = [0, 6], sizes = [8, 1], strides = [1, 1]} : vector<8x8xf32> to vector<8x1xf32>
    %1338 = vector.broadcast %1337 : vector<8x1xf32> to vector<8x8xf32>
    %1339 = vector.broadcast %1184 : vector<1x8xf32> to vector<8x8xf32>
    %1340 = arith.mulf %1338, %1339 : vector<8x8xf32>
    %1341 = vector.extract_strided_slice %1312 {offsets = [0, 7], sizes = [8, 1], strides = [1, 1]} : vector<8x8xf32> to vector<8x1xf32>
    %1342 = vector.broadcast %1341 : vector<8x1xf32> to vector<8x8xf32>
    %1343 = vector.broadcast %1185 : vector<1x8xf32> to vector<8x8xf32>
    %1344 = arith.mulf %1342, %1343 : vector<8x8xf32>
    %1345 = arith.addf %1316, %1320 : vector<8x8xf32>
    %1346 = arith.addf %1324, %1328 : vector<8x8xf32>
    %1347 = arith.addf %1332, %1336 : vector<8x8xf32>
    %1348 = arith.addf %1340, %1344 : vector<8x8xf32>
    %1349 = arith.addf %1345, %1346 : vector<8x8xf32>
    %1350 = arith.addf %1347, %1348 : vector<8x8xf32>
    %1351 = arith.addf %1349, %1350 : vector<8x8xf32>
    %1352 = arith.addf %1351, %1194 : vector<8x8xf32>
    %1353 = arith.negf %1352 : vector<8x8xf32>
    %1354 = math.exp %1353 : vector<8x8xf32>
    %cst_152 = arith.constant 1.000000e+00 : f32
    %1355 = vector.broadcast %cst_152 : f32 to vector<8x8xf32>
    %1356 = arith.addf %1355, %1354 : vector<8x8xf32>
    %1357 = arith.divf %1355, %1356 : vector<8x8xf32>
    %c6 = arith.constant 6 : index
    %c0_153 = arith.constant 0 : index
    %c0_154 = arith.constant 0 : index
    %1358 = vector.load %arg2[%c6, %c0_153, %c0_154] : memref<8x8x8xf32, #tpu.memory_space<vmem>>, vector<1x8x8xf32>
    %1359 = vector.shape_cast %1358 : vector<1x8x8xf32> to vector<8x8xf32>
    %c6_155 = arith.constant 6 : index
    %c0_156 = arith.constant 0 : index
    %c0_157 = arith.constant 0 : index
    %1360 = vector.load %arg4[%c6_155, %c0_156, %c0_157] : memref<8x8x8xf32, #tpu.memory_space<vmem>>, vector<1x8x8xf32>
    %1361 = vector.shape_cast %1360 : vector<1x8x8xf32> to vector<8x8xf32>
    %c6_158 = arith.constant 6 : index
    %c0_159 = arith.constant 0 : index
    %c0_160 = arith.constant 0 : index
    %1362 = vector.load %arg6[%c6_158, %c0_159, %c0_160] : memref<8x8x8xf32, #tpu.memory_space<vmem>>, vector<1x8x8xf32>
    %1363 = vector.shape_cast %1362 : vector<1x8x8xf32> to vector<8x8xf32>
    %1364 = vector.extract_strided_slice %1 {offsets = [6, 0], sizes = [1, 1], strides = [1, 1]} : vector<8x8xf32> to vector<1x1xf32>
    %1365 = vector.extract_strided_slice %1359 {offsets = [0, 0], sizes = [1, 8], strides = [1, 1]} : vector<8x8xf32> to vector<1x8xf32>
    %1366 = vector.broadcast %1364 : vector<1x1xf32> to vector<1x8xf32>
    %1367 = arith.mulf %1366, %1365 : vector<1x8xf32>
    %1368 = vector.extract_strided_slice %1 {offsets = [6, 1], sizes = [1, 1], strides = [1, 1]} : vector<8x8xf32> to vector<1x1xf32>
    %1369 = vector.extract_strided_slice %1359 {offsets = [1, 0], sizes = [1, 8], strides = [1, 1]} : vector<8x8xf32> to vector<1x8xf32>
    %1370 = vector.broadcast %1368 : vector<1x1xf32> to vector<1x8xf32>
    %1371 = arith.mulf %1370, %1369 : vector<1x8xf32>
    %1372 = vector.extract_strided_slice %1 {offsets = [6, 2], sizes = [1, 1], strides = [1, 1]} : vector<8x8xf32> to vector<1x1xf32>
    %1373 = vector.extract_strided_slice %1359 {offsets = [2, 0], sizes = [1, 8], strides = [1, 1]} : vector<8x8xf32> to vector<1x8xf32>
    %1374 = vector.broadcast %1372 : vector<1x1xf32> to vector<1x8xf32>
    %1375 = arith.mulf %1374, %1373 : vector<1x8xf32>
    %1376 = vector.extract_strided_slice %1 {offsets = [6, 3], sizes = [1, 1], strides = [1, 1]} : vector<8x8xf32> to vector<1x1xf32>
    %1377 = vector.extract_strided_slice %1359 {offsets = [3, 0], sizes = [1, 8], strides = [1, 1]} : vector<8x8xf32> to vector<1x8xf32>
    %1378 = vector.broadcast %1376 : vector<1x1xf32> to vector<1x8xf32>
    %1379 = arith.mulf %1378, %1377 : vector<1x8xf32>
    %1380 = vector.extract_strided_slice %1 {offsets = [6, 4], sizes = [1, 1], strides = [1, 1]} : vector<8x8xf32> to vector<1x1xf32>
    %1381 = vector.extract_strided_slice %1359 {offsets = [4, 0], sizes = [1, 8], strides = [1, 1]} : vector<8x8xf32> to vector<1x8xf32>
    %1382 = vector.broadcast %1380 : vector<1x1xf32> to vector<1x8xf32>
    %1383 = arith.mulf %1382, %1381 : vector<1x8xf32>
    %1384 = vector.extract_strided_slice %1 {offsets = [6, 5], sizes = [1, 1], strides = [1, 1]} : vector<8x8xf32> to vector<1x1xf32>
    %1385 = vector.extract_strided_slice %1359 {offsets = [5, 0], sizes = [1, 8], strides = [1, 1]} : vector<8x8xf32> to vector<1x8xf32>
    %1386 = vector.broadcast %1384 : vector<1x1xf32> to vector<1x8xf32>
    %1387 = arith.mulf %1386, %1385 : vector<1x8xf32>
    %1388 = vector.extract_strided_slice %1 {offsets = [6, 6], sizes = [1, 1], strides = [1, 1]} : vector<8x8xf32> to vector<1x1xf32>
    %1389 = vector.extract_strided_slice %1359 {offsets = [6, 0], sizes = [1, 8], strides = [1, 1]} : vector<8x8xf32> to vector<1x8xf32>
    %1390 = vector.broadcast %1388 : vector<1x1xf32> to vector<1x8xf32>
    %1391 = arith.mulf %1390, %1389 : vector<1x8xf32>
    %1392 = vector.extract_strided_slice %1 {offsets = [6, 7], sizes = [1, 1], strides = [1, 1]} : vector<8x8xf32> to vector<1x1xf32>
    %1393 = vector.extract_strided_slice %1359 {offsets = [7, 0], sizes = [1, 8], strides = [1, 1]} : vector<8x8xf32> to vector<1x8xf32>
    %1394 = vector.broadcast %1392 : vector<1x1xf32> to vector<1x8xf32>
    %1395 = arith.mulf %1394, %1393 : vector<1x8xf32>
    %1396 = vector.extract_strided_slice %1361 {offsets = [0, 0], sizes = [1, 8], strides = [1, 1]} : vector<8x8xf32> to vector<1x8xf32>
    %1397 = vector.extract_strided_slice %1361 {offsets = [1, 0], sizes = [1, 8], strides = [1, 1]} : vector<8x8xf32> to vector<1x8xf32>
    %1398 = vector.extract_strided_slice %1361 {offsets = [2, 0], sizes = [1, 8], strides = [1, 1]} : vector<8x8xf32> to vector<1x8xf32>
    %1399 = vector.extract_strided_slice %1361 {offsets = [3, 0], sizes = [1, 8], strides = [1, 1]} : vector<8x8xf32> to vector<1x8xf32>
    %1400 = vector.extract_strided_slice %1361 {offsets = [4, 0], sizes = [1, 8], strides = [1, 1]} : vector<8x8xf32> to vector<1x8xf32>
    %1401 = vector.extract_strided_slice %1361 {offsets = [5, 0], sizes = [1, 8], strides = [1, 1]} : vector<8x8xf32> to vector<1x8xf32>
    %1402 = vector.extract_strided_slice %1361 {offsets = [6, 0], sizes = [1, 8], strides = [1, 1]} : vector<8x8xf32> to vector<1x8xf32>
    %1403 = vector.extract_strided_slice %1361 {offsets = [7, 0], sizes = [1, 8], strides = [1, 1]} : vector<8x8xf32> to vector<1x8xf32>
    %1404 = vector.extract_strided_slice %1363 {offsets = [0, 0], sizes = [1, 8], strides = [1, 1]} : vector<8x8xf32> to vector<1x8xf32>
    %1405 = vector.extract_strided_slice %1363 {offsets = [1, 0], sizes = [1, 8], strides = [1, 1]} : vector<8x8xf32> to vector<1x8xf32>
    %1406 = vector.extract_strided_slice %1363 {offsets = [2, 0], sizes = [1, 8], strides = [1, 1]} : vector<8x8xf32> to vector<1x8xf32>
    %1407 = vector.extract_strided_slice %1363 {offsets = [3, 0], sizes = [1, 8], strides = [1, 1]} : vector<8x8xf32> to vector<1x8xf32>
    %1408 = vector.extract_strided_slice %1363 {offsets = [4, 0], sizes = [1, 8], strides = [1, 1]} : vector<8x8xf32> to vector<1x8xf32>
    %1409 = vector.extract_strided_slice %1363 {offsets = [5, 0], sizes = [1, 8], strides = [1, 1]} : vector<8x8xf32> to vector<1x8xf32>
    %1410 = vector.extract_strided_slice %1363 {offsets = [6, 0], sizes = [1, 8], strides = [1, 1]} : vector<8x8xf32> to vector<1x8xf32>
    %1411 = vector.extract_strided_slice %1363 {offsets = [7, 0], sizes = [1, 8], strides = [1, 1]} : vector<8x8xf32> to vector<1x8xf32>
    %c6_161 = arith.constant 6 : index
    %c0_162 = arith.constant 0 : index
    %1412 = vector.load %arg3[%c6_161, %c0_162] : memref<8x8xf32, #tpu.memory_space<vmem>>, vector<1x8xf32>
    %1413 = vector.shape_cast %1412 : vector<1x8xf32> to vector<1x8xf32>
    %1414 = vector.broadcast %1413 : vector<1x8xf32> to vector<8x8xf32>
    %c6_163 = arith.constant 6 : index
    %c0_164 = arith.constant 0 : index
    %1415 = vector.load %arg5[%c6_163, %c0_164] : memref<8x8xf32, #tpu.memory_space<vmem>>, vector<1x8xf32>
    %1416 = vector.shape_cast %1415 : vector<1x8xf32> to vector<1x8xf32>
    %1417 = vector.broadcast %1416 : vector<1x8xf32> to vector<8x8xf32>
    %c6_165 = arith.constant 6 : index
    %c0_166 = arith.constant 0 : index
    %1418 = vector.load %arg7[%c6_165, %c0_166] : memref<8x8xf32, #tpu.memory_space<vmem>>, vector<1x8xf32>
    %1419 = vector.shape_cast %1418 : vector<1x8xf32> to vector<1x8xf32>
    %1420 = vector.broadcast %1419 : vector<1x8xf32> to vector<8x8xf32>
    %1421 = vector.extract_strided_slice %1357 {offsets = [0, 0], sizes = [8, 1], strides = [1, 1]} : vector<8x8xf32> to vector<8x1xf32>
    %1422 = vector.broadcast %1421 : vector<8x1xf32> to vector<8x8xf32>
    %1423 = vector.broadcast %1367 : vector<1x8xf32> to vector<8x8xf32>
    %1424 = arith.mulf %1422, %1423 : vector<8x8xf32>
    %1425 = vector.extract_strided_slice %1357 {offsets = [0, 1], sizes = [8, 1], strides = [1, 1]} : vector<8x8xf32> to vector<8x1xf32>
    %1426 = vector.broadcast %1425 : vector<8x1xf32> to vector<8x8xf32>
    %1427 = vector.broadcast %1371 : vector<1x8xf32> to vector<8x8xf32>
    %1428 = arith.mulf %1426, %1427 : vector<8x8xf32>
    %1429 = vector.extract_strided_slice %1357 {offsets = [0, 2], sizes = [8, 1], strides = [1, 1]} : vector<8x8xf32> to vector<8x1xf32>
    %1430 = vector.broadcast %1429 : vector<8x1xf32> to vector<8x8xf32>
    %1431 = vector.broadcast %1375 : vector<1x8xf32> to vector<8x8xf32>
    %1432 = arith.mulf %1430, %1431 : vector<8x8xf32>
    %1433 = vector.extract_strided_slice %1357 {offsets = [0, 3], sizes = [8, 1], strides = [1, 1]} : vector<8x8xf32> to vector<8x1xf32>
    %1434 = vector.broadcast %1433 : vector<8x1xf32> to vector<8x8xf32>
    %1435 = vector.broadcast %1379 : vector<1x8xf32> to vector<8x8xf32>
    %1436 = arith.mulf %1434, %1435 : vector<8x8xf32>
    %1437 = vector.extract_strided_slice %1357 {offsets = [0, 4], sizes = [8, 1], strides = [1, 1]} : vector<8x8xf32> to vector<8x1xf32>
    %1438 = vector.broadcast %1437 : vector<8x1xf32> to vector<8x8xf32>
    %1439 = vector.broadcast %1383 : vector<1x8xf32> to vector<8x8xf32>
    %1440 = arith.mulf %1438, %1439 : vector<8x8xf32>
    %1441 = vector.extract_strided_slice %1357 {offsets = [0, 5], sizes = [8, 1], strides = [1, 1]} : vector<8x8xf32> to vector<8x1xf32>
    %1442 = vector.broadcast %1441 : vector<8x1xf32> to vector<8x8xf32>
    %1443 = vector.broadcast %1387 : vector<1x8xf32> to vector<8x8xf32>
    %1444 = arith.mulf %1442, %1443 : vector<8x8xf32>
    %1445 = vector.extract_strided_slice %1357 {offsets = [0, 6], sizes = [8, 1], strides = [1, 1]} : vector<8x8xf32> to vector<8x1xf32>
    %1446 = vector.broadcast %1445 : vector<8x1xf32> to vector<8x8xf32>
    %1447 = vector.broadcast %1391 : vector<1x8xf32> to vector<8x8xf32>
    %1448 = arith.mulf %1446, %1447 : vector<8x8xf32>
    %1449 = vector.extract_strided_slice %1357 {offsets = [0, 7], sizes = [8, 1], strides = [1, 1]} : vector<8x8xf32> to vector<8x1xf32>
    %1450 = vector.broadcast %1449 : vector<8x1xf32> to vector<8x8xf32>
    %1451 = vector.broadcast %1395 : vector<1x8xf32> to vector<8x8xf32>
    %1452 = arith.mulf %1450, %1451 : vector<8x8xf32>
    %1453 = arith.addf %1424, %1428 : vector<8x8xf32>
    %1454 = arith.addf %1432, %1436 : vector<8x8xf32>
    %1455 = arith.addf %1440, %1444 : vector<8x8xf32>
    %1456 = arith.addf %1448, %1452 : vector<8x8xf32>
    %1457 = arith.addf %1453, %1454 : vector<8x8xf32>
    %1458 = arith.addf %1455, %1456 : vector<8x8xf32>
    %1459 = arith.addf %1457, %1458 : vector<8x8xf32>
    %1460 = arith.addf %1459, %1414 : vector<8x8xf32>
    %1461 = math.tanh %1460 : vector<8x8xf32>
    %cst_167 = arith.constant dense<0.000000e+00> : vector<8xf32>
    %1462 = vector.multi_reduction <add>, %1461, %cst_167 [1] : vector<8x8xf32> to vector<8xf32>
    %1463 = vector.shape_cast %1462 : vector<8xf32> to vector<8x1xf32>
    %cst_168 = arith.constant 1.250000e-01 : f32
    %1464 = vector.broadcast %cst_168 : f32 to vector<8x1xf32>
    %1465 = arith.mulf %1463, %1464 : vector<8x1xf32>
    %1466 = arith.mulf %1461, %1461 : vector<8x8xf32>
    %cst_169 = arith.constant dense<0.000000e+00> : vector<8xf32>
    %1467 = vector.multi_reduction <add>, %1466, %cst_169 [1] : vector<8x8xf32> to vector<8xf32>
    %1468 = vector.shape_cast %1467 : vector<8xf32> to vector<8x1xf32>
    %cst_170 = arith.constant 1.250000e-01 : f32
    %1469 = vector.broadcast %cst_170 : f32 to vector<8x1xf32>
    %1470 = arith.mulf %1468, %1469 : vector<8x1xf32>
    %1471 = arith.mulf %1465, %1465 : vector<8x1xf32>
    %1472 = arith.subf %1470, %1471 : vector<8x1xf32>
    %1473 = vector.broadcast %1465 : vector<8x1xf32> to vector<8x8xf32>
    %1474 = arith.subf %1461, %1473 : vector<8x8xf32>
    %cst_171 = arith.constant 9.99999974E-6 : f32
    %1475 = vector.broadcast %cst_171 : f32 to vector<8x1xf32>
    %1476 = arith.addf %1472, %1475 : vector<8x1xf32>
    %1477 = math.rsqrt %1476 : vector<8x1xf32>
    %1478 = vector.broadcast %1477 : vector<8x1xf32> to vector<8x8xf32>
    %1479 = arith.mulf %1474, %1478 : vector<8x8xf32>
    %1480 = vector.extract_strided_slice %1479 {offsets = [0, 0], sizes = [8, 1], strides = [1, 1]} : vector<8x8xf32> to vector<8x1xf32>
    %1481 = vector.broadcast %1480 : vector<8x1xf32> to vector<8x8xf32>
    %1482 = vector.broadcast %1396 : vector<1x8xf32> to vector<8x8xf32>
    %1483 = arith.mulf %1481, %1482 : vector<8x8xf32>
    %1484 = vector.extract_strided_slice %1479 {offsets = [0, 1], sizes = [8, 1], strides = [1, 1]} : vector<8x8xf32> to vector<8x1xf32>
    %1485 = vector.broadcast %1484 : vector<8x1xf32> to vector<8x8xf32>
    %1486 = vector.broadcast %1397 : vector<1x8xf32> to vector<8x8xf32>
    %1487 = arith.mulf %1485, %1486 : vector<8x8xf32>
    %1488 = vector.extract_strided_slice %1479 {offsets = [0, 2], sizes = [8, 1], strides = [1, 1]} : vector<8x8xf32> to vector<8x1xf32>
    %1489 = vector.broadcast %1488 : vector<8x1xf32> to vector<8x8xf32>
    %1490 = vector.broadcast %1398 : vector<1x8xf32> to vector<8x8xf32>
    %1491 = arith.mulf %1489, %1490 : vector<8x8xf32>
    %1492 = vector.extract_strided_slice %1479 {offsets = [0, 3], sizes = [8, 1], strides = [1, 1]} : vector<8x8xf32> to vector<8x1xf32>
    %1493 = vector.broadcast %1492 : vector<8x1xf32> to vector<8x8xf32>
    %1494 = vector.broadcast %1399 : vector<1x8xf32> to vector<8x8xf32>
    %1495 = arith.mulf %1493, %1494 : vector<8x8xf32>
    %1496 = vector.extract_strided_slice %1479 {offsets = [0, 4], sizes = [8, 1], strides = [1, 1]} : vector<8x8xf32> to vector<8x1xf32>
    %1497 = vector.broadcast %1496 : vector<8x1xf32> to vector<8x8xf32>
    %1498 = vector.broadcast %1400 : vector<1x8xf32> to vector<8x8xf32>
    %1499 = arith.mulf %1497, %1498 : vector<8x8xf32>
    %1500 = vector.extract_strided_slice %1479 {offsets = [0, 5], sizes = [8, 1], strides = [1, 1]} : vector<8x8xf32> to vector<8x1xf32>
    %1501 = vector.broadcast %1500 : vector<8x1xf32> to vector<8x8xf32>
    %1502 = vector.broadcast %1401 : vector<1x8xf32> to vector<8x8xf32>
    %1503 = arith.mulf %1501, %1502 : vector<8x8xf32>
    %1504 = vector.extract_strided_slice %1479 {offsets = [0, 6], sizes = [8, 1], strides = [1, 1]} : vector<8x8xf32> to vector<8x1xf32>
    %1505 = vector.broadcast %1504 : vector<8x1xf32> to vector<8x8xf32>
    %1506 = vector.broadcast %1402 : vector<1x8xf32> to vector<8x8xf32>
    %1507 = arith.mulf %1505, %1506 : vector<8x8xf32>
    %1508 = vector.extract_strided_slice %1479 {offsets = [0, 7], sizes = [8, 1], strides = [1, 1]} : vector<8x8xf32> to vector<8x1xf32>
    %1509 = vector.broadcast %1508 : vector<8x1xf32> to vector<8x8xf32>
    %1510 = vector.broadcast %1403 : vector<1x8xf32> to vector<8x8xf32>
    %1511 = arith.mulf %1509, %1510 : vector<8x8xf32>
    %1512 = arith.addf %1483, %1487 : vector<8x8xf32>
    %1513 = arith.addf %1491, %1495 : vector<8x8xf32>
    %1514 = arith.addf %1499, %1503 : vector<8x8xf32>
    %1515 = arith.addf %1507, %1511 : vector<8x8xf32>
    %1516 = arith.addf %1512, %1513 : vector<8x8xf32>
    %1517 = arith.addf %1514, %1515 : vector<8x8xf32>
    %1518 = arith.addf %1516, %1517 : vector<8x8xf32>
    %1519 = arith.addf %1518, %1417 : vector<8x8xf32>
    %1520 = math.tanh %1519 : vector<8x8xf32>
    %cst_172 = arith.constant dense<0.000000e+00> : vector<8xf32>
    %1521 = vector.multi_reduction <add>, %1520, %cst_172 [1] : vector<8x8xf32> to vector<8xf32>
    %1522 = vector.shape_cast %1521 : vector<8xf32> to vector<8x1xf32>
    %cst_173 = arith.constant 1.250000e-01 : f32
    %1523 = vector.broadcast %cst_173 : f32 to vector<8x1xf32>
    %1524 = arith.mulf %1522, %1523 : vector<8x1xf32>
    %1525 = arith.mulf %1520, %1520 : vector<8x8xf32>
    %cst_174 = arith.constant dense<0.000000e+00> : vector<8xf32>
    %1526 = vector.multi_reduction <add>, %1525, %cst_174 [1] : vector<8x8xf32> to vector<8xf32>
    %1527 = vector.shape_cast %1526 : vector<8xf32> to vector<8x1xf32>
    %cst_175 = arith.constant 1.250000e-01 : f32
    %1528 = vector.broadcast %cst_175 : f32 to vector<8x1xf32>
    %1529 = arith.mulf %1527, %1528 : vector<8x1xf32>
    %1530 = arith.mulf %1524, %1524 : vector<8x1xf32>
    %1531 = arith.subf %1529, %1530 : vector<8x1xf32>
    %1532 = vector.broadcast %1524 : vector<8x1xf32> to vector<8x8xf32>
    %1533 = arith.subf %1520, %1532 : vector<8x8xf32>
    %cst_176 = arith.constant 9.99999974E-6 : f32
    %1534 = vector.broadcast %cst_176 : f32 to vector<8x1xf32>
    %1535 = arith.addf %1531, %1534 : vector<8x1xf32>
    %1536 = math.rsqrt %1535 : vector<8x1xf32>
    %1537 = vector.broadcast %1536 : vector<8x1xf32> to vector<8x8xf32>
    %1538 = arith.mulf %1533, %1537 : vector<8x8xf32>
    %1539 = vector.extract_strided_slice %1538 {offsets = [0, 0], sizes = [8, 1], strides = [1, 1]} : vector<8x8xf32> to vector<8x1xf32>
    %1540 = vector.broadcast %1539 : vector<8x1xf32> to vector<8x8xf32>
    %1541 = vector.broadcast %1404 : vector<1x8xf32> to vector<8x8xf32>
    %1542 = arith.mulf %1540, %1541 : vector<8x8xf32>
    %1543 = vector.extract_strided_slice %1538 {offsets = [0, 1], sizes = [8, 1], strides = [1, 1]} : vector<8x8xf32> to vector<8x1xf32>
    %1544 = vector.broadcast %1543 : vector<8x1xf32> to vector<8x8xf32>
    %1545 = vector.broadcast %1405 : vector<1x8xf32> to vector<8x8xf32>
    %1546 = arith.mulf %1544, %1545 : vector<8x8xf32>
    %1547 = vector.extract_strided_slice %1538 {offsets = [0, 2], sizes = [8, 1], strides = [1, 1]} : vector<8x8xf32> to vector<8x1xf32>
    %1548 = vector.broadcast %1547 : vector<8x1xf32> to vector<8x8xf32>
    %1549 = vector.broadcast %1406 : vector<1x8xf32> to vector<8x8xf32>
    %1550 = arith.mulf %1548, %1549 : vector<8x8xf32>
    %1551 = vector.extract_strided_slice %1538 {offsets = [0, 3], sizes = [8, 1], strides = [1, 1]} : vector<8x8xf32> to vector<8x1xf32>
    %1552 = vector.broadcast %1551 : vector<8x1xf32> to vector<8x8xf32>
    %1553 = vector.broadcast %1407 : vector<1x8xf32> to vector<8x8xf32>
    %1554 = arith.mulf %1552, %1553 : vector<8x8xf32>
    %1555 = vector.extract_strided_slice %1538 {offsets = [0, 4], sizes = [8, 1], strides = [1, 1]} : vector<8x8xf32> to vector<8x1xf32>
    %1556 = vector.broadcast %1555 : vector<8x1xf32> to vector<8x8xf32>
    %1557 = vector.broadcast %1408 : vector<1x8xf32> to vector<8x8xf32>
    %1558 = arith.mulf %1556, %1557 : vector<8x8xf32>
    %1559 = vector.extract_strided_slice %1538 {offsets = [0, 5], sizes = [8, 1], strides = [1, 1]} : vector<8x8xf32> to vector<8x1xf32>
    %1560 = vector.broadcast %1559 : vector<8x1xf32> to vector<8x8xf32>
    %1561 = vector.broadcast %1409 : vector<1x8xf32> to vector<8x8xf32>
    %1562 = arith.mulf %1560, %1561 : vector<8x8xf32>
    %1563 = vector.extract_strided_slice %1538 {offsets = [0, 6], sizes = [8, 1], strides = [1, 1]} : vector<8x8xf32> to vector<8x1xf32>
    %1564 = vector.broadcast %1563 : vector<8x1xf32> to vector<8x8xf32>
    %1565 = vector.broadcast %1410 : vector<1x8xf32> to vector<8x8xf32>
    %1566 = arith.mulf %1564, %1565 : vector<8x8xf32>
    %1567 = vector.extract_strided_slice %1538 {offsets = [0, 7], sizes = [8, 1], strides = [1, 1]} : vector<8x8xf32> to vector<8x1xf32>
    %1568 = vector.broadcast %1567 : vector<8x1xf32> to vector<8x8xf32>
    %1569 = vector.broadcast %1411 : vector<1x8xf32> to vector<8x8xf32>
    %1570 = arith.mulf %1568, %1569 : vector<8x8xf32>
    %1571 = arith.addf %1542, %1546 : vector<8x8xf32>
    %1572 = arith.addf %1550, %1554 : vector<8x8xf32>
    %1573 = arith.addf %1558, %1562 : vector<8x8xf32>
    %1574 = arith.addf %1566, %1570 : vector<8x8xf32>
    %1575 = arith.addf %1571, %1572 : vector<8x8xf32>
    %1576 = arith.addf %1573, %1574 : vector<8x8xf32>
    %1577 = arith.addf %1575, %1576 : vector<8x8xf32>
    %1578 = arith.addf %1577, %1420 : vector<8x8xf32>
    %1579 = arith.negf %1578 : vector<8x8xf32>
    %1580 = math.exp %1579 : vector<8x8xf32>
    %cst_177 = arith.constant 1.000000e+00 : f32
    %1581 = vector.broadcast %cst_177 : f32 to vector<8x8xf32>
    %1582 = arith.addf %1581, %1580 : vector<8x8xf32>
    %1583 = arith.divf %1581, %1582 : vector<8x8xf32>
    %c7 = arith.constant 7 : index
    %c0_178 = arith.constant 0 : index
    %c0_179 = arith.constant 0 : index
    %1584 = vector.load %arg2[%c7, %c0_178, %c0_179] : memref<8x8x8xf32, #tpu.memory_space<vmem>>, vector<1x8x8xf32>
    %1585 = vector.shape_cast %1584 : vector<1x8x8xf32> to vector<8x8xf32>
    %c7_180 = arith.constant 7 : index
    %c0_181 = arith.constant 0 : index
    %c0_182 = arith.constant 0 : index
    %1586 = vector.load %arg4[%c7_180, %c0_181, %c0_182] : memref<8x8x8xf32, #tpu.memory_space<vmem>>, vector<1x8x8xf32>
    %1587 = vector.shape_cast %1586 : vector<1x8x8xf32> to vector<8x8xf32>
    %c7_183 = arith.constant 7 : index
    %c0_184 = arith.constant 0 : index
    %c0_185 = arith.constant 0 : index
    %1588 = vector.load %arg6[%c7_183, %c0_184, %c0_185] : memref<8x8x8xf32, #tpu.memory_space<vmem>>, vector<1x8x8xf32>
    %1589 = vector.shape_cast %1588 : vector<1x8x8xf32> to vector<8x8xf32>
    %1590 = vector.extract_strided_slice %1 {offsets = [7, 0], sizes = [1, 1], strides = [1, 1]} : vector<8x8xf32> to vector<1x1xf32>
    %1591 = vector.extract_strided_slice %1585 {offsets = [0, 0], sizes = [1, 8], strides = [1, 1]} : vector<8x8xf32> to vector<1x8xf32>
    %1592 = vector.broadcast %1590 : vector<1x1xf32> to vector<1x8xf32>
    %1593 = arith.mulf %1592, %1591 : vector<1x8xf32>
    %1594 = vector.extract_strided_slice %1 {offsets = [7, 1], sizes = [1, 1], strides = [1, 1]} : vector<8x8xf32> to vector<1x1xf32>
    %1595 = vector.extract_strided_slice %1585 {offsets = [1, 0], sizes = [1, 8], strides = [1, 1]} : vector<8x8xf32> to vector<1x8xf32>
    %1596 = vector.broadcast %1594 : vector<1x1xf32> to vector<1x8xf32>
    %1597 = arith.mulf %1596, %1595 : vector<1x8xf32>
    %1598 = vector.extract_strided_slice %1 {offsets = [7, 2], sizes = [1, 1], strides = [1, 1]} : vector<8x8xf32> to vector<1x1xf32>
    %1599 = vector.extract_strided_slice %1585 {offsets = [2, 0], sizes = [1, 8], strides = [1, 1]} : vector<8x8xf32> to vector<1x8xf32>
    %1600 = vector.broadcast %1598 : vector<1x1xf32> to vector<1x8xf32>
    %1601 = arith.mulf %1600, %1599 : vector<1x8xf32>
    %1602 = vector.extract_strided_slice %1 {offsets = [7, 3], sizes = [1, 1], strides = [1, 1]} : vector<8x8xf32> to vector<1x1xf32>
    %1603 = vector.extract_strided_slice %1585 {offsets = [3, 0], sizes = [1, 8], strides = [1, 1]} : vector<8x8xf32> to vector<1x8xf32>
    %1604 = vector.broadcast %1602 : vector<1x1xf32> to vector<1x8xf32>
    %1605 = arith.mulf %1604, %1603 : vector<1x8xf32>
    %1606 = vector.extract_strided_slice %1 {offsets = [7, 4], sizes = [1, 1], strides = [1, 1]} : vector<8x8xf32> to vector<1x1xf32>
    %1607 = vector.extract_strided_slice %1585 {offsets = [4, 0], sizes = [1, 8], strides = [1, 1]} : vector<8x8xf32> to vector<1x8xf32>
    %1608 = vector.broadcast %1606 : vector<1x1xf32> to vector<1x8xf32>
    %1609 = arith.mulf %1608, %1607 : vector<1x8xf32>
    %1610 = vector.extract_strided_slice %1 {offsets = [7, 5], sizes = [1, 1], strides = [1, 1]} : vector<8x8xf32> to vector<1x1xf32>
    %1611 = vector.extract_strided_slice %1585 {offsets = [5, 0], sizes = [1, 8], strides = [1, 1]} : vector<8x8xf32> to vector<1x8xf32>
    %1612 = vector.broadcast %1610 : vector<1x1xf32> to vector<1x8xf32>
    %1613 = arith.mulf %1612, %1611 : vector<1x8xf32>
    %1614 = vector.extract_strided_slice %1 {offsets = [7, 6], sizes = [1, 1], strides = [1, 1]} : vector<8x8xf32> to vector<1x1xf32>
    %1615 = vector.extract_strided_slice %1585 {offsets = [6, 0], sizes = [1, 8], strides = [1, 1]} : vector<8x8xf32> to vector<1x8xf32>
    %1616 = vector.broadcast %1614 : vector<1x1xf32> to vector<1x8xf32>
    %1617 = arith.mulf %1616, %1615 : vector<1x8xf32>
    %1618 = vector.extract_strided_slice %1 {offsets = [7, 7], sizes = [1, 1], strides = [1, 1]} : vector<8x8xf32> to vector<1x1xf32>
    %1619 = vector.extract_strided_slice %1585 {offsets = [7, 0], sizes = [1, 8], strides = [1, 1]} : vector<8x8xf32> to vector<1x8xf32>
    %1620 = vector.broadcast %1618 : vector<1x1xf32> to vector<1x8xf32>
    %1621 = arith.mulf %1620, %1619 : vector<1x8xf32>
    %1622 = vector.extract_strided_slice %1587 {offsets = [0, 0], sizes = [1, 8], strides = [1, 1]} : vector<8x8xf32> to vector<1x8xf32>
    %1623 = vector.extract_strided_slice %1587 {offsets = [1, 0], sizes = [1, 8], strides = [1, 1]} : vector<8x8xf32> to vector<1x8xf32>
    %1624 = vector.extract_strided_slice %1587 {offsets = [2, 0], sizes = [1, 8], strides = [1, 1]} : vector<8x8xf32> to vector<1x8xf32>
    %1625 = vector.extract_strided_slice %1587 {offsets = [3, 0], sizes = [1, 8], strides = [1, 1]} : vector<8x8xf32> to vector<1x8xf32>
    %1626 = vector.extract_strided_slice %1587 {offsets = [4, 0], sizes = [1, 8], strides = [1, 1]} : vector<8x8xf32> to vector<1x8xf32>
    %1627 = vector.extract_strided_slice %1587 {offsets = [5, 0], sizes = [1, 8], strides = [1, 1]} : vector<8x8xf32> to vector<1x8xf32>
    %1628 = vector.extract_strided_slice %1587 {offsets = [6, 0], sizes = [1, 8], strides = [1, 1]} : vector<8x8xf32> to vector<1x8xf32>
    %1629 = vector.extract_strided_slice %1587 {offsets = [7, 0], sizes = [1, 8], strides = [1, 1]} : vector<8x8xf32> to vector<1x8xf32>
    %1630 = vector.extract_strided_slice %1589 {offsets = [0, 0], sizes = [1, 8], strides = [1, 1]} : vector<8x8xf32> to vector<1x8xf32>
    %1631 = vector.extract_strided_slice %1589 {offsets = [1, 0], sizes = [1, 8], strides = [1, 1]} : vector<8x8xf32> to vector<1x8xf32>
    %1632 = vector.extract_strided_slice %1589 {offsets = [2, 0], sizes = [1, 8], strides = [1, 1]} : vector<8x8xf32> to vector<1x8xf32>
    %1633 = vector.extract_strided_slice %1589 {offsets = [3, 0], sizes = [1, 8], strides = [1, 1]} : vector<8x8xf32> to vector<1x8xf32>
    %1634 = vector.extract_strided_slice %1589 {offsets = [4, 0], sizes = [1, 8], strides = [1, 1]} : vector<8x8xf32> to vector<1x8xf32>
    %1635 = vector.extract_strided_slice %1589 {offsets = [5, 0], sizes = [1, 8], strides = [1, 1]} : vector<8x8xf32> to vector<1x8xf32>
    %1636 = vector.extract_strided_slice %1589 {offsets = [6, 0], sizes = [1, 8], strides = [1, 1]} : vector<8x8xf32> to vector<1x8xf32>
    %1637 = vector.extract_strided_slice %1589 {offsets = [7, 0], sizes = [1, 8], strides = [1, 1]} : vector<8x8xf32> to vector<1x8xf32>
    %c7_186 = arith.constant 7 : index
    %c0_187 = arith.constant 0 : index
    %1638 = vector.load %arg3[%c7_186, %c0_187] : memref<8x8xf32, #tpu.memory_space<vmem>>, vector<1x8xf32>
    %1639 = vector.shape_cast %1638 : vector<1x8xf32> to vector<1x8xf32>
    %1640 = vector.broadcast %1639 : vector<1x8xf32> to vector<8x8xf32>
    %c7_188 = arith.constant 7 : index
    %c0_189 = arith.constant 0 : index
    %1641 = vector.load %arg5[%c7_188, %c0_189] : memref<8x8xf32, #tpu.memory_space<vmem>>, vector<1x8xf32>
    %1642 = vector.shape_cast %1641 : vector<1x8xf32> to vector<1x8xf32>
    %1643 = vector.broadcast %1642 : vector<1x8xf32> to vector<8x8xf32>
    %c7_190 = arith.constant 7 : index
    %c0_191 = arith.constant 0 : index
    %1644 = vector.load %arg7[%c7_190, %c0_191] : memref<8x8xf32, #tpu.memory_space<vmem>>, vector<1x8xf32>
    %1645 = vector.shape_cast %1644 : vector<1x8xf32> to vector<1x8xf32>
    %1646 = vector.broadcast %1645 : vector<1x8xf32> to vector<8x8xf32>
    %1647 = vector.extract_strided_slice %1583 {offsets = [0, 0], sizes = [8, 1], strides = [1, 1]} : vector<8x8xf32> to vector<8x1xf32>
    %1648 = vector.broadcast %1647 : vector<8x1xf32> to vector<8x8xf32>
    %1649 = vector.broadcast %1593 : vector<1x8xf32> to vector<8x8xf32>
    %1650 = arith.mulf %1648, %1649 : vector<8x8xf32>
    %1651 = vector.extract_strided_slice %1583 {offsets = [0, 1], sizes = [8, 1], strides = [1, 1]} : vector<8x8xf32> to vector<8x1xf32>
    %1652 = vector.broadcast %1651 : vector<8x1xf32> to vector<8x8xf32>
    %1653 = vector.broadcast %1597 : vector<1x8xf32> to vector<8x8xf32>
    %1654 = arith.mulf %1652, %1653 : vector<8x8xf32>
    %1655 = vector.extract_strided_slice %1583 {offsets = [0, 2], sizes = [8, 1], strides = [1, 1]} : vector<8x8xf32> to vector<8x1xf32>
    %1656 = vector.broadcast %1655 : vector<8x1xf32> to vector<8x8xf32>
    %1657 = vector.broadcast %1601 : vector<1x8xf32> to vector<8x8xf32>
    %1658 = arith.mulf %1656, %1657 : vector<8x8xf32>
    %1659 = vector.extract_strided_slice %1583 {offsets = [0, 3], sizes = [8, 1], strides = [1, 1]} : vector<8x8xf32> to vector<8x1xf32>
    %1660 = vector.broadcast %1659 : vector<8x1xf32> to vector<8x8xf32>
    %1661 = vector.broadcast %1605 : vector<1x8xf32> to vector<8x8xf32>
    %1662 = arith.mulf %1660, %1661 : vector<8x8xf32>
    %1663 = vector.extract_strided_slice %1583 {offsets = [0, 4], sizes = [8, 1], strides = [1, 1]} : vector<8x8xf32> to vector<8x1xf32>
    %1664 = vector.broadcast %1663 : vector<8x1xf32> to vector<8x8xf32>
    %1665 = vector.broadcast %1609 : vector<1x8xf32> to vector<8x8xf32>
    %1666 = arith.mulf %1664, %1665 : vector<8x8xf32>
    %1667 = vector.extract_strided_slice %1583 {offsets = [0, 5], sizes = [8, 1], strides = [1, 1]} : vector<8x8xf32> to vector<8x1xf32>
    %1668 = vector.broadcast %1667 : vector<8x1xf32> to vector<8x8xf32>
    %1669 = vector.broadcast %1613 : vector<1x8xf32> to vector<8x8xf32>
    %1670 = arith.mulf %1668, %1669 : vector<8x8xf32>
    %1671 = vector.extract_strided_slice %1583 {offsets = [0, 6], sizes = [8, 1], strides = [1, 1]} : vector<8x8xf32> to vector<8x1xf32>
    %1672 = vector.broadcast %1671 : vector<8x1xf32> to vector<8x8xf32>
    %1673 = vector.broadcast %1617 : vector<1x8xf32> to vector<8x8xf32>
    %1674 = arith.mulf %1672, %1673 : vector<8x8xf32>
    %1675 = vector.extract_strided_slice %1583 {offsets = [0, 7], sizes = [8, 1], strides = [1, 1]} : vector<8x8xf32> to vector<8x1xf32>
    %1676 = vector.broadcast %1675 : vector<8x1xf32> to vector<8x8xf32>
    %1677 = vector.broadcast %1621 : vector<1x8xf32> to vector<8x8xf32>
    %1678 = arith.mulf %1676, %1677 : vector<8x8xf32>
    %1679 = arith.addf %1650, %1654 : vector<8x8xf32>
    %1680 = arith.addf %1658, %1662 : vector<8x8xf32>
    %1681 = arith.addf %1666, %1670 : vector<8x8xf32>
    %1682 = arith.addf %1674, %1678 : vector<8x8xf32>
    %1683 = arith.addf %1679, %1680 : vector<8x8xf32>
    %1684 = arith.addf %1681, %1682 : vector<8x8xf32>
    %1685 = arith.addf %1683, %1684 : vector<8x8xf32>
    %1686 = arith.addf %1685, %1640 : vector<8x8xf32>
    %1687 = math.tanh %1686 : vector<8x8xf32>
    %cst_192 = arith.constant dense<0.000000e+00> : vector<8xf32>
    %1688 = vector.multi_reduction <add>, %1687, %cst_192 [1] : vector<8x8xf32> to vector<8xf32>
    %1689 = vector.shape_cast %1688 : vector<8xf32> to vector<8x1xf32>
    %cst_193 = arith.constant 1.250000e-01 : f32
    %1690 = vector.broadcast %cst_193 : f32 to vector<8x1xf32>
    %1691 = arith.mulf %1689, %1690 : vector<8x1xf32>
    %1692 = arith.mulf %1687, %1687 : vector<8x8xf32>
    %cst_194 = arith.constant dense<0.000000e+00> : vector<8xf32>
    %1693 = vector.multi_reduction <add>, %1692, %cst_194 [1] : vector<8x8xf32> to vector<8xf32>
    %1694 = vector.shape_cast %1693 : vector<8xf32> to vector<8x1xf32>
    %cst_195 = arith.constant 1.250000e-01 : f32
    %1695 = vector.broadcast %cst_195 : f32 to vector<8x1xf32>
    %1696 = arith.mulf %1694, %1695 : vector<8x1xf32>
    %1697 = arith.mulf %1691, %1691 : vector<8x1xf32>
    %1698 = arith.subf %1696, %1697 : vector<8x1xf32>
    %1699 = vector.broadcast %1691 : vector<8x1xf32> to vector<8x8xf32>
    %1700 = arith.subf %1687, %1699 : vector<8x8xf32>
    %cst_196 = arith.constant 9.99999974E-6 : f32
    %1701 = vector.broadcast %cst_196 : f32 to vector<8x1xf32>
    %1702 = arith.addf %1698, %1701 : vector<8x1xf32>
    %1703 = math.rsqrt %1702 : vector<8x1xf32>
    %1704 = vector.broadcast %1703 : vector<8x1xf32> to vector<8x8xf32>
    %1705 = arith.mulf %1700, %1704 : vector<8x8xf32>
    %1706 = vector.extract_strided_slice %1705 {offsets = [0, 0], sizes = [8, 1], strides = [1, 1]} : vector<8x8xf32> to vector<8x1xf32>
    %1707 = vector.broadcast %1706 : vector<8x1xf32> to vector<8x8xf32>
    %1708 = vector.broadcast %1622 : vector<1x8xf32> to vector<8x8xf32>
    %1709 = arith.mulf %1707, %1708 : vector<8x8xf32>
    %1710 = vector.extract_strided_slice %1705 {offsets = [0, 1], sizes = [8, 1], strides = [1, 1]} : vector<8x8xf32> to vector<8x1xf32>
    %1711 = vector.broadcast %1710 : vector<8x1xf32> to vector<8x8xf32>
    %1712 = vector.broadcast %1623 : vector<1x8xf32> to vector<8x8xf32>
    %1713 = arith.mulf %1711, %1712 : vector<8x8xf32>
    %1714 = vector.extract_strided_slice %1705 {offsets = [0, 2], sizes = [8, 1], strides = [1, 1]} : vector<8x8xf32> to vector<8x1xf32>
    %1715 = vector.broadcast %1714 : vector<8x1xf32> to vector<8x8xf32>
    %1716 = vector.broadcast %1624 : vector<1x8xf32> to vector<8x8xf32>
    %1717 = arith.mulf %1715, %1716 : vector<8x8xf32>
    %1718 = vector.extract_strided_slice %1705 {offsets = [0, 3], sizes = [8, 1], strides = [1, 1]} : vector<8x8xf32> to vector<8x1xf32>
    %1719 = vector.broadcast %1718 : vector<8x1xf32> to vector<8x8xf32>
    %1720 = vector.broadcast %1625 : vector<1x8xf32> to vector<8x8xf32>
    %1721 = arith.mulf %1719, %1720 : vector<8x8xf32>
    %1722 = vector.extract_strided_slice %1705 {offsets = [0, 4], sizes = [8, 1], strides = [1, 1]} : vector<8x8xf32> to vector<8x1xf32>
    %1723 = vector.broadcast %1722 : vector<8x1xf32> to vector<8x8xf32>
    %1724 = vector.broadcast %1626 : vector<1x8xf32> to vector<8x8xf32>
    %1725 = arith.mulf %1723, %1724 : vector<8x8xf32>
    %1726 = vector.extract_strided_slice %1705 {offsets = [0, 5], sizes = [8, 1], strides = [1, 1]} : vector<8x8xf32> to vector<8x1xf32>
    %1727 = vector.broadcast %1726 : vector<8x1xf32> to vector<8x8xf32>
    %1728 = vector.broadcast %1627 : vector<1x8xf32> to vector<8x8xf32>
    %1729 = arith.mulf %1727, %1728 : vector<8x8xf32>
    %1730 = vector.extract_strided_slice %1705 {offsets = [0, 6], sizes = [8, 1], strides = [1, 1]} : vector<8x8xf32> to vector<8x1xf32>
    %1731 = vector.broadcast %1730 : vector<8x1xf32> to vector<8x8xf32>
    %1732 = vector.broadcast %1628 : vector<1x8xf32> to vector<8x8xf32>
    %1733 = arith.mulf %1731, %1732 : vector<8x8xf32>
    %1734 = vector.extract_strided_slice %1705 {offsets = [0, 7], sizes = [8, 1], strides = [1, 1]} : vector<8x8xf32> to vector<8x1xf32>
    %1735 = vector.broadcast %1734 : vector<8x1xf32> to vector<8x8xf32>
    %1736 = vector.broadcast %1629 : vector<1x8xf32> to vector<8x8xf32>
    %1737 = arith.mulf %1735, %1736 : vector<8x8xf32>
    %1738 = arith.addf %1709, %1713 : vector<8x8xf32>
    %1739 = arith.addf %1717, %1721 : vector<8x8xf32>
    %1740 = arith.addf %1725, %1729 : vector<8x8xf32>
    %1741 = arith.addf %1733, %1737 : vector<8x8xf32>
    %1742 = arith.addf %1738, %1739 : vector<8x8xf32>
    %1743 = arith.addf %1740, %1741 : vector<8x8xf32>
    %1744 = arith.addf %1742, %1743 : vector<8x8xf32>
    %1745 = arith.addf %1744, %1643 : vector<8x8xf32>
    %1746 = math.tanh %1745 : vector<8x8xf32>
    %cst_197 = arith.constant dense<0.000000e+00> : vector<8xf32>
    %1747 = vector.multi_reduction <add>, %1746, %cst_197 [1] : vector<8x8xf32> to vector<8xf32>
    %1748 = vector.shape_cast %1747 : vector<8xf32> to vector<8x1xf32>
    %cst_198 = arith.constant 1.250000e-01 : f32
    %1749 = vector.broadcast %cst_198 : f32 to vector<8x1xf32>
    %1750 = arith.mulf %1748, %1749 : vector<8x1xf32>
    %1751 = arith.mulf %1746, %1746 : vector<8x8xf32>
    %cst_199 = arith.constant dense<0.000000e+00> : vector<8xf32>
    %1752 = vector.multi_reduction <add>, %1751, %cst_199 [1] : vector<8x8xf32> to vector<8xf32>
    %1753 = vector.shape_cast %1752 : vector<8xf32> to vector<8x1xf32>
    %cst_200 = arith.constant 1.250000e-01 : f32
    %1754 = vector.broadcast %cst_200 : f32 to vector<8x1xf32>
    %1755 = arith.mulf %1753, %1754 : vector<8x1xf32>
    %1756 = arith.mulf %1750, %1750 : vector<8x1xf32>
    %1757 = arith.subf %1755, %1756 : vector<8x1xf32>
    %1758 = vector.broadcast %1750 : vector<8x1xf32> to vector<8x8xf32>
    %1759 = arith.subf %1746, %1758 : vector<8x8xf32>
    %cst_201 = arith.constant 9.99999974E-6 : f32
    %1760 = vector.broadcast %cst_201 : f32 to vector<8x1xf32>
    %1761 = arith.addf %1757, %1760 : vector<8x1xf32>
    %1762 = math.rsqrt %1761 : vector<8x1xf32>
    %1763 = vector.broadcast %1762 : vector<8x1xf32> to vector<8x8xf32>
    %1764 = arith.mulf %1759, %1763 : vector<8x8xf32>
    %1765 = vector.extract_strided_slice %1764 {offsets = [0, 0], sizes = [8, 1], strides = [1, 1]} : vector<8x8xf32> to vector<8x1xf32>
    %1766 = vector.broadcast %1765 : vector<8x1xf32> to vector<8x8xf32>
    %1767 = vector.broadcast %1630 : vector<1x8xf32> to vector<8x8xf32>
    %1768 = arith.mulf %1766, %1767 : vector<8x8xf32>
    %1769 = vector.extract_strided_slice %1764 {offsets = [0, 1], sizes = [8, 1], strides = [1, 1]} : vector<8x8xf32> to vector<8x1xf32>
    %1770 = vector.broadcast %1769 : vector<8x1xf32> to vector<8x8xf32>
    %1771 = vector.broadcast %1631 : vector<1x8xf32> to vector<8x8xf32>
    %1772 = arith.mulf %1770, %1771 : vector<8x8xf32>
    %1773 = vector.extract_strided_slice %1764 {offsets = [0, 2], sizes = [8, 1], strides = [1, 1]} : vector<8x8xf32> to vector<8x1xf32>
    %1774 = vector.broadcast %1773 : vector<8x1xf32> to vector<8x8xf32>
    %1775 = vector.broadcast %1632 : vector<1x8xf32> to vector<8x8xf32>
    %1776 = arith.mulf %1774, %1775 : vector<8x8xf32>
    %1777 = vector.extract_strided_slice %1764 {offsets = [0, 3], sizes = [8, 1], strides = [1, 1]} : vector<8x8xf32> to vector<8x1xf32>
    %1778 = vector.broadcast %1777 : vector<8x1xf32> to vector<8x8xf32>
    %1779 = vector.broadcast %1633 : vector<1x8xf32> to vector<8x8xf32>
    %1780 = arith.mulf %1778, %1779 : vector<8x8xf32>
    %1781 = vector.extract_strided_slice %1764 {offsets = [0, 4], sizes = [8, 1], strides = [1, 1]} : vector<8x8xf32> to vector<8x1xf32>
    %1782 = vector.broadcast %1781 : vector<8x1xf32> to vector<8x8xf32>
    %1783 = vector.broadcast %1634 : vector<1x8xf32> to vector<8x8xf32>
    %1784 = arith.mulf %1782, %1783 : vector<8x8xf32>
    %1785 = vector.extract_strided_slice %1764 {offsets = [0, 5], sizes = [8, 1], strides = [1, 1]} : vector<8x8xf32> to vector<8x1xf32>
    %1786 = vector.broadcast %1785 : vector<8x1xf32> to vector<8x8xf32>
    %1787 = vector.broadcast %1635 : vector<1x8xf32> to vector<8x8xf32>
    %1788 = arith.mulf %1786, %1787 : vector<8x8xf32>
    %1789 = vector.extract_strided_slice %1764 {offsets = [0, 6], sizes = [8, 1], strides = [1, 1]} : vector<8x8xf32> to vector<8x1xf32>
    %1790 = vector.broadcast %1789 : vector<8x1xf32> to vector<8x8xf32>
    %1791 = vector.broadcast %1636 : vector<1x8xf32> to vector<8x8xf32>
    %1792 = arith.mulf %1790, %1791 : vector<8x8xf32>
    %1793 = vector.extract_strided_slice %1764 {offsets = [0, 7], sizes = [8, 1], strides = [1, 1]} : vector<8x8xf32> to vector<8x1xf32>
    %1794 = vector.broadcast %1793 : vector<8x1xf32> to vector<8x8xf32>
    %1795 = vector.broadcast %1637 : vector<1x8xf32> to vector<8x8xf32>
    %1796 = arith.mulf %1794, %1795 : vector<8x8xf32>
    %1797 = arith.addf %1768, %1772 : vector<8x8xf32>
    %1798 = arith.addf %1776, %1780 : vector<8x8xf32>
    %1799 = arith.addf %1784, %1788 : vector<8x8xf32>
    %1800 = arith.addf %1792, %1796 : vector<8x8xf32>
    %1801 = arith.addf %1797, %1798 : vector<8x8xf32>
    %1802 = arith.addf %1799, %1800 : vector<8x8xf32>
    %1803 = arith.addf %1801, %1802 : vector<8x8xf32>
    %1804 = arith.addf %1803, %1646 : vector<8x8xf32>
    %1805 = arith.negf %1804 : vector<8x8xf32>
    %1806 = math.exp %1805 : vector<8x8xf32>
    %cst_202 = arith.constant 1.000000e+00 : f32
    %1807 = vector.broadcast %cst_202 : f32 to vector<8x8xf32>
    %1808 = arith.addf %1807, %1806 : vector<8x8xf32>
    %1809 = arith.divf %1807, %1808 : vector<8x8xf32>
    %1810 = tpu.concatenate %227, %453, %679, %905, %1131, %1357, %1583, %1809 in 1 : vector<8x8xf32>, vector<8x8xf32>, vector<8x8xf32>, vector<8x8xf32>, vector<8x8xf32>, vector<8x8xf32>, vector<8x8xf32>, vector<8x8xf32> -> vector<8x64xf32>
    %c0_203 = arith.constant 0 : index
    %c0_204 = arith.constant 0 : index
    %1811 = vector.load %arg8[%c0_203, %c0_204] : memref<8x64xf32, #tpu.memory_space<vmem>>, vector<8x64xf32>
    tpu.vector_store %arg8[%c0_203, %c0_204], %1810 {strides = array<i32>} : memref<8x64xf32, #tpu.memory_space<vmem>>, vector<8x64xf32>,
    return
  }
}

</mosaic_0001>

<llo_original>
// kernel: actor_forward.1
$region0: #{actor_forward.1}
  #allocation0 [shape = 'u32[]', space=smem, size = 0x4, offset = 0x4, fixed_abs, tag = 'smem constant byte address 0x4 - core index']
  #allocation1 [shape = 'u32[72,128]{1,0:T(1,128)}', space=vmem, size = 0x9000, scoped, tag = 'internal scratch']
  %s0 = inlined_call_operand.hbm [shape: f32[8,8], index: 0, kind: input, shape index: {}]
  %s1 = inlined_call_operand.hbm [shape: f32[8,8], index: 1, kind: input, shape index: {}]
  %s2 = inlined_call_operand.hbm [shape: f32[8,8,8], index: 2, kind: input, shape index: {}]
  %s3 = inlined_call_operand.hbm [shape: f32[8,8], index: 3, kind: input, shape index: {}]
  %s4 = inlined_call_operand.hbm [shape: f32[8,8,8], index: 4, kind: input, shape index: {}]
  %s5 = inlined_call_operand.hbm [shape: f32[8,8], index: 5, kind: input, shape index: {}]
  %s6 = inlined_call_operand.hbm [shape: f32[8,8,8], index: 6, kind: input, shape index: {}]
  %s7 = inlined_call_operand.hbm [shape: f32[8,8], index: 7, kind: input, shape index: {}]
  %s8 = inlined_call_operand.vmem [shape: f32[8,64], index: 8, kind: output, shape index: {}]
  %s9 = sld [smem:[#allocation0]]
  $region74: #{actor_forward.1} parent=0
    _
  %s11 = ssub.s32 1, %s9
  %s12 = scalar_select 0, %s11, %s9
  $region1: #{actor_forward.1} parent=0
    #allocation2 [shape = 'u8[4096]{0}', space=vmem, size = 0x1000, scoped, tag = 'input window, operand 0, single buffered']
    #allocation3 [shape = 's32[1]{0}', space=sflag, size = 0x4, scoped, tag = 'scoped memory for actor_forward.1']
    #allocation4 [shape = 'u8[4096]{0}', space=vmem, size = 0x1000, scoped, tag = 'input window, operand 1, single buffered']
    #allocation5 [shape = 's32[1]{0}', space=sflag, size = 0x4, scoped, tag = 'scoped memory for actor_forward.1']
    #allocation6 [shape = 'u8[32768]{0}', space=vmem, size = 0x8000, scoped, tag = 'input window, operand 2, single buffered']
    #allocation7 [shape = 'u8[4096]{0}', space=vmem, size = 0x1000, scoped, tag = 'input window, operand 3, single buffered']
    #allocation8 [shape = 's32[1]{0}', space=sflag, size = 0x4, scoped, tag = 'scoped memory for actor_forward.1']
    #allocation9 [shape = 'u8[32768]{0}', space=vmem, size = 0x8000, scoped, tag = 'input window, operand 4, single buffered']
    #allocation10 [shape = 'u8[4096]{0}', space=vmem, size = 0x1000, scoped, tag = 'input window, operand 5, single buffered']
    #allocation11 [shape = 's32[1]{0}', space=sflag, size = 0x4, scoped, tag = 'scoped memory for actor_forward.1']
    #allocation12 [shape = 'u8[32768]{0}', space=vmem, size = 0x8000, scoped, tag = 'input window, operand 6, single buffered']
    #allocation13 [shape = 'u8[4096]{0}', space=vmem, size = 0x1000, scoped, tag = 'input window, operand 7, single buffered']
    #allocation14 [shape = 's32[1]{0}', space=sflag, size = 0x4, scoped, tag = 'scoped memory for actor_forward.1']
    %13 = vsyncpa [#allocation3], 0
    %14 = vsyncpa [#allocation5], 0
    %15 = vsyncpa [#allocation8], 0
    %16 = vsyncpa [#allocation11], 0
    %17 = vsyncpa [#allocation14], 0
    // Predicated region
    $region2: #{actor_forward.1} parent=1 // pred_check
      _
    $region3: #{actor_forward.1} parent=1 // pred_check_branch
      %19 = sbr.rel (0) target = $region5
    $region4: #{actor_forward.1} parent=1 // pred_region
      %21 = vsyncadd [#allocation3], 0
      %s23 = sshll.u32 %s0, 4
      %s24 = int_to_ptr.hbm [resolvable:$true] %s23
      %s25 = sshll.u32 [#allocation2], 4
      %s26 = int_to_ptr.vmem [resolvable:$true] %s25
      %28 = dma.hbm_to_vmem [thread:$0]  %s24, 128, %s26, [#allocation3]
    $region5: #{actor_forward.1} parent=1 // pred_fallthru
      _
    // Predicated region
    $region6: #{actor_forward.1} parent=1 // pred_check
      _
    $region7: #{actor_forward.1} parent=1 // pred_check_branch
      %30 = sbr.rel (0) target = $region9
    $region8: #{actor_forward.1} parent=1 // pred_region
      %32 = vsyncadd [#allocation5], 0
      %s34 = sshll.u32 %s1, 4
      %s35 = int_to_ptr.hbm [resolvable:$true] %s34
      %s36 = sshll.u32 [#allocation4], 4
      %s37 = int_to_ptr.vmem [resolvable:$true] %s36
      %39 = dma.hbm_to_vmem [thread:$0]  %s35, 128, %s37, [#allocation5]
    $region9: #{actor_forward.1} parent=1 // pred_fallthru
      _
    // Predicated region
    $region10: #{actor_forward.1} parent=1 // pred_check
      _
    $region11: #{actor_forward.1} parent=1 // pred_check_branch
      %41 = sbr.rel (0) target = $region13
    $region12: #{actor_forward.1} parent=1 // pred_region
      %43 = vsyncadd [#allocation5], 0
      %s44 = sshll.u32 %s2, 4
      %s45 = int_to_ptr.hbm [resolvable:$true] %s44
      %s46 = sshll.u32 [#allocation6], 4
      %s47 = int_to_ptr.vmem [resolvable:$true] %s46
      %52 = dma.hbm_to_vmem [thread:$0]  %s45, 1024, %s47, [#allocation5], 128, 128, 8
    $region13: #{actor_forward.1} parent=1 // pred_fallthru
      _
    // Predicated region
    $region14: #{actor_forward.1} parent=1 // pred_check
      _
    $region15: #{actor_forward.1} parent=1 // pred_check_branch
      %54 = sbr.rel (0) target = $region17
    $region16: #{actor_forward.1} parent=1 // pred_region
      %56 = vsyncadd [#allocation8], 0
      %s58 = sshll.u32 %s3, 4
      %s59 = int_to_ptr.hbm [resolvable:$true] %s58
      %s60 = sshll.u32 [#allocation7], 4
      %s61 = int_to_ptr.vmem [resolvable:$true] %s60
      %63 = dma.hbm_to_vmem [thread:$0]  %s59, 128, %s61, [#allocation8]
    $region17: #{actor_forward.1} parent=1 // pred_fallthru
      _
    // Predicated region
    $region18: #{actor_forward.1} parent=1 // pred_check
      _
    $region19: #{actor_forward.1} parent=1 // pred_check_branch
      %65 = sbr.rel (0) target = $region21
    $region20: #{actor_forward.1} parent=1 // pred_region
      %67 = vsyncadd [#allocation8], 0
      %s68 = sshll.u32 %s4, 4
      %s69 = int_to_ptr.hbm [resolvable:$true] %s68
      %s70 = sshll.u32 [#allocation9], 4
      %s71 = int_to_ptr.vmem [resolvable:$true] %s70
      %76 = dma.hbm_to_vmem [thread:$0]  %s69, 1024, %s71, [#allocation8], 128, 128, 8
    $region21: #{actor_forward.1} parent=1 // pred_fallthru
      _
    // Predicated region
    $region22: #{actor_forward.1} parent=1 // pred_check
      _
    $region23: #{actor_forward.1} parent=1 // pred_check_branch
      %78 = sbr.rel (0) target = $region25
    $region24: #{actor_forward.1} parent=1 // pred_region
      %80 = vsyncadd [#allocation11], 0
      %s82 = sshll.u32 %s5, 4
      %s83 = int_to_ptr.hbm [resolvable:$true] %s82
      %s84 = sshll.u32 [#allocation10], 4
      %s85 = int_to_ptr.vmem [resolvable:$true] %s84
      %87 = dma.hbm_to_vmem [thread:$0]  %s83, 128, %s85, [#allocation11]
    $region25: #{actor_forward.1} parent=1 // pred_fallthru
      _
    // Predicated region
    $region26: #{actor_forward.1} parent=1 // pred_check
      _
    $region27: #{actor_forward.1} parent=1 // pred_check_branch
      %89 = sbr.rel (0) target = $region29
    $region28: #{actor_forward.1} parent=1 // pred_region
      %91 = vsyncadd [#allocation11], 0
      %s92 = sshll.u32 %s6, 4
      %s93 = int_to_ptr.hbm [resolvable:$true] %s92
      %s94 = sshll.u32 [#allocation12], 4
      %s95 = int_to_ptr.vmem [resolvable:$true] %s94
      %100 = dma.hbm_to_vmem [thread:$0]  %s93, 1024, %s95, [#allocation11], 128, 128, 8
    $region29: #{actor_forward.1} parent=1 // pred_fallthru
      _
    // Predicated region
    $region30: #{actor_forward.1} parent=1 // pred_check
      _
    $region31: #{actor_forward.1} parent=1 // pred_check_branch
      %102 = sbr.rel (0) target = $region33
    $region32: #{actor_forward.1} parent=1 // pred_region
      %104 = vsyncadd [#allocation14], 0
      %s106 = sshll.u32 %s7, 4
      %s107 = int_to_ptr.hbm [resolvable:$true] %s106
      %s108 = sshll.u32 [#allocation13], 4
      %s109 = int_to_ptr.vmem [resolvable:$true] %s108
      %111 = dma.hbm_to_vmem [thread:$0]  %s107, 128, %s109, [#allocation14]
    $region33: #{actor_forward.1} parent=1 // pred_fallthru
      _
    // Predicated region
    $region34: #{actor_forward.1} parent=1 // pred_check
      _
    $region35: #{actor_forward.1} parent=1 // pred_check_branch
      %113 = sbr.rel (0) target = $region37
    $region36: #{actor_forward.1} parent=1 // pred_region
      %115 = dma.done [#allocation3], 128
    $region37: #{actor_forward.1} parent=1 // pred_fallthru
      _
    // Predicated region
    $region38: #{actor_forward.1} parent=1 // pred_check
      _
    $region39: #{actor_forward.1} parent=1 // pred_check_branch
      %117 = sbr.rel (0) target = $region41
    $region40: #{actor_forward.1} parent=1 // pred_region
      %119 = dma.done [#allocation5], 128
    $region41: #{actor_forward.1} parent=1 // pred_fallthru
      _
    // Predicated region
    $region42: #{actor_forward.1} parent=1 // pred_check
      _
    $region43: #{actor_forward.1} parent=1 // pred_check_branch
      %121 = sbr.rel (0) target = $region45
    $region44: #{actor_forward.1} parent=1 // pred_region
      %123 = dma.done [#allocation5], 1024
    $region45: #{actor_forward.1} parent=1 // pred_fallthru
      _
    // Predicated region
    $region46: #{actor_forward.1} parent=1 // pred_check
      _
    $region47: #{actor_forward.1} parent=1 // pred_check_branch
      %125 = sbr.rel (0) target = $region49
    $region48: #{actor_forward.1} parent=1 // pred_region
      %127 = dma.done [#allocation8], 128
    $region49: #{actor_forward.1} parent=1 // pred_fallthru
      _
    // Predicated region
    $region50: #{actor_forward.1} parent=1 // pred_check
      _
    $region51: #{actor_forward.1} parent=1 // pred_check_branch
      %129 = sbr.rel (0) target = $region53
    $region52: #{actor_forward.1} parent=1 // pred_region
      %131 = dma.done [#allocation8], 1024
    $region53: #{actor_forward.1} parent=1 // pred_fallthru
      _
    // Predicated region
    $region54: #{actor_forward.1} parent=1 // pred_check
      _
    $region55: #{actor_forward.1} parent=1 // pred_check_branch
      %133 = sbr.rel (0) target = $region57
    $region56: #{actor_forward.1} parent=1 // pred_region
      %135 = dma.done [#allocation11], 128
    $region57: #{actor_forward.1} parent=1 // pred_fallthru
      _
    // Predicated region
    $region58: #{actor_forward.1} parent=1 // pred_check
      _
    $region59: #{actor_forward.1} parent=1 // pred_check_branch
      %137 = sbr.rel (0) target = $region61
    $region60: #{actor_forward.1} parent=1 // pred_region
      %139 = dma.done [#allocation11], 1024
    $region61: #{actor_forward.1} parent=1 // pred_fallthru
      _
    // Predicated region
    $region62: #{actor_forward.1} parent=1 // pred_check
      _
    $region63: #{actor_forward.1} parent=1 // pred_check_branch
      %141 = sbr.rel (0) target = $region65
    $region64: #{actor_forward.1} parent=1 // pred_region
      %143 = dma.done [#allocation14], 128
    $region65: #{actor_forward.1} parent=1 // pred_fallthru
      _
    %v144 = vld [vmem:[#allocation2] sm:$0xff]
    %v145 = vld [vmem:[#allocation4] sm:$0xff]
    %v146 = vld [vmem:[#allocation6] sm:$0xff]
    %v147 = vld [vmem:[#allocation9] sm:$0xff]
    %v148 = vld [vmem:[#allocation12] sm:$0xff]
    %150 = vset.pattern.permute.xlu0 0
    %151 = vperm.xlu0 %150, %v145
    %v152 = vpop.permute.xlu0 %151
    %v154 = vmul.f32 %v152, %v146
    %155 = vset.pattern.permute.xlu0 1
    %156 = vperm.xlu0 %155, %v145
    %v157 = vpop.permute.xlu0 %156
    %v160 = vrot.slane %v146, 1
    %v162 = vmul.f32 %v157, %v160
    %163 = vset.pattern.permute.xlu0 2
    %164 = vperm.xlu0 %163, %v145
    %v165 = vpop.permute.xlu0 %164
    %v167 = vrot.slane %v146, 2
    %v169 = vmul.f32 %v165, %v167
    %170 = vset.pattern.permute.xlu0 3
    %171 = vperm.xlu0 %170, %v145
    %v172 = vpop.permute.xlu0 %171
    %v174 = vrot.slane %v146, 3
    %v176 = vmul.f32 %v172, %v174
    %177 = vset.pattern.permute.xlu0 4
    %178 = vperm.xlu0 %177, %v145
    %v179 = vpop.permute.xlu0 %178
    %v181 = vrot.slane %v146, 4
    %v183 = vmul.f32 %v179, %v181
    %184 = vset.pattern.permute.xlu0 5
    %185 = vperm.xlu0 %184, %v145
    %v186 = vpop.permute.xlu0 %185
    %v188 = vrot.slane %v146, 5
    %v190 = vmul.f32 %v186, %v188
    %191 = vset.pattern.permute.xlu0 6
    %192 = vperm.xlu0 %191, %v145
    %v193 = vpop.permute.xlu0 %192
    %v195 = vrot.slane %v146, 6
    %v197 = vmul.f32 %v193, %v195
    %198 = vset.pattern.permute.xlu0 7
    %199 = vperm.xlu0 %198, %v145
    %v200 = vpop.permute.xlu0 %199
    %v202 = vrot.slane %v146, 7
    %v204 = vmul.f32 %v200, %v202
    %v205 = vld [vmem:[#allocation7] sm:$0x1]
    %v206 = vperm.slane %v205, 0
    %v207 = vld [vmem:[#allocation10] sm:$0x1]
    %v208 = vperm.slane %v207, 0
    %v209 = vld [vmem:[#allocation13] sm:$0x1]
    %v210 = vperm.slane %v209, 0
    %212 = vset.pattern.permute.xlu0 0
    %213 = vperm.xlu0 %212, %v144
    %v214 = vpop.permute.xlu0 %213
    %v216 = vperm.slane %v154, 0
    %v217 = vmul.f32 %v214, %v216
    %218 = vset.pattern.permute.xlu0 1
    %219 = vperm.xlu0 %218, %v144
    %v220 = vpop.permute.xlu0 %219
    %v222 = vperm.slane %v162, 0
    %v223 = vmul.f32 %v220, %v222
    %224 = vset.pattern.permute.xlu0 2
    %225 = vperm.xlu0 %224, %v144
    %v226 = vpop.permute.xlu0 %225
    %v228 = vperm.slane %v169, 0
    %v229 = vmul.f32 %v226, %v228
    %230 = vset.pattern.permute.xlu0 3
    %231 = vperm.xlu0 %230, %v144
    %v232 = vpop.permute.xlu0 %231
    %v234 = vperm.slane %v176, 0
    %v235 = vmul.f32 %v232, %v234
    %236 = vset.pattern.permute.xlu0 4
    %237 = vperm.xlu0 %236, %v144
    %v238 = vpop.permute.xlu0 %237
    %v240 = vperm.slane %v183, 0
    %v241 = vmul.f32 %v238, %v240
    %242 = vset.pattern.permute.xlu0 5
    %243 = vperm.xlu0 %242, %v144
    %v244 = vpop.permute.xlu0 %243
    %v246 = vperm.slane %v190, 0
    %v247 = vmul.f32 %v244, %v246
    %248 = vset.pattern.permute.xlu0 6
    %249 = vperm.xlu0 %248, %v144
    %v250 = vpop.permute.xlu0 %249
    %v252 = vperm.slane %v197, 0
    %v253 = vmul.f32 %v250, %v252
    %254 = vset.pattern.permute.xlu0 7
    %255 = vperm.xlu0 %254, %v144
    %v256 = vpop.permute.xlu0 %255
    %v258 = vperm.slane %v204, 0
    %v259 = vmul.f32 %v256, %v258
    %v260 = vadd.f32 %v217, %v223
    %v261 = vadd.f32 %v229, %v235
    %v262 = vadd.f32 %v241, %v247
    %v263 = vadd.f32 %v253, %v259
    %v264 = vadd.f32 %v260, %v261
    %v265 = vadd.f32 %v262, %v263
    %v266 = vadd.f32 %v264, %v265
    %v267 = vadd.f32 %v266, %v206
    %v268 = vtanh.pop %v267
    %vm269 = vcmask 64512
    %v270 = vsel %vm269, %v268, 0.0
    %271 = vadd.xlane.f32.xlu0 %v270
    %v272 = vpop.xlane.xlu0 %271
    %v273 = vmul.f32 %v272, 0.125
    %v274 = vmul.f32 %v268, %v268
    %v275 = vsel %vm269, %v274, 0.0
    %276 = vadd.xlane.f32.xlu0 %v275
    %v277 = vpop.xlane.xlu0 %276
    %v278 = vmul.f32 %v277, 0.125
    %v279 = vmul.f32 %v273, %v273
    %v280 = vsub.f32 %v278, %v279
    %v281 = vsub.f32 %v268, %v273
    %v282 = vadd.f32 %v280, 1e-05
    %v283 = vrsqrt.pop %v282
    %v284 = vmul.f32 %v283, %v282
    %v285 = vmul.f32 %v284, %v283
    %v286 = vmul.f32 0.5, %v285
    %v287 = vsub.f32 1.5, %v286
    %v288 = vmul.f32 %v283, %v287
    %vm289 = vweird.f32 %v282
    %vm290 = vweird.f32 %v283
    %vm291 = vmor %vm289, %vm290
    %v292 = vsel %vm291, %v283, %v288
    %v293 = vmul.f32 %v281, %v292
    %295 = vset.pattern.permute.xlu0 0
    %296 = vperm.xlu0 %295, %v293
    %v297 = vpop.permute.xlu0 %296
    %v299 = vperm.slane %v147, 0
    %v300 = vmul.f32 %v297, %v299
    %301 = vset.pattern.permute.xlu0 1
    %302 = vperm.xlu0 %301, %v293
    %v303 = vpop.permute.xlu0 %302
    %v305 = vperm.slane %v147, 1
    %v306 = vmul.f32 %v303, %v305
    %307 = vset.pattern.permute.xlu0 2
    %308 = vperm.xlu0 %307, %v293
    %v309 = vpop.permute.xlu0 %308
    %v311 = vperm.slane %v147, 2
    %v312 = vmul.f32 %v309, %v311
    %313 = vset.pattern.permute.xlu0 3
    %314 = vperm.xlu0 %313, %v293
    %v315 = vpop.permute.xlu0 %314
    %v317 = vperm.slane %v147, 3
    %v318 = vmul.f32 %v315, %v317
    %319 = vset.pattern.permute.xlu0 4
    %320 = vperm.xlu0 %319, %v293
    %v321 = vpop.permute.xlu0 %320
    %v323 = vperm.slane %v147, 4
    %v324 = vmul.f32 %v321, %v323
    %325 = vset.pattern.permute.xlu0 5
    %326 = vperm.xlu0 %325, %v293
    %v327 = vpop.permute.xlu0 %326
    %v329 = vperm.slane %v147, 5
    %v330 = vmul.f32 %v327, %v329
    %331 = vset.pattern.permute.xlu0 6
    %332 = vperm.xlu0 %331, %v293
    %v333 = vpop.permute.xlu0 %332
    %v335 = vperm.slane %v147, 6
    %v336 = vmul.f32 %v333, %v335
    %337 = vset.pattern.permute.xlu0 7
    %338 = vperm.xlu0 %337, %v293
    %v339 = vpop.permute.xlu0 %338
    %v341 = vperm.slane %v147, 7
    %v342 = vmul.f32 %v339, %v341
    %v343 = vadd.f32 %v300, %v306
    %v344 = vadd.f32 %v312, %v318
    %v345 = vadd.f32 %v324, %v330
    %v346 = vadd.f32 %v336, %v342
    %v347 = vadd.f32 %v343, %v344
    %v348 = vadd.f32 %v345, %v346
    %v349 = vadd.f32 %v347, %v348
    %v350 = vadd.f32 %v349, %v208
    %v351 = vtanh.pop %v350
    %v352 = vsel %vm269, %v351, 0.0
    %353 = vadd.xlane.f32.xlu0 %v352
    %v354 = vpop.xlane.xlu0 %353
    %v355 = vmul.f32 %v354, 0.125
    %v356 = vmul.f32 %v351, %v351
    %v357 = vsel %vm269, %v356, 0.0
    %358 = vadd.xlane.f32.xlu0 %v357
    %v359 = vpop.xlane.xlu0 %358
    %v360 = vmul.f32 %v359, 0.125
    %v361 = vmul.f32 %v355, %v355
    %v362 = vsub.f32 %v360, %v361
    %v363 = vsub.f32 %v351, %v355
    %v364 = vadd.f32 %v362, 1e-05
    %v365 = vrsqrt.pop %v364
    %v366 = vmul.f32 %v365, %v364
    %v367 = vmul.f32 %v366, %v365
    %v368 = vmul.f32 0.5, %v367
    %v369 = vsub.f32 1.5, %v368
    %v370 = vmul.f32 %v365, %v369
    %vm371 = vweird.f32 %v364
    %vm372 = vweird.f32 %v365
    %vm373 = vmor %vm371, %vm372
    %v374 = vsel %vm373, %v365, %v370
    %v375 = vmul.f32 %v363, %v374
    %377 = vset.pattern.permute.xlu0 0
    %378 = vperm.xlu0 %377, %v375
    %v379 = vpop.permute.xlu0 %378
    %v381 = vperm.slane %v148, 0
    %v382 = vmul.f32 %v379, %v381
    %383 = vset.pattern.permute.xlu0 1
    %384 = vperm.xlu0 %383, %v375
    %v385 = vpop.permute.xlu0 %384
    %v387 = vperm.slane %v148, 1
    %v388 = vmul.f32 %v385, %v387
    %389 = vset.pattern.permute.xlu0 2
    %390 = vperm.xlu0 %389, %v375
    %v391 = vpop.permute.xlu0 %390
    %v393 = vperm.slane %v148, 2
    %v394 = vmul.f32 %v391, %v393
    %395 = vset.pattern.permute.xlu0 3
    %396 = vperm.xlu0 %395, %v375
    %v397 = vpop.permute.xlu0 %396
    %v399 = vperm.slane %v148, 3
    %v400 = vmul.f32 %v397, %v399
    %401 = vset.pattern.permute.xlu0 4
    %402 = vperm.xlu0 %401, %v375
    %v403 = vpop.permute.xlu0 %402
    %v405 = vperm.slane %v148, 4
    %v406 = vmul.f32 %v403, %v405
    %407 = vset.pattern.permute.xlu0 5
    %408 = vperm.xlu0 %407, %v375
    %v409 = vpop.permute.xlu0 %408
    %v411 = vperm.slane %v148, 5
    %v412 = vmul.f32 %v409, %v411
    %413 = vset.pattern.permute.xlu0 6
    %414 = vperm.xlu0 %413, %v375
    %v415 = vpop.permute.xlu0 %414
    %v417 = vperm.slane %v148, 6
    %v418 = vmul.f32 %v415, %v417
    %419 = vset.pattern.permute.xlu0 7
    %420 = vperm.xlu0 %419, %v375
    %v421 = vpop.permute.xlu0 %420
    %v423 = vperm.slane %v148, 7
    %v424 = vmul.f32 %v421, %v423
    %v425 = vadd.f32 %v382, %v388
    %v426 = vadd.f32 %v394, %v400
    %v427 = vadd.f32 %v406, %v412
    %v428 = vadd.f32 %v418, %v424
    %v429 = vadd.f32 %v425, %v426
    %v430 = vadd.f32 %v427, %v428
    %v431 = vadd.f32 %v429, %v430
    %v432 = vadd.f32 %v431, %v210
    %v433 = vxor.u32 %v432, 2147483648
    %v434 = vmul.f32 %v433, 1.442695
    %v435 = vpow.pop %v434
    %v436 = vadd.f32 %v435, 1.0
    %v437 = vrcp.pop %v436
    %v438 = vmul.f32 %v436, %v437
    %v439 = vsub.f32 1.0, %v438
    %v440 = vmul.f32 %v437, %v439
    %v441 = vadd.f32 %v437, %v440
    %vm442 = vweird.f32 %v436
    %vm443 = vweird.f32 %v437
    %vm444 = vmor %vm442, %vm443
    %v445 = vsel %vm444, %v437, %v441
    %v446 = vand.u32 2147483647, %v436
    %vm447 = vcmp.eq.f32.partialorder %v446, 8.507059e+37
    %v448 = vand.u32 %v436, 2147483648
    %v449 = vor.u32 1.1754944e-38, %v448
    %v450 = vsel %vm447, %v449, %v445
    %v451 = vmul.f32 1.0, %v450
    %s452 = scalar_lea.vmem [#allocation6], 8
    %v453 = vld [vmem:[%s452] sm:$0xff]
    %s454 = scalar_lea.vmem [#allocation9], 8
    %v455 = vld [vmem:[%s454] sm:$0xff]
    %s456 = scalar_lea.vmem [#allocation12], 8
    %v457 = vld [vmem:[%s456] sm:$0xff]
    %v459 = vrot.slane %v453, 7
    %v461 = vmul.f32 %v152, %v459
    %v462 = vmul.f32 %v157, %v453
    %v463 = vrot.slane %v453, 1
    %v465 = vmul.f32 %v165, %v463
    %v466 = vrot.slane %v453, 2
    %v468 = vmul.f32 %v172, %v466
    %v469 = vrot.slane %v453, 3
    %v471 = vmul.f32 %v179, %v469
    %v472 = vrot.slane %v453, 4
    %v474 = vmul.f32 %v186, %v472
    %v475 = vrot.slane %v453, 5
    %v477 = vmul.f32 %v193, %v475
    %v478 = vrot.slane %v453, 6
    %v480 = vmul.f32 %v200, %v478
    %v481 = vld [vmem:[#allocation7 + $0x1] sm:$0x1]
    %v482 = vperm.slane %v481, 0
    %v483 = vld [vmem:[#allocation10 + $0x1] sm:$0x1]
    %v484 = vperm.slane %v483, 0
    %v485 = vld [vmem:[#allocation13 + $0x1] sm:$0x1]
    %v486 = vperm.slane %v485, 0
    %488 = vset.pattern.permute.xlu0 0
    %489 = vperm.xlu0 %488, %v451
    %v490 = vpop.permute.xlu0 %489
    %v492 = vperm.slane %v461, 1
    %v493 = vmul.f32 %v490, %v492
    %494 = vset.pattern.permute.xlu0 1
    %495 = vperm.xlu0 %494, %v451
    %v496 = vpop.permute.xlu0 %495
    %v498 = vperm.slane %v462, 1
    %v499 = vmul.f32 %v496, %v498
    %500 = vset.pattern.permute.xlu0 2
    %501 = vperm.xlu0 %500, %v451
    %v502 = vpop.permute.xlu0 %501
    %v504 = vperm.slane %v465, 1
    %v505 = vmul.f32 %v502, %v504
    %506 = vset.pattern.permute.xlu0 3
    %507 = vperm.xlu0 %506, %v451
    %v508 = vpop.permute.xlu0 %507
    %v510 = vperm.slane %v468, 1
    %v511 = vmul.f32 %v508, %v510
    %512 = vset.pattern.permute.xlu0 4
    %513 = vperm.xlu0 %512, %v451
    %v514 = vpop.permute.xlu0 %513
    %v516 = vperm.slane %v471, 1
    %v517 = vmul.f32 %v514, %v516
    %518 = vset.pattern.permute.xlu0 5
    %519 = vperm.xlu0 %518, %v451
    %v520 = vpop.permute.xlu0 %519
    %v522 = vperm.slane %v474, 1
    %v523 = vmul.f32 %v520, %v522
    %524 = vset.pattern.permute.xlu0 6
    %525 = vperm.xlu0 %524, %v451
    %v526 = vpop.permute.xlu0 %525
    %v528 = vperm.slane %v477, 1
    %v529 = vmul.f32 %v526, %v528
    %530 = vset.pattern.permute.xlu0 7
    %531 = vperm.xlu0 %530, %v451
    %v532 = vpop.permute.xlu0 %531
    %v534 = vperm.slane %v480, 1
    %v535 = vmul.f32 %v532, %v534
    %v536 = vadd.f32 %v493, %v499
    %v537 = vadd.f32 %v505, %v511
    %v538 = vadd.f32 %v517, %v523
    %v539 = vadd.f32 %v529, %v535
    %v540 = vadd.f32 %v536, %v537
    %v541 = vadd.f32 %v538, %v539
    %v542 = vadd.f32 %v540, %v541
    %v543 = vadd.f32 %v542, %v482
    %v544 = vtanh.pop %v543
    %v545 = vsel %vm269, %v544, 0.0
    %546 = vadd.xlane.f32.xlu0 %v545
    %v547 = vpop.xlane.xlu0 %546
    %v548 = vmul.f32 %v547, 0.125
    %v549 = vmul.f32 %v544, %v544
    %v550 = vsel %vm269, %v549, 0.0
    %551 = vadd.xlane.f32.xlu0 %v550
    %v552 = vpop.xlane.xlu0 %551
    %v553 = vmul.f32 %v552, 0.125
    %v554 = vmul.f32 %v548, %v548
    %v555 = vsub.f32 %v553, %v554
    %v556 = vsub.f32 %v544, %v548
    %v557 = vadd.f32 %v555, 1e-05
    %v558 = vrsqrt.pop %v557
    %v559 = vmul.f32 %v558, %v557
    %v560 = vmul.f32 %v559, %v558
    %v561 = vmul.f32 0.5, %v560
    %v562 = vsub.f32 1.5, %v561
    %v563 = vmul.f32 %v558, %v562
    %vm564 = vweird.f32 %v557
    %vm565 = vweird.f32 %v558
    %vm566 = vmor %vm564, %vm565
    %v567 = vsel %vm566, %v558, %v563
    %v568 = vmul.f32 %v556, %v567
    %570 = vset.pattern.permute.xlu0 0
    %571 = vperm.xlu0 %570, %v568
    %v572 = vpop.permute.xlu0 %571
    %v574 = vperm.slane %v455, 0
    %v575 = vmul.f32 %v572, %v574
    %576 = vset.pattern.permute.xlu0 1
    %577 = vperm.xlu0 %576, %v568
    %v578 = vpop.permute.xlu0 %577
    %v580 = vperm.slane %v455, 1
    %v581 = vmul.f32 %v578, %v580
    %582 = vset.pattern.permute.xlu0 2
    %583 = vperm.xlu0 %582, %v568
    %v584 = vpop.permute.xlu0 %583
    %v586 = vperm.slane %v455, 2
    %v587 = vmul.f32 %v584, %v586
    %588 = vset.pattern.permute.xlu0 3
    %589 = vperm.xlu0 %588, %v568
    %v590 = vpop.permute.xlu0 %589
    %v592 = vperm.slane %v455, 3
    %v593 = vmul.f32 %v590, %v592
    %594 = vset.pattern.permute.xlu0 4
    %595 = vperm.xlu0 %594, %v568
    %v596 = vpop.permute.xlu0 %595
    %v598 = vperm.slane %v455, 4
    %v599 = vmul.f32 %v596, %v598
    %600 = vset.pattern.permute.xlu0 5
    %601 = vperm.xlu0 %600, %v568
    %v602 = vpop.permute.xlu0 %601
    %v604 = vperm.slane %v455, 5
    %v605 = vmul.f32 %v602, %v604
    %606 = vset.pattern.permute.xlu0 6
    %607 = vperm.xlu0 %606, %v568
    %v608 = vpop.permute.xlu0 %607
    %v610 = vperm.slane %v455, 6
    %v611 = vmul.f32 %v608, %v610
    %612 = vset.pattern.permute.xlu0 7
    %613 = vperm.xlu0 %612, %v568
    %v614 = vpop.permute.xlu0 %613
    %v616 = vperm.slane %v455, 7
    %v617 = vmul.f32 %v614, %v616
    %v618 = vadd.f32 %v575, %v581
    %v619 = vadd.f32 %v587, %v593
    %v620 = vadd.f32 %v599, %v605
    %v621 = vadd.f32 %v611, %v617
    %v622 = vadd.f32 %v618, %v619
    %v623 = vadd.f32 %v620, %v621
    %v624 = vadd.f32 %v622, %v623
    %v625 = vadd.f32 %v624, %v484
    %v626 = vtanh.pop %v625
    %v627 = vsel %vm269, %v626, 0.0
    %628 = vadd.xlane.f32.xlu0 %v627
    %v629 = vpop.xlane.xlu0 %628
    %v630 = vmul.f32 %v629, 0.125
    %v631 = vmul.f32 %v626, %v626
    %v632 = vsel %vm269, %v631, 0.0
    %633 = vadd.xlane.f32.xlu0 %v632
    %v634 = vpop.xlane.xlu0 %633
    %v635 = vmul.f32 %v634, 0.125
    %v636 = vmul.f32 %v630, %v630
    %v637 = vsub.f32 %v635, %v636
    %v638 = vsub.f32 %v626, %v630
    %v639 = vadd.f32 %v637, 1e-05
    %v640 = vrsqrt.pop %v639
    %v641 = vmul.f32 %v640, %v639
    %v642 = vmul.f32 %v641, %v640
    %v643 = vmul.f32 0.5, %v642
    %v644 = vsub.f32 1.5, %v643
    %v645 = vmul.f32 %v640, %v644
    %vm646 = vweird.f32 %v639
    %vm647 = vweird.f32 %v640
    %vm648 = vmor %vm646, %vm647
    %v649 = vsel %vm648, %v640, %v645
    %v650 = vmul.f32 %v638, %v649
    %652 = vset.pattern.permute.xlu0 0
    %653 = vperm.xlu0 %652, %v650
    %v654 = vpop.permute.xlu0 %653
    %v656 = vperm.slane %v457, 0
    %v657 = vmul.f32 %v654, %v656
    %658 = vset.pattern.permute.xlu0 1
    %659 = vperm.xlu0 %658, %v650
    %v660 = vpop.permute.xlu0 %659
    %v662 = vperm.slane %v457, 1
    %v663 = vmul.f32 %v660, %v662
    %664 = vset.pattern.permute.xlu0 2
    %665 = vperm.xlu0 %664, %v650
    %v666 = vpop.permute.xlu0 %665
    %v668 = vperm.slane %v457, 2
    %v669 = vmul.f32 %v666, %v668
    %670 = vset.pattern.permute.xlu0 3
    %671 = vperm.xlu0 %670, %v650
    %v672 = vpop.permute.xlu0 %671
    %v674 = vperm.slane %v457, 3
    %v675 = vmul.f32 %v672, %v674
    %676 = vset.pattern.permute.xlu0 4
    %677 = vperm.xlu0 %676, %v650
    %v678 = vpop.permute.xlu0 %677
    %v680 = vperm.slane %v457, 4
    %v681 = vmul.f32 %v678, %v680
    %682 = vset.pattern.permute.xlu0 5
    %683 = vperm.xlu0 %682, %v650
    %v684 = vpop.permute.xlu0 %683
    %v686 = vperm.slane %v457, 5
    %v687 = vmul.f32 %v684, %v686
    %688 = vset.pattern.permute.xlu0 6
    %689 = vperm.xlu0 %688, %v650
    %v690 = vpop.permute.xlu0 %689
    %v692 = vperm.slane %v457, 6
    %v693 = vmul.f32 %v690, %v692
    %694 = vset.pattern.permute.xlu0 7
    %695 = vperm.xlu0 %694, %v650
    %v696 = vpop.permute.xlu0 %695
    %v698 = vperm.slane %v457, 7
    %v699 = vmul.f32 %v696, %v698
    %v700 = vadd.f32 %v657, %v663
    %v701 = vadd.f32 %v669, %v675
    %v702 = vadd.f32 %v681, %v687
    %v703 = vadd.f32 %v693, %v699
    %v704 = vadd.f32 %v700, %v701
    %v705 = vadd.f32 %v702, %v703
    %v706 = vadd.f32 %v704, %v705
    %v707 = vadd.f32 %v706, %v486
    %v708 = vxor.u32 %v707, 2147483648
    %v709 = vmul.f32 %v708, 1.442695
    %v710 = vpow.pop %v709
    %v711 = vadd.f32 %v710, 1.0
    %v712 = vrcp.pop %v711
    %v713 = vmul.f32 %v711, %v712
    %v714 = vsub.f32 1.0, %v713
    %v715 = vmul.f32 %v712, %v714
    %v716 = vadd.f32 %v712, %v715
    %vm717 = vweird.f32 %v711
    %vm718 = vweird.f32 %v712
    %vm719 = vmor %vm717, %vm718
    %v720 = vsel %vm719, %v712, %v716
    %v721 = vand.u32 2147483647, %v711
    %vm722 = vcmp.eq.f32.partialorder %v721, 8.507059e+37
    %v723 = vand.u32 %v711, 2147483648
    %v724 = vor.u32 1.1754944e-38, %v723
    %v725 = vsel %vm722, %v724, %v720
    %v726 = vmul.f32 1.0, %v725
    %s727 = scalar_lea.vmem [#allocation6], 16
    %v728 = vld [vmem:[%s727] sm:$0xff]
    %s729 = scalar_lea.vmem [#allocation9], 16
    %v730 = vld [vmem:[%s729] sm:$0xff]
    %s731 = scalar_lea.vmem [#allocation12], 16
    %v732 = vld [vmem:[%s731] sm:$0xff]
    %v734 = vrot.slane %v728, 6
    %v736 = vmul.f32 %v152, %v734
    %v737 = vrot.slane %v728, 7
    %v739 = vmul.f32 %v157, %v737
    %v740 = vmul.f32 %v165, %v728
    %v741 = vrot.slane %v728, 1
    %v743 = vmul.f32 %v172, %v741
    %v744 = vrot.slane %v728, 2
    %v746 = vmul.f32 %v179, %v744
    %v747 = vrot.slane %v728, 3
    %v749 = vmul.f32 %v186, %v747
    %v750 = vrot.slane %v728, 4
    %v752 = vmul.f32 %v193, %v750
    %v753 = vrot.slane %v728, 5
    %v755 = vmul.f32 %v200, %v753
    %v756 = vld [vmem:[#allocation7 + $0x2] sm:$0x1]
    %v757 = vperm.slane %v756, 0
    %v758 = vld [vmem:[#allocation10 + $0x2] sm:$0x1]
    %v759 = vperm.slane %v758, 0
    %v760 = vld [vmem:[#allocation13 + $0x2] sm:$0x1]
    %v761 = vperm.slane %v760, 0
    %763 = vset.pattern.permute.xlu0 0
    %764 = vperm.xlu0 %763, %v726
    %v765 = vpop.permute.xlu0 %764
    %v767 = vperm.slane %v736, 2
    %v768 = vmul.f32 %v765, %v767
    %769 = vset.pattern.permute.xlu0 1
    %770 = vperm.xlu0 %769, %v726
    %v771 = vpop.permute.xlu0 %770
    %v773 = vperm.slane %v739, 2
    %v774 = vmul.f32 %v771, %v773
    %775 = vset.pattern.permute.xlu0 2
    %776 = vperm.xlu0 %775, %v726
    %v777 = vpop.permute.xlu0 %776
    %v779 = vperm.slane %v740, 2
    %v780 = vmul.f32 %v777, %v779
    %781 = vset.pattern.permute.xlu0 3
    %782 = vperm.xlu0 %781, %v726
    %v783 = vpop.permute.xlu0 %782
    %v785 = vperm.slane %v743, 2
    %v786 = vmul.f32 %v783, %v785
    %787 = vset.pattern.permute.xlu0 4
    %788 = vperm.xlu0 %787, %v726
    %v789 = vpop.permute.xlu0 %788
    %v791 = vperm.slane %v746, 2
    %v792 = vmul.f32 %v789, %v791
    %793 = vset.pattern.permute.xlu0 5
    %794 = vperm.xlu0 %793, %v726
    %v795 = vpop.permute.xlu0 %794
    %v797 = vperm.slane %v749, 2
    %v798 = vmul.f32 %v795, %v797
    %799 = vset.pattern.permute.xlu0 6
    %800 = vperm.xlu0 %799, %v726
    %v801 = vpop.permute.xlu0 %800
    %v803 = vperm.slane %v752, 2
    %v804 = vmul.f32 %v801, %v803
    %805 = vset.pattern.permute.xlu0 7
    %806 = vperm.xlu0 %805, %v726
    %v807 = vpop.permute.xlu0 %806
    %v809 = vperm.slane %v755, 2
    %v810 = vmul.f32 %v807, %v809
    %v811 = vadd.f32 %v768, %v774
    %v812 = vadd.f32 %v780, %v786
    %v813 = vadd.f32 %v792, %v798
    %v814 = vadd.f32 %v804, %v810
    %v815 = vadd.f32 %v811, %v812
    %v816 = vadd.f32 %v813, %v814
    %v817 = vadd.f32 %v815, %v816
    %v818 = vadd.f32 %v817, %v757
    %v819 = vtanh.pop %v818
    %v820 = vsel %vm269, %v819, 0.0
    %821 = vadd.xlane.f32.xlu0 %v820
    %v822 = vpop.xlane.xlu0 %821
    %v823 = vmul.f32 %v822, 0.125
    %v824 = vmul.f32 %v819, %v819
    %v825 = vsel %vm269, %v824, 0.0
    %826 = vadd.xlane.f32.xlu0 %v825
    %v827 = vpop.xlane.xlu0 %826
    %v828 = vmul.f32 %v827, 0.125
    %v829 = vmul.f32 %v823, %v823
    %v830 = vsub.f32 %v828, %v829
    %v831 = vsub.f32 %v819, %v823
    %v832 = vadd.f32 %v830, 1e-05
    %v833 = vrsqrt.pop %v832
    %v834 = vmul.f32 %v833, %v832
    %v835 = vmul.f32 %v834, %v833
    %v836 = vmul.f32 0.5, %v835
    %v837 = vsub.f32 1.5, %v836
    %v838 = vmul.f32 %v833, %v837
    %vm839 = vweird.f32 %v832
    %vm840 = vweird.f32 %v833
    %vm841 = vmor %vm839, %vm840
    %v842 = vsel %vm841, %v833, %v838
    %v843 = vmul.f32 %v831, %v842
    %845 = vset.pattern.permute.xlu0 0
    %846 = vperm.xlu0 %845, %v843
    %v847 = vpop.permute.xlu0 %846
    %v849 = vperm.slane %v730, 0
    %v850 = vmul.f32 %v847, %v849
    %851 = vset.pattern.permute.xlu0 1
    %852 = vperm.xlu0 %851, %v843
    %v853 = vpop.permute.xlu0 %852
    %v855 = vperm.slane %v730, 1
    %v856 = vmul.f32 %v853, %v855
    %857 = vset.pattern.permute.xlu0 2
    %858 = vperm.xlu0 %857, %v843
    %v859 = vpop.permute.xlu0 %858
    %v861 = vperm.slane %v730, 2
    %v862 = vmul.f32 %v859, %v861
    %863 = vset.pattern.permute.xlu0 3
    %864 = vperm.xlu0 %863, %v843
    %v865 = vpop.permute.xlu0 %864
    %v867 = vperm.slane %v730, 3
    %v868 = vmul.f32 %v865, %v867
    %869 = vset.pattern.permute.xlu0 4
    %870 = vperm.xlu0 %869, %v843
    %v871 = vpop.permute.xlu0 %870
    %v873 = vperm.slane %v730, 4
    %v874 = vmul.f32 %v871, %v873
    %875 = vset.pattern.permute.xlu0 5
    %876 = vperm.xlu0 %875, %v843
    %v877 = vpop.permute.xlu0 %876
    %v879 = vperm.slane %v730, 5
    %v880 = vmul.f32 %v877, %v879
    %881 = vset.pattern.permute.xlu0 6
    %882 = vperm.xlu0 %881, %v843
    %v883 = vpop.permute.xlu0 %882
    %v885 = vperm.slane %v730, 6
    %v886 = vmul.f32 %v883, %v885
    %887 = vset.pattern.permute.xlu0 7
    %888 = vperm.xlu0 %887, %v843
    %v889 = vpop.permute.xlu0 %888
    %v891 = vperm.slane %v730, 7
    %v892 = vmul.f32 %v889, %v891
    %v893 = vadd.f32 %v850, %v856
    %v894 = vadd.f32 %v862, %v868
    %v895 = vadd.f32 %v874, %v880
    %v896 = vadd.f32 %v886, %v892
    %v897 = vadd.f32 %v893, %v894
    %v898 = vadd.f32 %v895, %v896
    %v899 = vadd.f32 %v897, %v898
    %v900 = vadd.f32 %v899, %v759
    %v901 = vtanh.pop %v900
    %v902 = vsel %vm269, %v901, 0.0
    %903 = vadd.xlane.f32.xlu0 %v902
    %v904 = vpop.xlane.xlu0 %903
    %v905 = vmul.f32 %v904, 0.125
    %v906 = vmul.f32 %v901, %v901
    %v907 = vsel %vm269, %v906, 0.0
    %908 = vadd.xlane.f32.xlu0 %v907
    %v909 = vpop.xlane.xlu0 %908
    %v910 = vmul.f32 %v909, 0.125
    %v911 = vmul.f32 %v905, %v905
    %v912 = vsub.f32 %v910, %v911
    %v913 = vsub.f32 %v901, %v905
    %v914 = vadd.f32 %v912, 1e-05
    %v915 = vrsqrt.pop %v914
    %v916 = vmul.f32 %v915, %v914
    %v917 = vmul.f32 %v916, %v915
    %v918 = vmul.f32 0.5, %v917
    %v919 = vsub.f32 1.5, %v918
    %v920 = vmul.f32 %v915, %v919
    %vm921 = vweird.f32 %v914
    %vm922 = vweird.f32 %v915
    %vm923 = vmor %vm921, %vm922
    %v924 = vsel %vm923, %v915, %v920
    %v925 = vmul.f32 %v913, %v924
    %927 = vset.pattern.permute.xlu0 0
    %928 = vperm.xlu0 %927, %v925
    %v929 = vpop.permute.xlu0 %928
    %v931 = vperm.slane %v732, 0
    %v932 = vmul.f32 %v929, %v931
    %933 = vset.pattern.permute.xlu0 1
    %934 = vperm.xlu0 %933, %v925
    %v935 = vpop.permute.xlu0 %934
    %v937 = vperm.slane %v732, 1
    %v938 = vmul.f32 %v935, %v937
    %939 = vset.pattern.permute.xlu0 2
    %940 = vperm.xlu0 %939, %v925
    %v941 = vpop.permute.xlu0 %940
    %v943 = vperm.slane %v732, 2
    %v944 = vmul.f32 %v941, %v943
    %945 = vset.pattern.permute.xlu0 3
    %946 = vperm.xlu0 %945, %v925
    %v947 = vpop.permute.xlu0 %946
    %v949 = vperm.slane %v732, 3
    %v950 = vmul.f32 %v947, %v949
    %951 = vset.pattern.permute.xlu0 4
    %952 = vperm.xlu0 %951, %v925
    %v953 = vpop.permute.xlu0 %952
    %v955 = vperm.slane %v732, 4
    %v956 = vmul.f32 %v953, %v955
    %957 = vset.pattern.permute.xlu0 5
    %958 = vperm.xlu0 %957, %v925
    %v959 = vpop.permute.xlu0 %958
    %v961 = vperm.slane %v732, 5
    %v962 = vmul.f32 %v959, %v961
    %963 = vset.pattern.permute.xlu0 6
    %964 = vperm.xlu0 %963, %v925
    %v965 = vpop.permute.xlu0 %964
    %v967 = vperm.slane %v732, 6
    %v968 = vmul.f32 %v965, %v967
    %969 = vset.pattern.permute.xlu0 7
    %970 = vperm.xlu0 %969, %v925
    %v971 = vpop.permute.xlu0 %970
    %v973 = vperm.slane %v732, 7
    %v974 = vmul.f32 %v971, %v973
    %v975 = vadd.f32 %v932, %v938
    %v976 = vadd.f32 %v944, %v950
    %v977 = vadd.f32 %v956, %v962
    %v978 = vadd.f32 %v968, %v974
    %v979 = vadd.f32 %v975, %v976
    %v980 = vadd.f32 %v977, %v978
    %v981 = vadd.f32 %v979, %v980
    %v982 = vadd.f32 %v981, %v761
    %v983 = vxor.u32 %v982, 2147483648
    %v984 = vmul.f32 %v983, 1.442695
    %v985 = vpow.pop %v984
    %v986 = vadd.f32 %v985, 1.0
    %v987 = vrcp.pop %v986
    %v988 = vmul.f32 %v986, %v987
    %v989 = vsub.f32 1.0, %v988
    %v990 = vmul.f32 %v987, %v989
    %v991 = vadd.f32 %v987, %v990
    %vm992 = vweird.f32 %v986
    %vm993 = vweird.f32 %v987
    %vm994 = vmor %vm992, %vm993
    %v995 = vsel %vm994, %v987, %v991
    %v996 = vand.u32 2147483647, %v986
    %vm997 = vcmp.eq.f32.partialorder %v996, 8.507059e+37
    %v998 = vand.u32 %v986, 2147483648
    %v999 = vor.u32 1.1754944e-38, %v998
    %v1000 = vsel %vm997, %v999, %v995
    %v1001 = vmul.f32 1.0, %v1000
    %s1002 = scalar_lea.vmem [#allocation6], 24
    %v1003 = vld [vmem:[%s1002] sm:$0xff]
    %s1004 = scalar_lea.vmem [#allocation9], 24
    %v1005 = vld [vmem:[%s1004] sm:$0xff]
    %s1006 = scalar_lea.vmem [#allocation12], 24
    %v1007 = vld [vmem:[%s1006] sm:$0xff]
    %v1009 = vrot.slane %v1003, 5
    %v1011 = vmul.f32 %v152, %v1009
    %v1012 = vrot.slane %v1003, 6
    %v1014 = vmul.f32 %v157, %v1012
    %v1015 = vrot.slane %v1003, 7
    %v1017 = vmul.f32 %v165, %v1015
    %v1018 = vmul.f32 %v172, %v1003
    %v1019 = vrot.slane %v1003, 1
    %v1021 = vmul.f32 %v179, %v1019
    %v1022 = vrot.slane %v1003, 2
    %v1024 = vmul.f32 %v186, %v1022
    %v1025 = vrot.slane %v1003, 3
    %v1027 = vmul.f32 %v193, %v1025
    %v1028 = vrot.slane %v1003, 4
    %v1030 = vmul.f32 %v200, %v1028
    %v1031 = vld [vmem:[#allocation7 + $0x3] sm:$0x1]
    %v1032 = vperm.slane %v1031, 0
    %v1033 = vld [vmem:[#allocation10 + $0x3] sm:$0x1]
    %v1034 = vperm.slane %v1033, 0
    %v1035 = vld [vmem:[#allocation13 + $0x3] sm:$0x1]
    %v1036 = vperm.slane %v1035, 0
    %1038 = vset.pattern.permute.xlu0 0
    %1039 = vperm.xlu0 %1038, %v1001
    %v1040 = vpop.permute.xlu0 %1039
    %v1042 = vperm.slane %v1011, 3
    %v1043 = vmul.f32 %v1040, %v1042
    %1044 = vset.pattern.permute.xlu0 1
    %1045 = vperm.xlu0 %1044, %v1001
    %v1046 = vpop.permute.xlu0 %1045
    %v1048 = vperm.slane %v1014, 3
    %v1049 = vmul.f32 %v1046, %v1048
    %1050 = vset.pattern.permute.xlu0 2
    %1051 = vperm.xlu0 %1050, %v1001
    %v1052 = vpop.permute.xlu0 %1051
    %v1054 = vperm.slane %v1017, 3
    %v1055 = vmul.f32 %v1052, %v1054
    %1056 = vset.pattern.permute.xlu0 3
    %1057 = vperm.xlu0 %1056, %v1001
    %v1058 = vpop.permute.xlu0 %1057
    %v1060 = vperm.slane %v1018, 3
    %v1061 = vmul.f32 %v1058, %v1060
    %1062 = vset.pattern.permute.xlu0 4
    %1063 = vperm.xlu0 %1062, %v1001
    %v1064 = vpop.permute.xlu0 %1063
    %v1066 = vperm.slane %v1021, 3
    %v1067 = vmul.f32 %v1064, %v1066
    %1068 = vset.pattern.permute.xlu0 5
    %1069 = vperm.xlu0 %1068, %v1001
    %v1070 = vpop.permute.xlu0 %1069
    %v1072 = vperm.slane %v1024, 3
    %v1073 = vmul.f32 %v1070, %v1072
    %1074 = vset.pattern.permute.xlu0 6
    %1075 = vperm.xlu0 %1074, %v1001
    %v1076 = vpop.permute.xlu0 %1075
    %v1078 = vperm.slane %v1027, 3
    %v1079 = vmul.f32 %v1076, %v1078
    %1080 = vset.pattern.permute.xlu0 7
    %1081 = vperm.xlu0 %1080, %v1001
    %v1082 = vpop.permute.xlu0 %1081
    %v1084 = vperm.slane %v1030, 3
    %v1085 = vmul.f32 %v1082, %v1084
    %v1086 = vadd.f32 %v1043, %v1049
    %v1087 = vadd.f32 %v1055, %v1061
    %v1088 = vadd.f32 %v1067, %v1073
    %v1089 = vadd.f32 %v1079, %v1085
    %v1090 = vadd.f32 %v1086, %v1087
    %v1091 = vadd.f32 %v1088, %v1089
    %v1092 = vadd.f32 %v1090, %v1091
    %v1093 = vadd.f32 %v1092, %v1032
    %v1094 = vtanh.pop %v1093
    %v1095 = vsel %vm269, %v1094, 0.0
    %1096 = vadd.xlane.f32.xlu0 %v1095
    %v1097 = vpop.xlane.xlu0 %1096
    %v1098 = vmul.f32 %v1097, 0.125
    %v1099 = vmul.f32 %v1094, %v1094
    %v1100 = vsel %vm269, %v1099, 0.0
    %1101 = vadd.xlane.f32.xlu0 %v1100
    %v1102 = vpop.xlane.xlu0 %1101
    %v1103 = vmul.f32 %v1102, 0.125
    %v1104 = vmul.f32 %v1098, %v1098
    %v1105 = vsub.f32 %v1103, %v1104
    %v1106 = vsub.f32 %v1094, %v1098
    %v1107 = vadd.f32 %v1105, 1e-05
    %v1108 = vrsqrt.pop %v1107
    %v1109 = vmul.f32 %v1108, %v1107
    %v1110 = vmul.f32 %v1109, %v1108
    %v1111 = vmul.f32 0.5, %v1110
    %v1112 = vsub.f32 1.5, %v1111
    %v1113 = vmul.f32 %v1108, %v1112
    %vm1114 = vweird.f32 %v1107
    %vm1115 = vweird.f32 %v1108
    %vm1116 = vmor %vm1114, %vm1115
    %v1117 = vsel %vm1116, %v1108, %v1113
    %v1118 = vmul.f32 %v1106, %v1117
    %1120 = vset.pattern.permute.xlu0 0
    %1121 = vperm.xlu0 %1120, %v1118
    %v1122 = vpop.permute.xlu0 %1121
    %v1124 = vperm.slane %v1005, 0
    %v1125 = vmul.f32 %v1122, %v1124
    %1126 = vset.pattern.permute.xlu0 1
    %1127 = vperm.xlu0 %1126, %v1118
    %v1128 = vpop.permute.xlu0 %1127
    %v1130 = vperm.slane %v1005, 1
    %v1131 = vmul.f32 %v1128, %v1130
    %1132 = vset.pattern.permute.xlu0 2
    %1133 = vperm.xlu0 %1132, %v1118
    %v1134 = vpop.permute.xlu0 %1133
    %v1136 = vperm.slane %v1005, 2
    %v1137 = vmul.f32 %v1134, %v1136
    %1138 = vset.pattern.permute.xlu0 3
    %1139 = vperm.xlu0 %1138, %v1118
    %v1140 = vpop.permute.xlu0 %1139
    %v1142 = vperm.slane %v1005, 3
    %v1143 = vmul.f32 %v1140, %v1142
    %1144 = vset.pattern.permute.xlu0 4
    %1145 = vperm.xlu0 %1144, %v1118
    %v1146 = vpop.permute.xlu0 %1145
    %v1148 = vperm.slane %v1005, 4
    %v1149 = vmul.f32 %v1146, %v1148
    %1150 = vset.pattern.permute.xlu0 5
    %1151 = vperm.xlu0 %1150, %v1118
    %v1152 = vpop.permute.xlu0 %1151
    %v1154 = vperm.slane %v1005, 5
    %v1155 = vmul.f32 %v1152, %v1154
    %1156 = vset.pattern.permute.xlu0 6
    %1157 = vperm.xlu0 %1156, %v1118
    %v1158 = vpop.permute.xlu0 %1157
    %v1160 = vperm.slane %v1005, 6
    %v1161 = vmul.f32 %v1158, %v1160
    %1162 = vset.pattern.permute.xlu0 7
    %1163 = vperm.xlu0 %1162, %v1118
    %v1164 = vpop.permute.xlu0 %1163
    %v1166 = vperm.slane %v1005, 7
    %v1167 = vmul.f32 %v1164, %v1166
    %v1168 = vadd.f32 %v1125, %v1131
    %v1169 = vadd.f32 %v1137, %v1143
    %v1170 = vadd.f32 %v1149, %v1155
    %v1171 = vadd.f32 %v1161, %v1167
    %v1172 = vadd.f32 %v1168, %v1169
    %v1173 = vadd.f32 %v1170, %v1171
    %v1174 = vadd.f32 %v1172, %v1173
    %v1175 = vadd.f32 %v1174, %v1034
    %v1176 = vtanh.pop %v1175
    %v1177 = vsel %vm269, %v1176, 0.0
    %1178 = vadd.xlane.f32.xlu0 %v1177
    %v1179 = vpop.xlane.xlu0 %1178
    %v1180 = vmul.f32 %v1179, 0.125
    %v1181 = vmul.f32 %v1176, %v1176
    %v1182 = vsel %vm269, %v1181, 0.0
    %1183 = vadd.xlane.f32.xlu0 %v1182
    %v1184 = vpop.xlane.xlu0 %1183
    %v1185 = vmul.f32 %v1184, 0.125
    %v1186 = vmul.f32 %v1180, %v1180
    %v1187 = vsub.f32 %v1185, %v1186
    %v1188 = vsub.f32 %v1176, %v1180
    %v1189 = vadd.f32 %v1187, 1e-05
    %v1190 = vrsqrt.pop %v1189
    %v1191 = vmul.f32 %v1190, %v1189
    %v1192 = vmul.f32 %v1191, %v1190
    %v1193 = vmul.f32 0.5, %v1192
    %v1194 = vsub.f32 1.5, %v1193
    %v1195 = vmul.f32 %v1190, %v1194
    %vm1196 = vweird.f32 %v1189
    %vm1197 = vweird.f32 %v1190
    %vm1198 = vmor %vm1196, %vm1197
    %v1199 = vsel %vm1198, %v1190, %v1195
    %v1200 = vmul.f32 %v1188, %v1199
    %1202 = vset.pattern.permute.xlu0 0
    %1203 = vperm.xlu0 %1202, %v1200
    %v1204 = vpop.permute.xlu0 %1203
    %v1206 = vperm.slane %v1007, 0
    %v1207 = vmul.f32 %v1204, %v1206
    %1208 = vset.pattern.permute.xlu0 1
    %1209 = vperm.xlu0 %1208, %v1200
    %v1210 = vpop.permute.xlu0 %1209
    %v1212 = vperm.slane %v1007, 1
    %v1213 = vmul.f32 %v1210, %v1212
    %1214 = vset.pattern.permute.xlu0 2
    %1215 = vperm.xlu0 %1214, %v1200
    %v1216 = vpop.permute.xlu0 %1215
    %v1218 = vperm.slane %v1007, 2
    %v1219 = vmul.f32 %v1216, %v1218
    %1220 = vset.pattern.permute.xlu0 3
    %1221 = vperm.xlu0 %1220, %v1200
    %v1222 = vpop.permute.xlu0 %1221
    %v1224 = vperm.slane %v1007, 3
    %v1225 = vmul.f32 %v1222, %v1224
    %1226 = vset.pattern.permute.xlu0 4
    %1227 = vperm.xlu0 %1226, %v1200
    %v1228 = vpop.permute.xlu0 %1227
    %v1230 = vperm.slane %v1007, 4
    %v1231 = vmul.f32 %v1228, %v1230
    %1232 = vset.pattern.permute.xlu0 5
    %1233 = vperm.xlu0 %1232, %v1200
    %v1234 = vpop.permute.xlu0 %1233
    %v1236 = vperm.slane %v1007, 5
    %v1237 = vmul.f32 %v1234, %v1236
    %1238 = vset.pattern.permute.xlu0 6
    %1239 = vperm.xlu0 %1238, %v1200
    %v1240 = vpop.permute.xlu0 %1239
    %v1242 = vperm.slane %v1007, 6
    %v1243 = vmul.f32 %v1240, %v1242
    %1244 = vset.pattern.permute.xlu0 7
    %1245 = vperm.xlu0 %1244, %v1200
    %v1246 = vpop.permute.xlu0 %1245
    %v1248 = vperm.slane %v1007, 7
    %v1249 = vmul.f32 %v1246, %v1248
    %v1250 = vadd.f32 %v1207, %v1213
    %v1251 = vadd.f32 %v1219, %v1225
    %v1252 = vadd.f32 %v1231, %v1237
    %v1253 = vadd.f32 %v1243, %v1249
    %v1254 = vadd.f32 %v1250, %v1251
    %v1255 = vadd.f32 %v1252, %v1253
    %v1256 = vadd.f32 %v1254, %v1255
    %v1257 = vadd.f32 %v1256, %v1036
    %v1258 = vxor.u32 %v1257, 2147483648
    %v1259 = vmul.f32 %v1258, 1.442695
    %v1260 = vpow.pop %v1259
    %v1261 = vadd.f32 %v1260, 1.0
    %v1262 = vrcp.pop %v1261
    %v1263 = vmul.f32 %v1261, %v1262
    %v1264 = vsub.f32 1.0, %v1263
    %v1265 = vmul.f32 %v1262, %v1264
    %v1266 = vadd.f32 %v1262, %v1265
    %vm1267 = vweird.f32 %v1261
    %vm1268 = vweird.f32 %v1262
    %vm1269 = vmor %vm1267, %vm1268
    %v1270 = vsel %vm1269, %v1262, %v1266
    %v1271 = vand.u32 2147483647, %v1261
    %vm1272 = vcmp.eq.f32.partialorder %v1271, 8.507059e+37
    %v1273 = vand.u32 %v1261, 2147483648
    %v1274 = vor.u32 1.1754944e-38, %v1273
    %v1275 = vsel %vm1272, %v1274, %v1270
    %v1276 = vmul.f32 1.0, %v1275
    %s1277 = scalar_lea.vmem [#allocation6], 32
    %v1278 = vld [vmem:[%s1277] sm:$0xff]
    %s1279 = scalar_lea.vmem [#allocation9], 32
    %v1280 = vld [vmem:[%s1279] sm:$0xff]
    %s1281 = scalar_lea.vmem [#allocation12], 32
    %v1282 = vld [vmem:[%s1281] sm:$0xff]
    %v1284 = vrot.slane %v1278, 4
    %v1286 = vmul.f32 %v152, %v1284
    %v1287 = vrot.slane %v1278, 5
    %v1289 = vmul.f32 %v157, %v1287
    %v1290 = vrot.slane %v1278, 6
    %v1292 = vmul.f32 %v165, %v1290
    %v1293 = vrot.slane %v1278, 7
    %v1295 = vmul.f32 %v172, %v1293
    %v1296 = vmul.f32 %v179, %v1278
    %v1297 = vrot.slane %v1278, 1
    %v1299 = vmul.f32 %v186, %v1297
    %v1300 = vrot.slane %v1278, 2
    %v1302 = vmul.f32 %v193, %v1300
    %v1303 = vrot.slane %v1278, 3
    %v1305 = vmul.f32 %v200, %v1303
    %v1306 = vld [vmem:[#allocation7 + $0x4] sm:$0x1]
    %v1307 = vperm.slane %v1306, 0
    %v1308 = vld [vmem:[#allocation10 + $0x4] sm:$0x1]
    %v1309 = vperm.slane %v1308, 0
    %v1310 = vld [vmem:[#allocation13 + $0x4] sm:$0x1]
    %v1311 = vperm.slane %v1310, 0
    %1313 = vset.pattern.permute.xlu0 0
    %1314 = vperm.xlu0 %1313, %v1276
    %v1315 = vpop.permute.xlu0 %1314
    %v1317 = vperm.slane %v1286, 4
    %v1318 = vmul.f32 %v1315, %v1317
    %1319 = vset.pattern.permute.xlu0 1
    %1320 = vperm.xlu0 %1319, %v1276
    %v1321 = vpop.permute.xlu0 %1320
    %v1323 = vperm.slane %v1289, 4
    %v1324 = vmul.f32 %v1321, %v1323
    %1325 = vset.pattern.permute.xlu0 2
    %1326 = vperm.xlu0 %1325, %v1276
    %v1327 = vpop.permute.xlu0 %1326
    %v1329 = vperm.slane %v1292, 4
    %v1330 = vmul.f32 %v1327, %v1329
    %1331 = vset.pattern.permute.xlu0 3
    %1332 = vperm.xlu0 %1331, %v1276
    %v1333 = vpop.permute.xlu0 %1332
    %v1335 = vperm.slane %v1295, 4
    %v1336 = vmul.f32 %v1333, %v1335
    %1337 = vset.pattern.permute.xlu0 4
    %1338 = vperm.xlu0 %1337, %v1276
    %v1339 = vpop.permute.xlu0 %1338
    %v1341 = vperm.slane %v1296, 4
    %v1342 = vmul.f32 %v1339, %v1341
    %1343 = vset.pattern.permute.xlu0 5
    %1344 = vperm.xlu0 %1343, %v1276
    %v1345 = vpop.permute.xlu0 %1344
    %v1347 = vperm.slane %v1299, 4
    %v1348 = vmul.f32 %v1345, %v1347
    %1349 = vset.pattern.permute.xlu0 6
    %1350 = vperm.xlu0 %1349, %v1276
    %v1351 = vpop.permute.xlu0 %1350
    %v1353 = vperm.slane %v1302, 4
    %v1354 = vmul.f32 %v1351, %v1353
    %1355 = vset.pattern.permute.xlu0 7
    %1356 = vperm.xlu0 %1355, %v1276
    %v1357 = vpop.permute.xlu0 %1356
    %v1359 = vperm.slane %v1305, 4
    %v1360 = vmul.f32 %v1357, %v1359
    %v1361 = vadd.f32 %v1318, %v1324
    %v1362 = vadd.f32 %v1330, %v1336
    %v1363 = vadd.f32 %v1342, %v1348
    %v1364 = vadd.f32 %v1354, %v1360
    %v1365 = vadd.f32 %v1361, %v1362
    %v1366 = vadd.f32 %v1363, %v1364
    %v1367 = vadd.f32 %v1365, %v1366
    %v1368 = vadd.f32 %v1367, %v1307
    %v1369 = vtanh.pop %v1368
    %v1370 = vsel %vm269, %v1369, 0.0
    %1371 = vadd.xlane.f32.xlu0 %v1370
    %v1372 = vpop.xlane.xlu0 %1371
    %v1373 = vmul.f32 %v1372, 0.125
    %v1374 = vmul.f32 %v1369, %v1369
    %v1375 = vsel %vm269, %v1374, 0.0
    %1376 = vadd.xlane.f32.xlu0 %v1375
    %v1377 = vpop.xlane.xlu0 %1376
    %v1378 = vmul.f32 %v1377, 0.125
    %v1379 = vmul.f32 %v1373, %v1373
    %v1380 = vsub.f32 %v1378, %v1379
    %v1381 = vsub.f32 %v1369, %v1373
    %v1382 = vadd.f32 %v1380, 1e-05
    %v1383 = vrsqrt.pop %v1382
    %v1384 = vmul.f32 %v1383, %v1382
    %v1385 = vmul.f32 %v1384, %v1383
    %v1386 = vmul.f32 0.5, %v1385
    %v1387 = vsub.f32 1.5, %v1386
    %v1388 = vmul.f32 %v1383, %v1387
    %vm1389 = vweird.f32 %v1382
    %vm1390 = vweird.f32 %v1383
    %vm1391 = vmor %vm1389, %vm1390
    %v1392 = vsel %vm1391, %v1383, %v1388
    %v1393 = vmul.f32 %v1381, %v1392
    %1395 = vset.pattern.permute.xlu0 0
    %1396 = vperm.xlu0 %1395, %v1393
    %v1397 = vpop.permute.xlu0 %1396
    %v1399 = vperm.slane %v1280, 0
    %v1400 = vmul.f32 %v1397, %v1399
    %1401 = vset.pattern.permute.xlu0 1
    %1402 = vperm.xlu0 %1401, %v1393
    %v1403 = vpop.permute.xlu0 %1402
    %v1405 = vperm.slane %v1280, 1
    %v1406 = vmul.f32 %v1403, %v1405
    %1407 = vset.pattern.permute.xlu0 2
    %1408 = vperm.xlu0 %1407, %v1393
    %v1409 = vpop.permute.xlu0 %1408
    %v1411 = vperm.slane %v1280, 2
    %v1412 = vmul.f32 %v1409, %v1411
    %1413 = vset.pattern.permute.xlu0 3
    %1414 = vperm.xlu0 %1413, %v1393
    %v1415 = vpop.permute.xlu0 %1414
    %v1417 = vperm.slane %v1280, 3
    %v1418 = vmul.f32 %v1415, %v1417
    %1419 = vset.pattern.permute.xlu0 4
    %1420 = vperm.xlu0 %1419, %v1393
    %v1421 = vpop.permute.xlu0 %1420
    %v1423 = vperm.slane %v1280, 4
    %v1424 = vmul.f32 %v1421, %v1423
    %1425 = vset.pattern.permute.xlu0 5
    %1426 = vperm.xlu0 %1425, %v1393
    %v1427 = vpop.permute.xlu0 %1426
    %v1429 = vperm.slane %v1280, 5
    %v1430 = vmul.f32 %v1427, %v1429
    %1431 = vset.pattern.permute.xlu0 6
    %1432 = vperm.xlu0 %1431, %v1393
    %v1433 = vpop.permute.xlu0 %1432
    %v1435 = vperm.slane %v1280, 6
    %v1436 = vmul.f32 %v1433, %v1435
    %1437 = vset.pattern.permute.xlu0 7
    %1438 = vperm.xlu0 %1437, %v1393
    %v1439 = vpop.permute.xlu0 %1438
    %v1441 = vperm.slane %v1280, 7
    %v1442 = vmul.f32 %v1439, %v1441
    %v1443 = vadd.f32 %v1400, %v1406
    %v1444 = vadd.f32 %v1412, %v1418
    %v1445 = vadd.f32 %v1424, %v1430
    %v1446 = vadd.f32 %v1436, %v1442
    %v1447 = vadd.f32 %v1443, %v1444
    %v1448 = vadd.f32 %v1445, %v1446
    %v1449 = vadd.f32 %v1447, %v1448
    %v1450 = vadd.f32 %v1449, %v1309
    %v1451 = vtanh.pop %v1450
    %v1452 = vsel %vm269, %v1451, 0.0
    %1453 = vadd.xlane.f32.xlu0 %v1452
    %v1454 = vpop.xlane.xlu0 %1453
    %v1455 = vmul.f32 %v1454, 0.125
    %v1456 = vmul.f32 %v1451, %v1451
    %v1457 = vsel %vm269, %v1456, 0.0
    %1458 = vadd.xlane.f32.xlu0 %v1457
    %v1459 = vpop.xlane.xlu0 %1458
    %v1460 = vmul.f32 %v1459, 0.125
    %v1461 = vmul.f32 %v1455, %v1455
    %v1462 = vsub.f32 %v1460, %v1461
    %v1463 = vsub.f32 %v1451, %v1455
    %v1464 = vadd.f32 %v1462, 1e-05
    %v1465 = vrsqrt.pop %v1464
    %v1466 = vmul.f32 %v1465, %v1464
    %v1467 = vmul.f32 %v1466, %v1465
    %v1468 = vmul.f32 0.5, %v1467
    %v1469 = vsub.f32 1.5, %v1468
    %v1470 = vmul.f32 %v1465, %v1469
    %vm1471 = vweird.f32 %v1464
    %vm1472 = vweird.f32 %v1465
    %vm1473 = vmor %vm1471, %vm1472
    %v1474 = vsel %vm1473, %v1465, %v1470
    %v1475 = vmul.f32 %v1463, %v1474
    %1477 = vset.pattern.permute.xlu0 0
    %1478 = vperm.xlu0 %1477, %v1475
    %v1479 = vpop.permute.xlu0 %1478
    %v1481 = vperm.slane %v1282, 0
    %v1482 = vmul.f32 %v1479, %v1481
    %1483 = vset.pattern.permute.xlu0 1
    %1484 = vperm.xlu0 %1483, %v1475
    %v1485 = vpop.permute.xlu0 %1484
    %v1487 = vperm.slane %v1282, 1
    %v1488 = vmul.f32 %v1485, %v1487
    %1489 = vset.pattern.permute.xlu0 2
    %1490 = vperm.xlu0 %1489, %v1475
    %v1491 = vpop.permute.xlu0 %1490
    %v1493 = vperm.slane %v1282, 2
    %v1494 = vmul.f32 %v1491, %v1493
    %1495 = vset.pattern.permute.xlu0 3
    %1496 = vperm.xlu0 %1495, %v1475
    %v1497 = vpop.permute.xlu0 %1496
    %v1499 = vperm.slane %v1282, 3
    %v1500 = vmul.f32 %v1497, %v1499
    %1501 = vset.pattern.permute.xlu0 4
    %1502 = vperm.xlu0 %1501, %v1475
    %v1503 = vpop.permute.xlu0 %1502
    %v1505 = vperm.slane %v1282, 4
    %v1506 = vmul.f32 %v1503, %v1505
    %1507 = vset.pattern.permute.xlu0 5
    %1508 = vperm.xlu0 %1507, %v1475
    %v1509 = vpop.permute.xlu0 %1508
    %v1511 = vperm.slane %v1282, 5
    %v1512 = vmul.f32 %v1509, %v1511
    %1513 = vset.pattern.permute.xlu0 6
    %1514 = vperm.xlu0 %1513, %v1475
    %v1515 = vpop.permute.xlu0 %1514
    %v1517 = vperm.slane %v1282, 6
    %v1518 = vmul.f32 %v1515, %v1517
    %1519 = vset.pattern.permute.xlu0 7
    %1520 = vperm.xlu0 %1519, %v1475
    %v1521 = vpop.permute.xlu0 %1520
    %v1523 = vperm.slane %v1282, 7
    %v1524 = vmul.f32 %v1521, %v1523
    %v1525 = vadd.f32 %v1482, %v1488
    %v1526 = vadd.f32 %v1494, %v1500
    %v1527 = vadd.f32 %v1506, %v1512
    %v1528 = vadd.f32 %v1518, %v1524
    %v1529 = vadd.f32 %v1525, %v1526
    %v1530 = vadd.f32 %v1527, %v1528
    %v1531 = vadd.f32 %v1529, %v1530
    %v1532 = vadd.f32 %v1531, %v1311
    %v1533 = vxor.u32 %v1532, 2147483648
    %v1534 = vmul.f32 %v1533, 1.442695
    %v1535 = vpow.pop %v1534
    %v1536 = vadd.f32 %v1535, 1.0
    %v1537 = vrcp.pop %v1536
    %v1538 = vmul.f32 %v1536, %v1537
    %v1539 = vsub.f32 1.0, %v1538
    %v1540 = vmul.f32 %v1537, %v1539
    %v1541 = vadd.f32 %v1537, %v1540
    %vm1542 = vweird.f32 %v1536
    %vm1543 = vweird.f32 %v1537
    %vm1544 = vmor %vm1542, %vm1543
    %v1545 = vsel %vm1544, %v1537, %v1541
    %v1546 = vand.u32 2147483647, %v1536
    %vm1547 = vcmp.eq.f32.partialorder %v1546, 8.507059e+37
    %v1548 = vand.u32 %v1536, 2147483648
    %v1549 = vor.u32 1.1754944e-38, %v1548
    %v1550 = vsel %vm1547, %v1549, %v1545
    %v1551 = vmul.f32 1.0, %v1550
    %s1552 = scalar_lea.vmem [#allocation6], 40
    %v1553 = vld [vmem:[%s1552] sm:$0xff]
    %s1554 = scalar_lea.vmem [#allocation9], 40
    %v1555 = vld [vmem:[%s1554] sm:$0xff]
    %s1556 = scalar_lea.vmem [#allocation12], 40
    %v1557 = vld [vmem:[%s1556] sm:$0xff]
    %v1559 = vrot.slane %v1553, 3
    %v1561 = vmul.f32 %v152, %v1559
    %v1562 = vrot.slane %v1553, 4
    %v1564 = vmul.f32 %v157, %v1562
    %v1565 = vrot.slane %v1553, 5
    %v1567 = vmul.f32 %v165, %v1565
    %v1568 = vrot.slane %v1553, 6
    %v1570 = vmul.f32 %v172, %v1568
    %v1571 = vrot.slane %v1553, 7
    %v1573 = vmul.f32 %v179, %v1571
    %v1574 = vmul.f32 %v186, %v1553
    %v1575 = vrot.slane %v1553, 1
    %v1577 = vmul.f32 %v193, %v1575
    %v1578 = vrot.slane %v1553, 2
    %v1580 = vmul.f32 %v200, %v1578
    %v1581 = vld [vmem:[#allocation7 + $0x5] sm:$0x1]
    %v1582 = vperm.slane %v1581, 0
    %v1583 = vld [vmem:[#allocation10 + $0x5] sm:$0x1]
    %v1584 = vperm.slane %v1583, 0
    %v1585 = vld [vmem:[#allocation13 + $0x5] sm:$0x1]
    %v1586 = vperm.slane %v1585, 0
    %1588 = vset.pattern.permute.xlu0 0
    %1589 = vperm.xlu0 %1588, %v1551
    %v1590 = vpop.permute.xlu0 %1589
    %v1592 = vperm.slane %v1561, 5
    %v1593 = vmul.f32 %v1590, %v1592
    %1594 = vset.pattern.permute.xlu0 1
    %1595 = vperm.xlu0 %1594, %v1551
    %v1596 = vpop.permute.xlu0 %1595
    %v1598 = vperm.slane %v1564, 5
    %v1599 = vmul.f32 %v1596, %v1598
    %1600 = vset.pattern.permute.xlu0 2
    %1601 = vperm.xlu0 %1600, %v1551
    %v1602 = vpop.permute.xlu0 %1601
    %v1604 = vperm.slane %v1567, 5
    %v1605 = vmul.f32 %v1602, %v1604
    %1606 = vset.pattern.permute.xlu0 3
    %1607 = vperm.xlu0 %1606, %v1551
    %v1608 = vpop.permute.xlu0 %1607
    %v1610 = vperm.slane %v1570, 5
    %v1611 = vmul.f32 %v1608, %v1610
    %1612 = vset.pattern.permute.xlu0 4
    %1613 = vperm.xlu0 %1612, %v1551
    %v1614 = vpop.permute.xlu0 %1613
    %v1616 = vperm.slane %v1573, 5
    %v1617 = vmul.f32 %v1614, %v1616
    %1618 = vset.pattern.permute.xlu0 5
    %1619 = vperm.xlu0 %1618, %v1551
    %v1620 = vpop.permute.xlu0 %1619
    %v1622 = vperm.slane %v1574, 5
    %v1623 = vmul.f32 %v1620, %v1622
    %1624 = vset.pattern.permute.xlu0 6
    %1625 = vperm.xlu0 %1624, %v1551
    %v1626 = vpop.permute.xlu0 %1625
    %v1628 = vperm.slane %v1577, 5
    %v1629 = vmul.f32 %v1626, %v1628
    %1630 = vset.pattern.permute.xlu0 7
    %1631 = vperm.xlu0 %1630, %v1551
    %v1632 = vpop.permute.xlu0 %1631
    %v1634 = vperm.slane %v1580, 5
    %v1635 = vmul.f32 %v1632, %v1634
    %v1636 = vadd.f32 %v1593, %v1599
    %v1637 = vadd.f32 %v1605, %v1611
    %v1638 = vadd.f32 %v1617, %v1623
    %v1639 = vadd.f32 %v1629, %v1635
    %v1640 = vadd.f32 %v1636, %v1637
    %v1641 = vadd.f32 %v1638, %v1639
    %v1642 = vadd.f32 %v1640, %v1641
    %v1643 = vadd.f32 %v1642, %v1582
    %v1644 = vtanh.pop %v1643
    %v1645 = vsel %vm269, %v1644, 0.0
    %1646 = vadd.xlane.f32.xlu0 %v1645
    %v1647 = vpop.xlane.xlu0 %1646
    %v1648 = vmul.f32 %v1647, 0.125
    %v1649 = vmul.f32 %v1644, %v1644
    %v1650 = vsel %vm269, %v1649, 0.0
    %1651 = vadd.xlane.f32.xlu0 %v1650
    %v1652 = vpop.xlane.xlu0 %1651
    %v1653 = vmul.f32 %v1652, 0.125
    %v1654 = vmul.f32 %v1648, %v1648
    %v1655 = vsub.f32 %v1653, %v1654
    %v1656 = vsub.f32 %v1644, %v1648
    %v1657 = vadd.f32 %v1655, 1e-05
    %v1658 = vrsqrt.pop %v1657
    %v1659 = vmul.f32 %v1658, %v1657
    %v1660 = vmul.f32 %v1659, %v1658
    %v1661 = vmul.f32 0.5, %v1660
    %v1662 = vsub.f32 1.5, %v1661
    %v1663 = vmul.f32 %v1658, %v1662
    %vm1664 = vweird.f32 %v1657
    %vm1665 = vweird.f32 %v1658
    %vm1666 = vmor %vm1664, %vm1665
    %v1667 = vsel %vm1666, %v1658, %v1663
    %v1668 = vmul.f32 %v1656, %v1667
    %1670 = vset.pattern.permute.xlu0 0
    %1671 = vperm.xlu0 %1670, %v1668
    %v1672 = vpop.permute.xlu0 %1671
    %v1674 = vperm.slane %v1555, 0
    %v1675 = vmul.f32 %v1672, %v1674
    %1676 = vset.pattern.permute.xlu0 1
    %1677 = vperm.xlu0 %1676, %v1668
    %v1678 = vpop.permute.xlu0 %1677
    %v1680 = vperm.slane %v1555, 1
    %v1681 = vmul.f32 %v1678, %v1680
    %1682 = vset.pattern.permute.xlu0 2
    %1683 = vperm.xlu0 %1682, %v1668
    %v1684 = vpop.permute.xlu0 %1683
    %v1686 = vperm.slane %v1555, 2
    %v1687 = vmul.f32 %v1684, %v1686
    %1688 = vset.pattern.permute.xlu0 3
    %1689 = vperm.xlu0 %1688, %v1668
    %v1690 = vpop.permute.xlu0 %1689
    %v1692 = vperm.slane %v1555, 3
    %v1693 = vmul.f32 %v1690, %v1692
    %1694 = vset.pattern.permute.xlu0 4
    %1695 = vperm.xlu0 %1694, %v1668
    %v1696 = vpop.permute.xlu0 %1695
    %v1698 = vperm.slane %v1555, 4
    %v1699 = vmul.f32 %v1696, %v1698
    %1700 = vset.pattern.permute.xlu0 5
    %1701 = vperm.xlu0 %1700, %v1668
    %v1702 = vpop.permute.xlu0 %1701
    %v1704 = vperm.slane %v1555, 5
    %v1705 = vmul.f32 %v1702, %v1704
    %1706 = vset.pattern.permute.xlu0 6
    %1707 = vperm.xlu0 %1706, %v1668
    %v1708 = vpop.permute.xlu0 %1707
    %v1710 = vperm.slane %v1555, 6
    %v1711 = vmul.f32 %v1708, %v1710
    %1712 = vset.pattern.permute.xlu0 7
    %1713 = vperm.xlu0 %1712, %v1668
    %v1714 = vpop.permute.xlu0 %1713
    %v1716 = vperm.slane %v1555, 7
    %v1717 = vmul.f32 %v1714, %v1716
    %v1718 = vadd.f32 %v1675, %v1681
    %v1719 = vadd.f32 %v1687, %v1693
    %v1720 = vadd.f32 %v1699, %v1705
    %v1721 = vadd.f32 %v1711, %v1717
    %v1722 = vadd.f32 %v1718, %v1719
    %v1723 = vadd.f32 %v1720, %v1721
    %v1724 = vadd.f32 %v1722, %v1723
    %v1725 = vadd.f32 %v1724, %v1584
    %v1726 = vtanh.pop %v1725
    %v1727 = vsel %vm269, %v1726, 0.0
    %1728 = vadd.xlane.f32.xlu0 %v1727
    %v1729 = vpop.xlane.xlu0 %1728
    %v1730 = vmul.f32 %v1729, 0.125
    %v1731 = vmul.f32 %v1726, %v1726
    %v1732 = vsel %vm269, %v1731, 0.0
    %1733 = vadd.xlane.f32.xlu0 %v1732
    %v1734 = vpop.xlane.xlu0 %1733
    %v1735 = vmul.f32 %v1734, 0.125
    %v1736 = vmul.f32 %v1730, %v1730
    %v1737 = vsub.f32 %v1735, %v1736
    %v1738 = vsub.f32 %v1726, %v1730
    %v1739 = vadd.f32 %v1737, 1e-05
    %v1740 = vrsqrt.pop %v1739
    %v1741 = vmul.f32 %v1740, %v1739
    %v1742 = vmul.f32 %v1741, %v1740
    %v1743 = vmul.f32 0.5, %v1742
    %v1744 = vsub.f32 1.5, %v1743
    %v1745 = vmul.f32 %v1740, %v1744
    %vm1746 = vweird.f32 %v1739
    %vm1747 = vweird.f32 %v1740
    %vm1748 = vmor %vm1746, %vm1747
    %v1749 = vsel %vm1748, %v1740, %v1745
    %v1750 = vmul.f32 %v1738, %v1749
    %1752 = vset.pattern.permute.xlu0 0
    %1753 = vperm.xlu0 %1752, %v1750
    %v1754 = vpop.permute.xlu0 %1753
    %v1756 = vperm.slane %v1557, 0
    %v1757 = vmul.f32 %v1754, %v1756
    %1758 = vset.pattern.permute.xlu0 1
    %1759 = vperm.xlu0 %1758, %v1750
    %v1760 = vpop.permute.xlu0 %1759
    %v1762 = vperm.slane %v1557, 1
    %v1763 = vmul.f32 %v1760, %v1762
    %1764 = vset.pattern.permute.xlu0 2
    %1765 = vperm.xlu0 %1764, %v1750
    %v1766 = vpop.permute.xlu0 %1765
    %v1768 = vperm.slane %v1557, 2
    %v1769 = vmul.f32 %v1766, %v1768
    %1770 = vset.pattern.permute.xlu0 3
    %1771 = vperm.xlu0 %1770, %v1750
    %v1772 = vpop.permute.xlu0 %1771
    %v1774 = vperm.slane %v1557, 3
    %v1775 = vmul.f32 %v1772, %v1774
    %1776 = vset.pattern.permute.xlu0 4
    %1777 = vperm.xlu0 %1776, %v1750
    %v1778 = vpop.permute.xlu0 %1777
    %v1780 = vperm.slane %v1557, 4
    %v1781 = vmul.f32 %v1778, %v1780
    %1782 = vset.pattern.permute.xlu0 5
    %1783 = vperm.xlu0 %1782, %v1750
    %v1784 = vpop.permute.xlu0 %1783
    %v1786 = vperm.slane %v1557, 5
    %v1787 = vmul.f32 %v1784, %v1786
    %1788 = vset.pattern.permute.xlu0 6
    %1789 = vperm.xlu0 %1788, %v1750
    %v1790 = vpop.permute.xlu0 %1789
    %v1792 = vperm.slane %v1557, 6
    %v1793 = vmul.f32 %v1790, %v1792
    %1794 = vset.pattern.permute.xlu0 7
    %1795 = vperm.xlu0 %1794, %v1750
    %v1796 = vpop.permute.xlu0 %1795
    %v1798 = vperm.slane %v1557, 7
    %v1799 = vmul.f32 %v1796, %v1798
    %v1800 = vadd.f32 %v1757, %v1763
    %v1801 = vadd.f32 %v1769, %v1775
    %v1802 = vadd.f32 %v1781, %v1787
    %v1803 = vadd.f32 %v1793, %v1799
    %v1804 = vadd.f32 %v1800, %v1801
    %v1805 = vadd.f32 %v1802, %v1803
    %v1806 = vadd.f32 %v1804, %v1805
    %v1807 = vadd.f32 %v1806, %v1586
    %v1808 = vxor.u32 %v1807, 2147483648
    %v1809 = vmul.f32 %v1808, 1.442695
    %v1810 = vpow.pop %v1809
    %v1811 = vadd.f32 %v1810, 1.0
    %v1812 = vrcp.pop %v1811
    %v1813 = vmul.f32 %v1811, %v1812
    %v1814 = vsub.f32 1.0, %v1813
    %v1815 = vmul.f32 %v1812, %v1814
    %v1816 = vadd.f32 %v1812, %v1815
    %vm1817 = vweird.f32 %v1811
    %vm1818 = vweird.f32 %v1812
    %vm1819 = vmor %vm1817, %vm1818
    %v1820 = vsel %vm1819, %v1812, %v1816
    %v1821 = vand.u32 2147483647, %v1811
    %vm1822 = vcmp.eq.f32.partialorder %v1821, 8.507059e+37
    %v1823 = vand.u32 %v1811, 2147483648
    %v1824 = vor.u32 1.1754944e-38, %v1823
    %v1825 = vsel %vm1822, %v1824, %v1820
    %v1826 = vmul.f32 1.0, %v1825
    %s1827 = scalar_lea.vmem [#allocation6], 48
    %v1828 = vld [vmem:[%s1827] sm:$0xff]
    %s1829 = scalar_lea.vmem [#allocation9], 48
    %v1830 = vld [vmem:[%s1829] sm:$0xff]
    %s1831 = scalar_lea.vmem [#allocation12], 48
    %v1832 = vld [vmem:[%s1831] sm:$0xff]
    %v1834 = vrot.slane %v1828, 2
    %v1836 = vmul.f32 %v152, %v1834
    %v1837 = vrot.slane %v1828, 3
    %v1839 = vmul.f32 %v157, %v1837
    %v1840 = vrot.slane %v1828, 4
    %v1842 = vmul.f32 %v165, %v1840
    %v1843 = vrot.slane %v1828, 5
    %v1845 = vmul.f32 %v172, %v1843
    %v1846 = vrot.slane %v1828, 6
    %v1848 = vmul.f32 %v179, %v1846
    %v1849 = vrot.slane %v1828, 7
    %v1851 = vmul.f32 %v186, %v1849
    %v1852 = vmul.f32 %v193, %v1828
    %v1853 = vrot.slane %v1828, 1
    %v1855 = vmul.f32 %v200, %v1853
    %v1856 = vld [vmem:[#allocation7 + $0x6] sm:$0x1]
    %v1857 = vperm.slane %v1856, 0
    %v1858 = vld [vmem:[#allocation10 + $0x6] sm:$0x1]
    %v1859 = vperm.slane %v1858, 0
    %v1860 = vld [vmem:[#allocation13 + $0x6] sm:$0x1]
    %v1861 = vperm.slane %v1860, 0
    %1863 = vset.pattern.permute.xlu0 0
    %1864 = vperm.xlu0 %1863, %v1826
    %v1865 = vpop.permute.xlu0 %1864
    %v1867 = vperm.slane %v1836, 6
    %v1868 = vmul.f32 %v1865, %v1867
    %1869 = vset.pattern.permute.xlu0 1
    %1870 = vperm.xlu0 %1869, %v1826
    %v1871 = vpop.permute.xlu0 %1870
    %v1873 = vperm.slane %v1839, 6
    %v1874 = vmul.f32 %v1871, %v1873
    %1875 = vset.pattern.permute.xlu0 2
    %1876 = vperm.xlu0 %1875, %v1826
    %v1877 = vpop.permute.xlu0 %1876
    %v1879 = vperm.slane %v1842, 6
    %v1880 = vmul.f32 %v1877, %v1879
    %1881 = vset.pattern.permute.xlu0 3
    %1882 = vperm.xlu0 %1881, %v1826
    %v1883 = vpop.permute.xlu0 %1882
    %v1885 = vperm.slane %v1845, 6
    %v1886 = vmul.f32 %v1883, %v1885
    %1887 = vset.pattern.permute.xlu0 4
    %1888 = vperm.xlu0 %1887, %v1826
    %v1889 = vpop.permute.xlu0 %1888
    %v1891 = vperm.slane %v1848, 6
    %v1892 = vmul.f32 %v1889, %v1891
    %1893 = vset.pattern.permute.xlu0 5
    %1894 = vperm.xlu0 %1893, %v1826
    %v1895 = vpop.permute.xlu0 %1894
    %v1897 = vperm.slane %v1851, 6
    %v1898 = vmul.f32 %v1895, %v1897
    %1899 = vset.pattern.permute.xlu0 6
    %1900 = vperm.xlu0 %1899, %v1826
    %v1901 = vpop.permute.xlu0 %1900
    %v1903 = vperm.slane %v1852, 6
    %v1904 = vmul.f32 %v1901, %v1903
    %1905 = vset.pattern.permute.xlu0 7
    %1906 = vperm.xlu0 %1905, %v1826
    %v1907 = vpop.permute.xlu0 %1906
    %v1909 = vperm.slane %v1855, 6
    %v1910 = vmul.f32 %v1907, %v1909
    %v1911 = vadd.f32 %v1868, %v1874
    %v1912 = vadd.f32 %v1880, %v1886
    %v1913 = vadd.f32 %v1892, %v1898
    %v1914 = vadd.f32 %v1904, %v1910
    %v1915 = vadd.f32 %v1911, %v1912
    %v1916 = vadd.f32 %v1913, %v1914
    %v1917 = vadd.f32 %v1915, %v1916
    %v1918 = vadd.f32 %v1917, %v1857
    %v1919 = vtanh.pop %v1918
    %v1920 = vsel %vm269, %v1919, 0.0
    %1921 = vadd.xlane.f32.xlu0 %v1920
    %v1922 = vpop.xlane.xlu0 %1921
    %v1923 = vmul.f32 %v1922, 0.125
    %v1924 = vmul.f32 %v1919, %v1919
    %v1925 = vsel %vm269, %v1924, 0.0
    %1926 = vadd.xlane.f32.xlu0 %v1925
    %v1927 = vpop.xlane.xlu0 %1926
    %v1928 = vmul.f32 %v1927, 0.125
    %v1929 = vmul.f32 %v1923, %v1923
    %v1930 = vsub.f32 %v1928, %v1929
    %v1931 = vsub.f32 %v1919, %v1923
    %v1932 = vadd.f32 %v1930, 1e-05
    %v1933 = vrsqrt.pop %v1932
    %v1934 = vmul.f32 %v1933, %v1932
    %v1935 = vmul.f32 %v1934, %v1933
    %v1936 = vmul.f32 0.5, %v1935
    %v1937 = vsub.f32 1.5, %v1936
    %v1938 = vmul.f32 %v1933, %v1937
    %vm1939 = vweird.f32 %v1932
    %vm1940 = vweird.f32 %v1933
    %vm1941 = vmor %vm1939, %vm1940
    %v1942 = vsel %vm1941, %v1933, %v1938
    %v1943 = vmul.f32 %v1931, %v1942
    %1945 = vset.pattern.permute.xlu0 0
    %1946 = vperm.xlu0 %1945, %v1943
    %v1947 = vpop.permute.xlu0 %1946
    %v1949 = vperm.slane %v1830, 0
    %v1950 = vmul.f32 %v1947, %v1949
    %1951 = vset.pattern.permute.xlu0 1
    %1952 = vperm.xlu0 %1951, %v1943
    %v1953 = vpop.permute.xlu0 %1952
    %v1955 = vperm.slane %v1830, 1
    %v1956 = vmul.f32 %v1953, %v1955
    %1957 = vset.pattern.permute.xlu0 2
    %1958 = vperm.xlu0 %1957, %v1943
    %v1959 = vpop.permute.xlu0 %1958
    %v1961 = vperm.slane %v1830, 2
    %v1962 = vmul.f32 %v1959, %v1961
    %1963 = vset.pattern.permute.xlu0 3
    %1964 = vperm.xlu0 %1963, %v1943
    %v1965 = vpop.permute.xlu0 %1964
    %v1967 = vperm.slane %v1830, 3
    %v1968 = vmul.f32 %v1965, %v1967
    %1969 = vset.pattern.permute.xlu0 4
    %1970 = vperm.xlu0 %1969, %v1943
    %v1971 = vpop.permute.xlu0 %1970
    %v1973 = vperm.slane %v1830, 4
    %v1974 = vmul.f32 %v1971, %v1973
    %1975 = vset.pattern.permute.xlu0 5
    %1976 = vperm.xlu0 %1975, %v1943
    %v1977 = vpop.permute.xlu0 %1976
    %v1979 = vperm.slane %v1830, 5
    %v1980 = vmul.f32 %v1977, %v1979
    %1981 = vset.pattern.permute.xlu0 6
    %1982 = vperm.xlu0 %1981, %v1943
    %v1983 = vpop.permute.xlu0 %1982
    %v1985 = vperm.slane %v1830, 6
    %v1986 = vmul.f32 %v1983, %v1985
    %1987 = vset.pattern.permute.xlu0 7
    %1988 = vperm.xlu0 %1987, %v1943
    %v1989 = vpop.permute.xlu0 %1988
    %v1991 = vperm.slane %v1830, 7
    %v1992 = vmul.f32 %v1989, %v1991
    %v1993 = vadd.f32 %v1950, %v1956
    %v1994 = vadd.f32 %v1962, %v1968
    %v1995 = vadd.f32 %v1974, %v1980
    %v1996 = vadd.f32 %v1986, %v1992
    %v1997 = vadd.f32 %v1993, %v1994
    %v1998 = vadd.f32 %v1995, %v1996
    %v1999 = vadd.f32 %v1997, %v1998
    %v2000 = vadd.f32 %v1999, %v1859
    %v2001 = vtanh.pop %v2000
    %v2002 = vsel %vm269, %v2001, 0.0
    %2003 = vadd.xlane.f32.xlu0 %v2002
    %v2004 = vpop.xlane.xlu0 %2003
    %v2005 = vmul.f32 %v2004, 0.125
    %v2006 = vmul.f32 %v2001, %v2001
    %v2007 = vsel %vm269, %v2006, 0.0
    %2008 = vadd.xlane.f32.xlu0 %v2007
    %v2009 = vpop.xlane.xlu0 %2008
    %v2010 = vmul.f32 %v2009, 0.125
    %v2011 = vmul.f32 %v2005, %v2005
    %v2012 = vsub.f32 %v2010, %v2011
    %v2013 = vsub.f32 %v2001, %v2005
    %v2014 = vadd.f32 %v2012, 1e-05
    %v2015 = vrsqrt.pop %v2014
    %v2016 = vmul.f32 %v2015, %v2014
    %v2017 = vmul.f32 %v2016, %v2015
    %v2018 = vmul.f32 0.5, %v2017
    %v2019 = vsub.f32 1.5, %v2018
    %v2020 = vmul.f32 %v2015, %v2019
    %vm2021 = vweird.f32 %v2014
    %vm2022 = vweird.f32 %v2015
    %vm2023 = vmor %vm2021, %vm2022
    %v2024 = vsel %vm2023, %v2015, %v2020
    %v2025 = vmul.f32 %v2013, %v2024
    %2027 = vset.pattern.permute.xlu0 0
    %2028 = vperm.xlu0 %2027, %v2025
    %v2029 = vpop.permute.xlu0 %2028
    %v2031 = vperm.slane %v1832, 0
    %v2032 = vmul.f32 %v2029, %v2031
    %2033 = vset.pattern.permute.xlu0 1
    %2034 = vperm.xlu0 %2033, %v2025
    %v2035 = vpop.permute.xlu0 %2034
    %v2037 = vperm.slane %v1832, 1
    %v2038 = vmul.f32 %v2035, %v2037
    %2039 = vset.pattern.permute.xlu0 2
    %2040 = vperm.xlu0 %2039, %v2025
    %v2041 = vpop.permute.xlu0 %2040
    %v2043 = vperm.slane %v1832, 2
    %v2044 = vmul.f32 %v2041, %v2043
    %2045 = vset.pattern.permute.xlu0 3
    %2046 = vperm.xlu0 %2045, %v2025
    %v2047 = vpop.permute.xlu0 %2046
    %v2049 = vperm.slane %v1832, 3
    %v2050 = vmul.f32 %v2047, %v2049
    %2051 = vset.pattern.permute.xlu0 4
    %2052 = vperm.xlu0 %2051, %v2025
    %v2053 = vpop.permute.xlu0 %2052
    %v2055 = vperm.slane %v1832, 4
    %v2056 = vmul.f32 %v2053, %v2055
    %2057 = vset.pattern.permute.xlu0 5
    %2058 = vperm.xlu0 %2057, %v2025
    %v2059 = vpop.permute.xlu0 %2058
    %v2061 = vperm.slane %v1832, 5
    %v2062 = vmul.f32 %v2059, %v2061
    %2063 = vset.pattern.permute.xlu0 6
    %2064 = vperm.xlu0 %2063, %v2025
    %v2065 = vpop.permute.xlu0 %2064
    %v2067 = vperm.slane %v1832, 6
    %v2068 = vmul.f32 %v2065, %v2067
    %2069 = vset.pattern.permute.xlu0 7
    %2070 = vperm.xlu0 %2069, %v2025
    %v2071 = vpop.permute.xlu0 %2070
    %v2073 = vperm.slane %v1832, 7
    %v2074 = vmul.f32 %v2071, %v2073
    %v2075 = vadd.f32 %v2032, %v2038
    %v2076 = vadd.f32 %v2044, %v2050
    %v2077 = vadd.f32 %v2056, %v2062
    %v2078 = vadd.f32 %v2068, %v2074
    %v2079 = vadd.f32 %v2075, %v2076
    %v2080 = vadd.f32 %v2077, %v2078
    %v2081 = vadd.f32 %v2079, %v2080
    %v2082 = vadd.f32 %v2081, %v1861
    %v2083 = vxor.u32 %v2082, 2147483648
    %v2084 = vmul.f32 %v2083, 1.442695
    %v2085 = vpow.pop %v2084
    %v2086 = vadd.f32 %v2085, 1.0
    %v2087 = vrcp.pop %v2086
    %v2088 = vmul.f32 %v2086, %v2087
    %v2089 = vsub.f32 1.0, %v2088
    %v2090 = vmul.f32 %v2087, %v2089
    %v2091 = vadd.f32 %v2087, %v2090
    %vm2092 = vweird.f32 %v2086
    %vm2093 = vweird.f32 %v2087
    %vm2094 = vmor %vm2092, %vm2093
    %v2095 = vsel %vm2094, %v2087, %v2091
    %v2096 = vand.u32 2147483647, %v2086
    %vm2097 = vcmp.eq.f32.partialorder %v2096, 8.507059e+37
    %v2098 = vand.u32 %v2086, 2147483648
    %v2099 = vor.u32 1.1754944e-38, %v2098
    %v2100 = vsel %vm2097, %v2099, %v2095
    %v2101 = vmul.f32 1.0, %v2100
    %s2102 = scalar_lea.vmem [#allocation6], 56
    %v2103 = vld [vmem:[%s2102] sm:$0xff]
    %s2104 = scalar_lea.vmem [#allocation9], 56
    %v2105 = vld [vmem:[%s2104] sm:$0xff]
    %s2106 = scalar_lea.vmem [#allocation12], 56
    %v2107 = vld [vmem:[%s2106] sm:$0xff]
    %v2109 = vrot.slane %v2103, 1
    %v2111 = vmul.f32 %v152, %v2109
    %v2112 = vrot.slane %v2103, 2
    %v2114 = vmul.f32 %v157, %v2112
    %v2115 = vrot.slane %v2103, 3
    %v2117 = vmul.f32 %v165, %v2115
    %v2118 = vrot.slane %v2103, 4
    %v2120 = vmul.f32 %v172, %v2118
    %v2121 = vrot.slane %v2103, 5
    %v2123 = vmul.f32 %v179, %v2121
    %v2124 = vrot.slane %v2103, 6
    %v2126 = vmul.f32 %v186, %v2124
    %v2127 = vrot.slane %v2103, 7
    %v2129 = vmul.f32 %v193, %v2127
    %v2130 = vmul.f32 %v200, %v2103
    %v2131 = vld [vmem:[#allocation7 + $0x7] sm:$0x1]
    %v2132 = vperm.slane %v2131, 0
    %v2133 = vld [vmem:[#allocation10 + $0x7] sm:$0x1]
    %v2134 = vperm.slane %v2133, 0
    %v2135 = vld [vmem:[#allocation13 + $0x7] sm:$0x1]
    %v2136 = vperm.slane %v2135, 0
    %2138 = vset.pattern.permute.xlu0 0
    %2139 = vperm.xlu0 %2138, %v2101
    %v2140 = vpop.permute.xlu0 %2139
    %v2142 = vperm.slane %v2111, 7
    %v2143 = vmul.f32 %v2140, %v2142
    %2144 = vset.pattern.permute.xlu0 1
    %2145 = vperm.xlu0 %2144, %v2101
    %v2146 = vpop.permute.xlu0 %2145
    %v2148 = vperm.slane %v2114, 7
    %v2149 = vmul.f32 %v2146, %v2148
    %2150 = vset.pattern.permute.xlu0 2
    %2151 = vperm.xlu0 %2150, %v2101
    %v2152 = vpop.permute.xlu0 %2151
    %v2154 = vperm.slane %v2117, 7
    %v2155 = vmul.f32 %v2152, %v2154
    %2156 = vset.pattern.permute.xlu0 3
    %2157 = vperm.xlu0 %2156, %v2101
    %v2158 = vpop.permute.xlu0 %2157
    %v2160 = vperm.slane %v2120, 7
    %v2161 = vmul.f32 %v2158, %v2160
    %2162 = vset.pattern.permute.xlu0 4
    %2163 = vperm.xlu0 %2162, %v2101
    %v2164 = vpop.permute.xlu0 %2163
    %v2166 = vperm.slane %v2123, 7
    %v2167 = vmul.f32 %v2164, %v2166
    %2168 = vset.pattern.permute.xlu0 5
    %2169 = vperm.xlu0 %2168, %v2101
    %v2170 = vpop.permute.xlu0 %2169
    %v2172 = vperm.slane %v2126, 7
    %v2173 = vmul.f32 %v2170, %v2172
    %2174 = vset.pattern.permute.xlu0 6
    %2175 = vperm.xlu0 %2174, %v2101
    %v2176 = vpop.permute.xlu0 %2175
    %v2178 = vperm.slane %v2129, 7
    %v2179 = vmul.f32 %v2176, %v2178
    %2180 = vset.pattern.permute.xlu0 7
    %2181 = vperm.xlu0 %2180, %v2101
    %v2182 = vpop.permute.xlu0 %2181
    %v2184 = vperm.slane %v2130, 7
    %v2185 = vmul.f32 %v2182, %v2184
    %v2186 = vadd.f32 %v2143, %v2149
    %v2187 = vadd.f32 %v2155, %v2161
    %v2188 = vadd.f32 %v2167, %v2173
    %v2189 = vadd.f32 %v2179, %v2185
    %v2190 = vadd.f32 %v2186, %v2187
    %v2191 = vadd.f32 %v2188, %v2189
    %v2192 = vadd.f32 %v2190, %v2191
    %v2193 = vadd.f32 %v2192, %v2132
    %v2194 = vtanh.pop %v2193
    %v2195 = vsel %vm269, %v2194, 0.0
    %2196 = vadd.xlane.f32.xlu0 %v2195
    %v2197 = vpop.xlane.xlu0 %2196
    %v2198 = vmul.f32 %v2197, 0.125
    %v2199 = vmul.f32 %v2194, %v2194
    %v2200 = vsel %vm269, %v2199, 0.0
    %2201 = vadd.xlane.f32.xlu0 %v2200
    %v2202 = vpop.xlane.xlu0 %2201
    %v2203 = vmul.f32 %v2202, 0.125
    %v2204 = vmul.f32 %v2198, %v2198
    %v2205 = vsub.f32 %v2203, %v2204
    %v2206 = vsub.f32 %v2194, %v2198
    %v2207 = vadd.f32 %v2205, 1e-05
    %v2208 = vrsqrt.pop %v2207
    %v2209 = vmul.f32 %v2208, %v2207
    %v2210 = vmul.f32 %v2209, %v2208
    %v2211 = vmul.f32 0.5, %v2210
    %v2212 = vsub.f32 1.5, %v2211
    %v2213 = vmul.f32 %v2208, %v2212
    %vm2214 = vweird.f32 %v2207
    %vm2215 = vweird.f32 %v2208
    %vm2216 = vmor %vm2214, %vm2215
    %v2217 = vsel %vm2216, %v2208, %v2213
    %v2218 = vmul.f32 %v2206, %v2217
    %2220 = vset.pattern.permute.xlu0 0
    %2221 = vperm.xlu0 %2220, %v2218
    %v2222 = vpop.permute.xlu0 %2221
    %v2224 = vperm.slane %v2105, 0
    %v2225 = vmul.f32 %v2222, %v2224
    %2226 = vset.pattern.permute.xlu0 1
    %2227 = vperm.xlu0 %2226, %v2218
    %v2228 = vpop.permute.xlu0 %2227
    %v2230 = vperm.slane %v2105, 1
    %v2231 = vmul.f32 %v2228, %v2230
    %2232 = vset.pattern.permute.xlu0 2
    %2233 = vperm.xlu0 %2232, %v2218
    %v2234 = vpop.permute.xlu0 %2233
    %v2236 = vperm.slane %v2105, 2
    %v2237 = vmul.f32 %v2234, %v2236
    %2238 = vset.pattern.permute.xlu0 3
    %2239 = vperm.xlu0 %2238, %v2218
    %v2240 = vpop.permute.xlu0 %2239
    %v2242 = vperm.slane %v2105, 3
    %v2243 = vmul.f32 %v2240, %v2242
    %2244 = vset.pattern.permute.xlu0 4
    %2245 = vperm.xlu0 %2244, %v2218
    %v2246 = vpop.permute.xlu0 %2245
    %v2248 = vperm.slane %v2105, 4
    %v2249 = vmul.f32 %v2246, %v2248
    %2250 = vset.pattern.permute.xlu0 5
    %2251 = vperm.xlu0 %2250, %v2218
    %v2252 = vpop.permute.xlu0 %2251
    %v2254 = vperm.slane %v2105, 5
    %v2255 = vmul.f32 %v2252, %v2254
    %2256 = vset.pattern.permute.xlu0 6
    %2257 = vperm.xlu0 %2256, %v2218
    %v2258 = vpop.permute.xlu0 %2257
    %v2260 = vperm.slane %v2105, 6
    %v2261 = vmul.f32 %v2258, %v2260
    %2262 = vset.pattern.permute.xlu0 7
    %2263 = vperm.xlu0 %2262, %v2218
    %v2264 = vpop.permute.xlu0 %2263
    %v2266 = vperm.slane %v2105, 7
    %v2267 = vmul.f32 %v2264, %v2266
    %v2268 = vadd.f32 %v2225, %v2231
    %v2269 = vadd.f32 %v2237, %v2243
    %v2270 = vadd.f32 %v2249, %v2255
    %v2271 = vadd.f32 %v2261, %v2267
    %v2272 = vadd.f32 %v2268, %v2269
    %v2273 = vadd.f32 %v2270, %v2271
    %v2274 = vadd.f32 %v2272, %v2273
    %v2275 = vadd.f32 %v2274, %v2134
    %v2276 = vtanh.pop %v2275
    %v2277 = vsel %vm269, %v2276, 0.0
    %2278 = vadd.xlane.f32.xlu0 %v2277
    %v2279 = vpop.xlane.xlu0 %2278
    %v2280 = vmul.f32 %v2279, 0.125
    %v2281 = vmul.f32 %v2276, %v2276
    %v2282 = vsel %vm269, %v2281, 0.0
    %2283 = vadd.xlane.f32.xlu0 %v2282
    %v2284 = vpop.xlane.xlu0 %2283
    %v2285 = vmul.f32 %v2284, 0.125
    %v2286 = vmul.f32 %v2280, %v2280
    %v2287 = vsub.f32 %v2285, %v2286
    %v2288 = vsub.f32 %v2276, %v2280
    %v2289 = vadd.f32 %v2287, 1e-05
    %v2290 = vrsqrt.pop %v2289
    %v2291 = vmul.f32 %v2290, %v2289
    %v2292 = vmul.f32 %v2291, %v2290
    %v2293 = vmul.f32 0.5, %v2292
    %v2294 = vsub.f32 1.5, %v2293
    %v2295 = vmul.f32 %v2290, %v2294
    %vm2296 = vweird.f32 %v2289
    %vm2297 = vweird.f32 %v2290
    %vm2298 = vmor %vm2296, %vm2297
    %v2299 = vsel %vm2298, %v2290, %v2295
    %v2300 = vmul.f32 %v2288, %v2299
    %2302 = vset.pattern.permute.xlu0 0
    %2303 = vperm.xlu0 %2302, %v2300
    %v2304 = vpop.permute.xlu0 %2303
    %v2306 = vperm.slane %v2107, 0
    %v2307 = vmul.f32 %v2304, %v2306
    %2308 = vset.pattern.permute.xlu0 1
    %2309 = vperm.xlu0 %2308, %v2300
    %v2310 = vpop.permute.xlu0 %2309
    %v2312 = vperm.slane %v2107, 1
    %v2313 = vmul.f32 %v2310, %v2312
    %2314 = vset.pattern.permute.xlu0 2
    %2315 = vperm.xlu0 %2314, %v2300
    %v2316 = vpop.permute.xlu0 %2315
    %v2318 = vperm.slane %v2107, 2
    %v2319 = vmul.f32 %v2316, %v2318
    %2320 = vset.pattern.permute.xlu0 3
    %2321 = vperm.xlu0 %2320, %v2300
    %v2322 = vpop.permute.xlu0 %2321
    %v2324 = vperm.slane %v2107, 3
    %v2325 = vmul.f32 %v2322, %v2324
    %2326 = vset.pattern.permute.xlu0 4
    %2327 = vperm.xlu0 %2326, %v2300
    %v2328 = vpop.permute.xlu0 %2327
    %v2330 = vperm.slane %v2107, 4
    %v2331 = vmul.f32 %v2328, %v2330
    %2332 = vset.pattern.permute.xlu0 5
    %2333 = vperm.xlu0 %2332, %v2300
    %v2334 = vpop.permute.xlu0 %2333
    %v2336 = vperm.slane %v2107, 5
    %v2337 = vmul.f32 %v2334, %v2336
    %2338 = vset.pattern.permute.xlu0 6
    %2339 = vperm.xlu0 %2338, %v2300
    %v2340 = vpop.permute.xlu0 %2339
    %v2342 = vperm.slane %v2107, 6
    %v2343 = vmul.f32 %v2340, %v2342
    %2344 = vset.pattern.permute.xlu0 7
    %2345 = vperm.xlu0 %2344, %v2300
    %v2346 = vpop.permute.xlu0 %2345
    %v2348 = vperm.slane %v2107, 7
    %v2349 = vmul.f32 %v2346, %v2348
    %v2350 = vadd.f32 %v2307, %v2313
    %v2351 = vadd.f32 %v2319, %v2325
    %v2352 = vadd.f32 %v2331, %v2337
    %v2353 = vadd.f32 %v2343, %v2349
    %v2354 = vadd.f32 %v2350, %v2351
    %v2355 = vadd.f32 %v2352, %v2353
    %v2356 = vadd.f32 %v2354, %v2355
    %v2357 = vadd.f32 %v2356, %v2136
    %v2358 = vxor.u32 %v2357, 2147483648
    %v2359 = vmul.f32 %v2358, 1.442695
    %v2360 = vpow.pop %v2359
    %v2361 = vadd.f32 %v2360, 1.0
    %v2362 = vrcp.pop %v2361
    %v2363 = vmul.f32 %v2361, %v2362
    %v2364 = vsub.f32 1.0, %v2363
    %v2365 = vmul.f32 %v2362, %v2364
    %v2366 = vadd.f32 %v2362, %v2365
    %vm2367 = vweird.f32 %v2361
    %vm2368 = vweird.f32 %v2362
    %vm2369 = vmor %vm2367, %vm2368
    %v2370 = vsel %vm2369, %v2362, %v2366
    %v2371 = vand.u32 2147483647, %v2361
    %vm2372 = vcmp.eq.f32.partialorder %v2371, 8.507059e+37
    %v2373 = vand.u32 %v2361, 2147483648
    %v2374 = vor.u32 1.1754944e-38, %v2373
    %v2375 = vsel %vm2372, %v2374, %v2370
    %v2376 = vmul.f32 1.0, %v2375
    %2377 = vrot.lane.b32.xlu0 %v726, 8
    %v2378 = vpop.permute.xlu0 %2377
    %2380 = vrot.lane.b32.xlu0 %v1001, 16
    %v2381 = vpop.permute.xlu0 %2380
    %2383 = vrot.lane.b32.xlu0 %v1276, 24
    %v2384 = vpop.permute.xlu0 %2383
    %2386 = vrot.lane.b32.xlu0 %v1551, 32
    %v2387 = vpop.permute.xlu0 %2386
    %2389 = vrot.lane.b32.xlu0 %v1826, 40
    %v2390 = vpop.permute.xlu0 %2389
    %2392 = vrot.lane.b32.xlu0 %v2101, 48
    %v2393 = vpop.permute.xlu0 %2392
    %2396 = vrot.lane.b32.xlu0 %v2376, 56
    %v2397 = vpop.permute.xlu0 %2396
    %v2399 = vsel %vm269, %v451, %v2378
    %vm2400 = vcmask 130048
    %v2401 = vsel %vm2400, %v2399, %v2381
    %vm2402 = vcmask 195584
    %v2403 = vsel %vm2402, %v2401, %v2384
    %vm2404 = vcmask 261120
    %v2405 = vsel %vm2404, %v2403, %v2387
    %vm2406 = vcmask 326656
    %v2407 = vsel %vm2406, %v2405, %v2390
    %vm2408 = vcmask 392192
    %v2409 = vsel %vm2408, %v2407, %v2393
    %vm2410 = vcmask 457728
    %v2411 = vsel %vm2410, %v2409, %v2397
    %vm2412 = vcmask 523264
    %2413 = vst.msk [vmem:[%s8] sm:$0xff] %vm2412, %v2411
    // Predicated region
    $region66: #{actor_forward.1} parent=1 // pred_check
      _
    $region67: #{actor_forward.1} parent=1 // pred_check_branch
      %2415 = sbr.rel (0) target = $region69
    $region68: #{actor_forward.1} parent=1 // pred_region
      _
    $region69: #{actor_forward.1} parent=1 // pred_fallthru
      _
    // Predicated region
    $region70: #{actor_forward.1} parent=1 // pred_check
      _
    $region71: #{actor_forward.1} parent=1 // pred_check_branch
      %2417 = sbr.rel (0) target = $region73
    $region72: #{actor_forward.1} parent=1 // pred_region
      _
    $region73: #{actor_forward.1} parent=1 // pred_fallthru
      _
    %2418 = vsyncpa [#allocation3], 1
    %2419 = vsyncpa [#allocation5], 1
    %2420 = vsyncpa [#allocation8], 1
    %2421 = vsyncpa [#allocation11], 1
    %2422 = vsyncpa [#allocation14], 1

</llo_original>
